<compile_context>
chip_gen: v5e
topology: v5e:2x2
jax: 0.10.0
libtpu: 0.0.40
codegen_flags: <defaults>
</compile_context>

<pallas_src>
import functools

import jax
import jax.numpy as jnp
from jax.experimental import pallas as pl
from jax.experimental.pallas import tpu as pltpu


def _tnet_kernel(x_ref,
                 w1_ref, b1_ref,
                 w2_ref, b2_ref,
                 w3_ref, b3_ref,
                 fw1_ref, fb1_ref,
                 fw2_ref, fb2_ref,
                 fw3_ref, fb3_ref,
                 iden_ref,
                 out_ref,
                 gmax_ref):
    nt = pl.program_id(1)
    n_nt = pl.num_programs(1)
    TB, TN, k = x_ref.shape
    C3 = w3_ref.shape[1]
    SLAB = min(256, C3)           # conv3 column chunk
    n_slabs = C3 // SLAB

    bf16 = jnp.bfloat16
    f32 = jnp.float32

    # (TB, TN, k) -> (TB*TN, k): fill the MXU M dimension with all rows of the tile.
    x2d = x_ref[...].reshape(TB * TN, k)

    # ---- conv1 (+BN folded) -------------------------------------------------
    if k <= 8:
        # K=k contraction is far too shallow for the MXU: do k VPU broadcast
        # FMAs instead (kept in f32; v5e VPU has no bf16).
        w1 = w1_ref[...]
        h = b1_ref[...] + x2d[:, 0:1] * w1[0:1, :]
        for j in range(1, k):
            h = h + x2d[:, j:j + 1] * w1[j:j + 1, :]
    else:
        h = jnp.dot(x2d.astype(bf16), w1_ref[...].astype(bf16),
                    preferred_element_type=f32) + b1_ref[...]
    h = jnp.maximum(h, 0.0)                                          # (M, 128)

    # ---- conv2 (+BN folded): bf16 MXU, f32 accumulation ----------------------
    h = jnp.dot(h.astype(bf16), w2_ref[...], preferred_element_type=f32)
    h = jnp.maximum(h + b2_ref[...], 0.0)                            # (M, 128)
    hb = h.astype(bf16)

    # ---- conv3 (+BN folded), chunked over output columns, fused with the
    # ---- online global max over points (torch.max(x, 2)) ---------------------
    @pl.when(nt == 0)
    def _():
        # Post-ReLU activations are >= 0, so a zero init is exact for the max.
        gmax_ref[...] = jnp.zeros_like(gmax_ref)

    for s in range(n_slabs):
        lo = s * SLAB
        hi = lo + SLAB
        hs = jnp.dot(hb, w3_ref[:, lo:hi], preferred_element_type=f32)
        hs = jnp.maximum(hs + b3_ref[:, lo:hi], 0.0)                  # (M, SLAB)
        slab_max = jnp.max(hs.reshape(TB, TN, SLAB), axis=1)          # (TB, SLAB)
        gmax_ref[:, lo:hi] = jnp.maximum(gmax_ref[:, lo:hi], slab_max)

    # ---- FC head: once per batch tile, batched over TB rows -----------------
    @pl.when(nt == n_nt - 1)
    def _():
        g = gmax_ref[...]                                             # (TB, 1024)
        f = jnp.dot(g.astype(bf16), fw1_ref[...], preferred_element_type=f32)
        f = jnp.maximum(f + fb1_ref[...], 0.0)
        f = jnp.dot(f.astype(bf16), fw2_ref[...], preferred_element_type=f32)
        f = jnp.maximum(f + fb2_ref[...], 0.0)
        f = jnp.dot(f.astype(bf16), fw3_ref[...], preferred_element_type=f32)
        out_ref[0] = f + fb3_ref[...] + iden_ref[...]                 # (TB, OUTP)


def _fold_bn(w, b, gamma, beta, mean, var, eps=1e-5):
    """Fold eval-mode BatchNorm1d into a (Cin, Cout) weight + (Cout,) bias."""
    scale = gamma / jnp.sqrt(var + eps)
    w_f = w * scale[None, :]
    b_f = (b - mean) * scale + beta
    return w_f, b_f


def _pad2d(a, rows, cols):
    r, c = a.shape
    return jnp.pad(a, ((0, rows - r), (0, cols - c)))


def _round_up(a, m):
    return -(-a // m) * m


def _choose_tiles(B, N, target_rows=2048):
    """Pick (TB, TN, N_pad) with M = TB*TN <= target_rows.

    TN is a multiple of 8 and N is (edge-)padded up to N_pad = NT*TN with
    minimal padding. TB is capped at B and (for B >= 2) at ceil(B/2) so the
    parallel batch axis has >= 2 tiles (keeps both v7x TensorCores busy).
    """
    tn_cap = min(target_rows, _round_up(N, 8))
    n_tiles = -(-N // tn_cap)
    TN = _round_up(-(-N // n_tiles), 8)
    N_pad = TN * n_tiles
    TB = max(1, target_rows // TN)
    TB = min(TB, B)
    if B >= 2:
        TB = min(TB, (B + 1) // 2)
    return TB, TN, N_pad


def transform_net_forward(x_bkn, params, k):
    """x_bkn: (B, k, N) float32 (PyTorch NCL)  ->  (B, k, k) float32."""
    B, kin, N = x_bkn.shape
    assert kin == k
    f32 = jnp.float32
    bf = jnp.bfloat16
    C3 = 1024
    C1P = 128                                        # conv1 channels 64 -> 128
    OUTP = max(128, ((k * k + 127) // 128) * 128)    # lane-dense output width

    x = jnp.transpose(x_bkn, (0, 2, 1)).astype(f32)  # (B, N, k)

    TB, TN, N_pad = _choose_tiles(B, N)
    if N_pad != N:
        # Edge padding duplicates existing points: duplicates cannot change
        # the post-ReLU global max, so no in-kernel masking is needed.
        x = jnp.pad(x, ((0, 0), (0, N_pad - N), (0, 0)), mode="edge")
    GB = -(-B // TB)
    B_pad = GB * TB
    if B_pad != B:
        # Padded batch elements are independent and sliced off below.
        x = jnp.pad(x, ((0, B_pad - B), (0, 0), (0, 0)))
    NT = N_pad // TN

    # ---- fold eval-mode BN into conv / fc weights; pad; cast to bf16 --------
    w1, b1 = _fold_bn(params["conv1_w"], params["conv1_b"], *params["bn1"])
    w2, b2 = _fold_bn(params["conv2_w"], params["conv2_b"], *params["bn2"])
    w3, b3 = _fold_bn(params["conv3_w"], params["conv3_b"], *params["bn3"])
    fw1, fb1 = _fold_bn(params["fc1_w"], params["fc1_b"], *params["bn4"])
    fw2, fb2 = _fold_bn(params["fc2_w"], params["fc2_b"], *params["bn5"])
    fw3, fb3 = params["fc3_w"], params["fc3_b"]

    row = lambda v: v.reshape(1, -1).astype(f32)

    w1p = _pad2d(w1.astype(f32), k, C1P)             # f32 (VPU conv1 path)
    b1p = _pad2d(row(b1), 1, C1P)                    # padded cols are 0 -> relu -> 0
    w2p = _pad2d(w2.astype(f32), C1P, 128).astype(bf)  # zero rows for padded channels
    b2p = row(b2)
    w3p = w3.astype(bf)
    b3p = row(b3)
    fw1p = fw1.astype(bf)
    fb1p = row(fb1)
    fw2p = fw2.astype(bf)
    fb2p = row(fb2)
    fw3p = _pad2d(fw3.astype(f32), fw3.shape[0], OUTP).astype(bf)
    fb3p = _pad2d(row(fb3), 1, OUTP)
    iden = _pad2d(jnp.eye(k, dtype=f32).reshape(1, k * k), 1, OUTP)

    param_args = (w1p, b1p, w2p, b2p, w3p, b3p,
                  fw1p, fb1p, fw2p, fb2p, fw3p, fb3p, iden)

    in_specs = [pl.BlockSpec((TB, TN, k), lambda bt, nt: (bt, nt, 0))]
    in_specs += [pl.BlockSpec(p.shape, lambda bt, nt: (0, 0)) for p in param_args]

    out = pl.pallas_call(
        _tnet_kernel,
        # 3-D output so the stored block's last two dims (TB, OUTP) always
        # match the full array dims (no sublane-fragment constraint on TB).
        out_shape=jax.ShapeDtypeStruct((GB, TB, OUTP), f32),
        grid_spec=pltpu.PrefetchScalarGridSpec(
            num_scalar_prefetch=0,
            grid=(GB, NT),
            in_specs=in_specs,
            out_specs=pl.BlockSpec((1, TB, OUTP), lambda bt, nt: (bt, 0, 0)),
            scratch_shapes=[pltpu.VMEM((TB, C3), f32)],
        ),
        compiler_params=pltpu.CompilerParams(
            dimension_semantics=("parallel", "arbitrary"),
            vmem_limit_bytes=32 * 1024 * 1024),
    )(x, *param_args)

    return out.reshape(B_pad, OUTP)[:B, :k * k].reshape(B, k, k)


def _reference_forward(x_bkn, params, k):
    """Pure-JAX f32 reference mirroring the PyTorch forward (eval-mode BN)."""
    hp = jax.lax.Precision.HIGHEST
    x = jnp.transpose(x_bkn, (0, 2, 1)).astype(jnp.float32)  # (B, N, k)
    B = x.shape[0]

    def bn(h, g, bt, m, v, eps=1e-5):
        return (h - m) / jnp.sqrt(v + eps) * g + bt

    dot = lambda a, w: jnp.dot(a, w, precision=hp)
    h = jnp.maximum(bn(dot(x, params["conv1_w"]) + params["conv1_b"], *params["bn1"]), 0.0)
    h = jnp.maximum(bn(dot(h, params["conv2_w"]) + params["conv2_b"], *params["bn2"]), 0.0)
    h = jnp.maximum(bn(dot(h, params["conv3_w"]) + params["conv3_b"], *params["bn3"]), 0.0)
    g = jnp.max(h, axis=1)
    f = jnp.maximum(bn(dot(g, params["fc1_w"]) + params["fc1_b"], *params["bn4"]), 0.0)
    f = jnp.maximum(bn(dot(f, params["fc2_w"]) + params["fc2_b"], *params["bn5"]), 0.0)
    f = dot(f, params["fc3_w"]) + params["fc3_b"]
    f = f + jnp.eye(k, dtype=jnp.float32).reshape(1, k * k)
    return f.reshape(B, k, k)


def _emulated_forward(x_bkn, params, k):
    """Reference mirroring the kernel's numerics exactly: folded eval-mode BN,
    bf16 matmul operands with f32 accumulation, conv1 kept in f32 for small k."""
    bf = jnp.bfloat16
    f32 = jnp.float32
    w1, b1 = _fold_bn(params["conv1_w"], params["conv1_b"], *params["bn1"])
    w2, b2 = _fold_bn(params["conv2_w"], params["conv2_b"], *params["bn2"])
    w3, b3 = _fold_bn(params["conv3_w"], params["conv3_b"], *params["bn3"])
    fw1, fb1 = _fold_bn(params["fc1_w"], params["fc1_b"], *params["bn4"])
    fw2, fb2 = _fold_bn(params["fc2_w"], params["fc2_b"], *params["bn5"])
    fw3, fb3 = params["fc3_w"], params["fc3_b"]

    x = jnp.transpose(x_bkn, (0, 2, 1)).astype(f32)  # (B, N, k)
    B = x.shape[0]

    def mm(a, w):
        return jnp.dot(a.astype(bf), w.astype(bf), preferred_element_type=f32)

    if k <= 8:
        h = b1 + sum(x[..., j:j + 1] * w1[j, :] for j in range(k))
    else:
        h = mm(x, w1) + b1
    h = jnp.maximum(h, 0.0)
    h = jnp.maximum(mm(h, w2) + b2, 0.0)
    h = jnp.maximum(mm(h, w3) + b3, 0.0)
    g = jnp.max(h, axis=1)
    f = jnp.maximum(mm(g, fw1) + fb1, 0.0)
    f = jnp.maximum(mm(f, fw2) + fb2, 0.0)
    f = mm(f, fw3) + fb3
    f = f + jnp.eye(k, dtype=f32).reshape(1, k * k)
    return f.reshape(B, k, k)


def _init_params(key, k):
    dims = dict(c1=(k, 64), c2=(64, 128), c3=(128, 1024),
                f1=(1024, 512), f2=(512, 256), f3=(256, k * k))
    keys = jax.random.split(key, 32)
    ki = iter(range(32))

    def lin(shape):
        w = 0.1 * jax.random.normal(keys[next(ki)], shape, dtype=jnp.float32)
        b = 0.1 * jax.random.normal(keys[next(ki)], (shape[1],), dtype=jnp.float32)
        return w, b

    def bn(c):
        gamma = 1.0 + 0.1 * jax.random.normal(keys[next(ki)], (c,), dtype=jnp.float32)
        beta = 0.1 * jax.random.normal(keys[next(ki)], (c,), dtype=jnp.float32)
        mean = 0.05 * jax.random.normal(keys[next(ki)], (c,), dtype=jnp.float32)
        var = 0.5 + jnp.abs(0.2 * jax.random.normal(keys[next(ki)], (c,), dtype=jnp.float32))
        return (gamma, beta, mean, var)

    p = {}
    p["conv1_w"], p["conv1_b"] = lin(dims["c1"])
    p["conv2_w"], p["conv2_b"] = lin(dims["c2"])
    p["conv3_w"], p["conv3_b"] = lin(dims["c3"])
    p["fc1_w"], p["fc1_b"] = lin(dims["f1"])
    p["fc2_w"], p["fc2_b"] = lin(dims["f2"])
    p["fc3_w"], p["fc3_b"] = lin(dims["f3"])
    p["bn1"] = bn(64)
    p["bn2"] = bn(128)
    p["bn3"] = bn(1024)
    p["bn4"] = bn(512)
    p["bn5"] = bn(256)
    return p


def _check(out, x, params, k):
    # Tight check vs a reference that mirrors the kernel numerics (bf16 matmuls),
    # loose check vs the exact f32 module semantics (bounds bf16 drift).
    ref_emul = _emulated_forward(x, params, k)
    ref_f32 = _reference_forward(x, params, k)
    scale = float(jnp.max(jnp.abs(ref_f32))) + 1.0
    err_emul = float(jnp.max(jnp.abs(out - ref_emul)))
    err_f32 = float(jnp.max(jnp.abs(out - ref_f32)))
    assert err_emul < 1e-3 * scale, f"kernel vs bf16-emulating ref diff {err_emul}"
    assert err_f32 < 5e-2 * scale, f"kernel vs f32 module ref diff {err_f32}"


if __name__ == "__main__":
    k = 4          # channel / transform dimension
    root = jax.random.PRNGKey(0)
    pkey, xkey, xkey2 = jax.random.split(root, 3)
    params = _init_params(pkey, k)

    fwd = jax.jit(functools.partial(transform_net_forward, k=k))

    # Primary small test (aligned shapes): B=2, N=16.
    B, N = 2, 16
    x = jax.random.normal(xkey, (B, k, N), dtype=jnp.float32)  # PyTorch NCL layout
    out = jax.block_until_ready(fwd(x, params))
    assert out.shape == (B, k, k), out.shape
    _check(out, x, params, k)

    # Secondary test exercising the padding paths (odd B, N with no /8 divisor).
    B2, N2 = 3, 20
    x2 = jax.random.normal(xkey2, (B2, k, N2), dtype=jnp.float32)
    out2 = jax.block_until_ready(fwd(x2, params))
    assert out2.shape == (B2, k, k), out2.shape
    _check(out2, x2, params, k)

    print("KERNEL_OK")
</pallas_src>

<mosaic_0001>
module attributes {stable_mosaic.version = 11 : i64} {
  func.func @_tnet_kernel(%arg0: i32, %arg1: i32, %arg2: memref<1x16x4xf32, #tpu.memory_space<vmem>>, %arg3: memref<4x128xf32, #tpu.memory_space<vmem>>, %arg4: memref<1x128xf32, #tpu.memory_space<vmem>>, %arg5: memref<128x128xbf16, #tpu.memory_space<vmem>>, %arg6: memref<1x128xf32, #tpu.memory_space<vmem>>, %arg7: memref<128x1024xbf16, #tpu.memory_space<vmem>>, %arg8: memref<1x1024xf32, #tpu.memory_space<vmem>>, %arg9: memref<1024x512xbf16, #tpu.memory_space<vmem>>, %arg10: memref<1x512xf32, #tpu.memory_space<vmem>>, %arg11: memref<512x256xbf16, #tpu.memory_space<vmem>>, %arg12: memref<1x256xf32, #tpu.memory_space<vmem>>, %arg13: memref<256x128xbf16, #tpu.memory_space<vmem>>, %arg14: memref<1x128xf32, #tpu.memory_space<vmem>>, %arg15: memref<1x128xf32, #tpu.memory_space<vmem>>, %arg16: memref<1x1x128xf32, #tpu.memory_space<vmem>>, %arg17: memref<1x1024xf32, #tpu.memory_space<vmem>>) attributes {dimension_semantics = [#tpu.dimension_semantics<parallel>, #tpu.dimension_semantics<arbitrary>], iteration_bounds = array<i64: 2, 1>, scalar_prefetch = 0 : i64, scratch_operands = 1 : i64, tpu.core_type = #tpu.core_type<tc>, window_params = [{transform_indices = @transform_0, window_bounds = array<i64: 1, 16, 4>}, {pipeline_mode = #tpu.pipeline_mode<synchronous>, transform_indices = @transform_1, window_bounds = array<i64: 4, 128>}, {pipeline_mode = #tpu.pipeline_mode<synchronous>, transform_indices = @transform_2, window_bounds = array<i64: 1, 128>}, {pipeline_mode = #tpu.pipeline_mode<synchronous>, transform_indices = @transform_3, window_bounds = array<i64: 128, 128>}, {pipeline_mode = #tpu.pipeline_mode<synchronous>, transform_indices = @transform_4, window_bounds = array<i64: 1, 128>}, {pipeline_mode = #tpu.pipeline_mode<synchronous>, transform_indices = @transform_5, window_bounds = array<i64: 128, 1024>}, {pipeline_mode = #tpu.pipeline_mode<synchronous>, transform_indices = @transform_6, window_bounds = array<i64: 1, 1024>}, {pipeline_mode = #tpu.pipeline_mode<synchronous>, transform_indices = @transform_7, window_bounds = array<i64: 1024, 512>}, {pipeline_mode = #tpu.pipeline_mode<synchronous>, transform_indices = @transform_8, window_bounds = array<i64: 1, 512>}, {pipeline_mode = #tpu.pipeline_mode<synchronous>, transform_indices = @transform_9, window_bounds = array<i64: 512, 256>}, {pipeline_mode = #tpu.pipeline_mode<synchronous>, transform_indices = @transform_10, window_bounds = array<i64: 1, 256>}, {pipeline_mode = #tpu.pipeline_mode<synchronous>, transform_indices = @transform_11, window_bounds = array<i64: 256, 128>}, {pipeline_mode = #tpu.pipeline_mode<synchronous>, transform_indices = @transform_12, window_bounds = array<i64: 1, 128>}, {pipeline_mode = #tpu.pipeline_mode<synchronous>, transform_indices = @transform_13, window_bounds = array<i64: 1, 128>}, {transform_indices = @transform_14, window_bounds = array<i64: 1, 1, 128>}]} {
    %c0 = arith.constant 0 : index
    %c0_0 = arith.constant 0 : index
    %c0_1 = arith.constant 0 : index
    %0 = vector.load %arg2[%c0, %c0_0, %c0_1] : memref<1x16x4xf32, #tpu.memory_space<vmem>>, vector<1x16x4xf32>
    %1 = vector.shape_cast %0 : vector<1x16x4xf32> to vector<16x4xf32>
    %c0_2 = arith.constant 0 : index
    %c0_3 = arith.constant 0 : index
    %2 = vector.load %arg3[%c0_2, %c0_3] : memref<4x128xf32, #tpu.memory_space<vmem>>, vector<4x128xf32>
    %c0_4 = arith.constant 0 : index
    %c0_5 = arith.constant 0 : index
    %3 = vector.load %arg4[%c0_4, %c0_5] : memref<1x128xf32, #tpu.memory_space<vmem>>, vector<1x128xf32>
    %4 = vector.extract_strided_slice %1 {offsets = [0, 0], sizes = [16, 1], strides = [1, 1]} : vector<16x4xf32> to vector<16x1xf32>
    %5 = vector.extract_strided_slice %2 {offsets = [0, 0], sizes = [1, 128], strides = [1, 1]} : vector<4x128xf32> to vector<1x128xf32>
    %6 = vector.broadcast %4 : vector<16x1xf32> to vector<16x128xf32>
    %7 = vector.broadcast %5 : vector<1x128xf32> to vector<16x128xf32>
    %8 = arith.mulf %6, %7 : vector<16x128xf32>
    %9 = vector.broadcast %3 : vector<1x128xf32> to vector<16x128xf32>
    %10 = arith.addf %9, %8 : vector<16x128xf32>
    %11 = vector.extract_strided_slice %1 {offsets = [0, 1], sizes = [16, 1], strides = [1, 1]} : vector<16x4xf32> to vector<16x1xf32>
    %12 = vector.extract_strided_slice %2 {offsets = [1, 0], sizes = [1, 128], strides = [1, 1]} : vector<4x128xf32> to vector<1x128xf32>
    %13 = vector.broadcast %11 : vector<16x1xf32> to vector<16x128xf32>
    %14 = vector.broadcast %12 : vector<1x128xf32> to vector<16x128xf32>
    %15 = arith.mulf %13, %14 : vector<16x128xf32>
    %16 = arith.addf %10, %15 : vector<16x128xf32>
    %17 = vector.extract_strided_slice %1 {offsets = [0, 2], sizes = [16, 1], strides = [1, 1]} : vector<16x4xf32> to vector<16x1xf32>
    %18 = vector.extract_strided_slice %2 {offsets = [2, 0], sizes = [1, 128], strides = [1, 1]} : vector<4x128xf32> to vector<1x128xf32>
    %19 = vector.broadcast %17 : vector<16x1xf32> to vector<16x128xf32>
    %20 = vector.broadcast %18 : vector<1x128xf32> to vector<16x128xf32>
    %21 = arith.mulf %19, %20 : vector<16x128xf32>
    %22 = arith.addf %16, %21 : vector<16x128xf32>
    %23 = vector.extract_strided_slice %1 {offsets = [0, 3], sizes = [16, 1], strides = [1, 1]} : vector<16x4xf32> to vector<16x1xf32>
    %24 = vector.extract_strided_slice %2 {offsets = [3, 0], sizes = [1, 128], strides = [1, 1]} : vector<4x128xf32> to vector<1x128xf32>
    %25 = vector.broadcast %23 : vector<16x1xf32> to vector<16x128xf32>
    %26 = vector.broadcast %24 : vector<1x128xf32> to vector<16x128xf32>
    %27 = arith.mulf %25, %26 : vector<16x128xf32>
    %28 = arith.addf %22, %27 : vector<16x128xf32>
    %cst = arith.constant 0.000000e+00 : f32
    %29 = vector.broadcast %cst : f32 to vector<16x128xf32>
    %30 = arith.maximumf %28, %29 : vector<16x128xf32>
    %31 = arith.truncf %30 : vector<16x128xf32> to vector<16x128xbf16>
    %c0_6 = arith.constant 0 : index
    %c0_7 = arith.constant 0 : index
    %32 = vector.load %arg5[%c0_6, %c0_7] : memref<128x128xbf16, #tpu.memory_space<vmem>>, vector<128x128xbf16>
    %cst_8 = arith.constant dense<0.000000e+00> : vector<16x128xf32>
    %33 = tpu.matmul %31, %32, %cst_8 {dimension_numbers = #tpu.dot_dimension_numbers<[1], [0], [0], [1], [0, 0, 1, 1], [], []>} : vector<16x128xbf16>, vector<128x128xbf16>, vector<16x128xf32> -> vector<16x128xf32>
    %c0_9 = arith.constant 0 : index
    %c0_10 = arith.constant 0 : index
    %34 = vector.load %arg6[%c0_9, %c0_10] : memref<1x128xf32, #tpu.memory_space<vmem>>, vector<1x128xf32>
    %35 = vector.broadcast %34 : vector<1x128xf32> to vector<16x128xf32>
    %36 = arith.addf %33, %35 : vector<16x128xf32>
    %cst_11 = arith.constant 0.000000e+00 : f32
    %37 = vector.broadcast %cst_11 : f32 to vector<16x128xf32>
    %38 = arith.maximumf %36, %37 : vector<16x128xf32>
    %39 = arith.truncf %38 : vector<16x128xf32> to vector<16x128xbf16>
    %c0_i32 = arith.constant 0 : i32
    %40 = arith.cmpi eq, %arg1, %c0_i32 : i32
    %41 = arith.extui %40 : i1 to i32
    %c0_i32_12 = arith.constant 0 : i32
    %42 = arith.cmpi ne, %41, %c0_i32_12 : i32
    scf.if %42 {
      %cst_56 = arith.constant 0.000000e+00 : f32
      %94 = vector.broadcast %cst_56 : f32 to vector<1x1024xf32>
      %c0_57 = arith.constant 0 : index
      %c0_58 = arith.constant 0 : index
      %95 = vector.load %arg17[%c0_57, %c0_58] : memref<1x1024xf32, #tpu.memory_space<vmem>>, vector<1x1024xf32>
      tpu.vector_store %arg17[%c0_57, %c0_58], %94 {strides = array<i32>} : memref<1x1024xf32, #tpu.memory_space<vmem>>, vector<1x1024xf32>,
    } else {
    }
    %c0_13 = arith.constant 0 : index
    %c0_14 = arith.constant 0 : index
    %43 = vector.load %arg7[%c0_13, %c0_14] : memref<128x1024xbf16, #tpu.memory_space<vmem>>, vector<128x256xbf16>
    %cst_15 = arith.constant dense<0.000000e+00> : vector<16x256xf32>
    %44 = tpu.matmul %39, %43, %cst_15 {dimension_numbers = #tpu.dot_dimension_numbers<[1], [0], [0], [1], [0, 0, 1, 1], [], []>} : vector<16x128xbf16>, vector<128x256xbf16>, vector<16x256xf32> -> vector<16x256xf32>
    %c0_16 = arith.constant 0 : index
    %c0_17 = arith.constant 0 : index
    %45 = vector.load %arg8[%c0_16, %c0_17] : memref<1x1024xf32, #tpu.memory_space<vmem>>, vector<1x256xf32>
    %46 = vector.broadcast %45 : vector<1x256xf32> to vector<16x256xf32>
    %47 = arith.addf %44, %46 : vector<16x256xf32>
    %cst_18 = arith.constant 0.000000e+00 : f32
    %48 = vector.broadcast %cst_18 : f32 to vector<16x256xf32>
    %49 = arith.maximumf %47, %48 : vector<16x256xf32>
    %50 = vector.shape_cast %49 : vector<16x256xf32> to vector<1x16x256xf32>
    %cst_19 = arith.constant dense<0xFF800000> : vector<1x256xf32>
    %51 = vector.multi_reduction <maximumf>, %50, %cst_19 [1] : vector<1x16x256xf32> to vector<1x256xf32>
    %c0_20 = arith.constant 0 : index
    %c0_21 = arith.constant 0 : index
    %52 = vector.load %arg17[%c0_20, %c0_21] : memref<1x1024xf32, #tpu.memory_space<vmem>>, vector<1x256xf32>
    %53 = arith.maximumf %52, %51 : vector<1x256xf32>
    %c0_22 = arith.constant 0 : index
    %c0_23 = arith.constant 0 : index
    %54 = vector.load %arg17[%c0_22, %c0_23] : memref<1x1024xf32, #tpu.memory_space<vmem>>, vector<1x256xf32>
    tpu.vector_store %arg17[%c0_22, %c0_23], %53 {strides = array<i32>} : memref<1x1024xf32, #tpu.memory_space<vmem>>, vector<1x256xf32>,
    %c0_24 = arith.constant 0 : index
    %c256 = arith.constant 256 : index
    %55 = vector.load %arg7[%c0_24, %c256] : memref<128x1024xbf16, #tpu.memory_space<vmem>>, vector<128x256xbf16>
    %cst_25 = arith.constant dense<0.000000e+00> : vector<16x256xf32>
    %56 = tpu.matmul %39, %55, %cst_25 {dimension_numbers = #tpu.dot_dimension_numbers<[1], [0], [0], [1], [0, 0, 1, 1], [], []>} : vector<16x128xbf16>, vector<128x256xbf16>, vector<16x256xf32> -> vector<16x256xf32>
    %c0_26 = arith.constant 0 : index
    %c256_27 = arith.constant 256 : index
    %57 = vector.load %arg8[%c0_26, %c256_27] : memref<1x1024xf32, #tpu.memory_space<vmem>>, vector<1x256xf32>
    %58 = vector.broadcast %57 : vector<1x256xf32> to vector<16x256xf32>
    %59 = arith.addf %56, %58 : vector<16x256xf32>
    %cst_28 = arith.constant 0.000000e+00 : f32
    %60 = vector.broadcast %cst_28 : f32 to vector<16x256xf32>
    %61 = arith.maximumf %59, %60 : vector<16x256xf32>
    %62 = vector.shape_cast %61 : vector<16x256xf32> to vector<1x16x256xf32>
    %cst_29 = arith.constant dense<0xFF800000> : vector<1x256xf32>
    %63 = vector.multi_reduction <maximumf>, %62, %cst_29 [1] : vector<1x16x256xf32> to vector<1x256xf32>
    %c0_30 = arith.constant 0 : index
    %c256_31 = arith.constant 256 : index
    %64 = vector.load %arg17[%c0_30, %c256_31] : memref<1x1024xf32, #tpu.memory_space<vmem>>, vector<1x256xf32>
    %65 = arith.maximumf %64, %63 : vector<1x256xf32>
    %c0_32 = arith.constant 0 : index
    %c256_33 = arith.constant 256 : index
    %66 = vector.load %arg17[%c0_32, %c256_33] : memref<1x1024xf32, #tpu.memory_space<vmem>>, vector<1x256xf32>
    tpu.vector_store %arg17[%c0_32, %c256_33], %65 {strides = array<i32>} : memref<1x1024xf32, #tpu.memory_space<vmem>>, vector<1x256xf32>,
    %c0_34 = arith.constant 0 : index
    %c512 = arith.constant 512 : index
    %67 = vector.load %arg7[%c0_34, %c512] : memref<128x1024xbf16, #tpu.memory_space<vmem>>, vector<128x256xbf16>
    %cst_35 = arith.constant dense<0.000000e+00> : vector<16x256xf32>
    %68 = tpu.matmul %39, %67, %cst_35 {dimension_numbers = #tpu.dot_dimension_numbers<[1], [0], [0], [1], [0, 0, 1, 1], [], []>} : vector<16x128xbf16>, vector<128x256xbf16>, vector<16x256xf32> -> vector<16x256xf32>
    %c0_36 = arith.constant 0 : index
    %c512_37 = arith.constant 512 : index
    %69 = vector.load %arg8[%c0_36, %c512_37] : memref<1x1024xf32, #tpu.memory_space<vmem>>, vector<1x256xf32>
    %70 = vector.broadcast %69 : vector<1x256xf32> to vector<16x256xf32>
    %71 = arith.addf %68, %70 : vector<16x256xf32>
    %cst_38 = arith.constant 0.000000e+00 : f32
    %72 = vector.broadcast %cst_38 : f32 to vector<16x256xf32>
    %73 = arith.maximumf %71, %72 : vector<16x256xf32>
    %74 = vector.shape_cast %73 : vector<16x256xf32> to vector<1x16x256xf32>
    %cst_39 = arith.constant dense<0xFF800000> : vector<1x256xf32>
    %75 = vector.multi_reduction <maximumf>, %74, %cst_39 [1] : vector<1x16x256xf32> to vector<1x256xf32>
    %c0_40 = arith.constant 0 : index
    %c512_41 = arith.constant 512 : index
    %76 = vector.load %arg17[%c0_40, %c512_41] : memref<1x1024xf32, #tpu.memory_space<vmem>>, vector<1x256xf32>
    %77 = arith.maximumf %76, %75 : vector<1x256xf32>
    %c0_42 = arith.constant 0 : index
    %c512_43 = arith.constant 512 : index
    %78 = vector.load %arg17[%c0_42, %c512_43] : memref<1x1024xf32, #tpu.memory_space<vmem>>, vector<1x256xf32>
    tpu.vector_store %arg17[%c0_42, %c512_43], %77 {strides = array<i32>} : memref<1x1024xf32, #tpu.memory_space<vmem>>, vector<1x256xf32>,
    %c0_44 = arith.constant 0 : index
    %c768 = arith.constant 768 : index
    %79 = vector.load %arg7[%c0_44, %c768] : memref<128x1024xbf16, #tpu.memory_space<vmem>>, vector<128x256xbf16>
    %cst_45 = arith.constant dense<0.000000e+00> : vector<16x256xf32>
    %80 = tpu.matmul %39, %79, %cst_45 {dimension_numbers = #tpu.dot_dimension_numbers<[1], [0], [0], [1], [0, 0, 1, 1], [], []>} : vector<16x128xbf16>, vector<128x256xbf16>, vector<16x256xf32> -> vector<16x256xf32>
    %c0_46 = arith.constant 0 : index
    %c768_47 = arith.constant 768 : index
    %81 = vector.load %arg8[%c0_46, %c768_47] : memref<1x1024xf32, #tpu.memory_space<vmem>>, vector<1x256xf32>
    %82 = vector.broadcast %81 : vector<1x256xf32> to vector<16x256xf32>
    %83 = arith.addf %80, %82 : vector<16x256xf32>
    %cst_48 = arith.constant 0.000000e+00 : f32
    %84 = vector.broadcast %cst_48 : f32 to vector<16x256xf32>
    %85 = arith.maximumf %83, %84 : vector<16x256xf32>
    %86 = vector.shape_cast %85 : vector<16x256xf32> to vector<1x16x256xf32>
    %cst_49 = arith.constant dense<0xFF800000> : vector<1x256xf32>
    %87 = vector.multi_reduction <maximumf>, %86, %cst_49 [1] : vector<1x16x256xf32> to vector<1x256xf32>
    %c0_50 = arith.constant 0 : index
    %c768_51 = arith.constant 768 : index
    %88 = vector.load %arg17[%c0_50, %c768_51] : memref<1x1024xf32, #tpu.memory_space<vmem>>, vector<1x256xf32>
    %89 = arith.maximumf %88, %87 : vector<1x256xf32>
    %c0_52 = arith.constant 0 : index
    %c768_53 = arith.constant 768 : index
    %90 = vector.load %arg17[%c0_52, %c768_53] : memref<1x1024xf32, #tpu.memory_space<vmem>>, vector<1x256xf32>
    tpu.vector_store %arg17[%c0_52, %c768_53], %89 {strides = array<i32>} : memref<1x1024xf32, #tpu.memory_space<vmem>>, vector<1x256xf32>,
    %c0_i32_54 = arith.constant 0 : i32
    %91 = arith.cmpi eq, %arg1, %c0_i32_54 : i32
    %92 = arith.extui %91 : i1 to i32
    %c0_i32_55 = arith.constant 0 : i32
    %93 = arith.cmpi ne, %92, %c0_i32_55 : i32
    scf.if %93 {
      %c0_56 = arith.constant 0 : index
      %c0_57 = arith.constant 0 : index
      %94 = vector.load %arg17[%c0_56, %c0_57] : memref<1x1024xf32, #tpu.memory_space<vmem>>, vector<1x1024xf32>
      %95 = arith.truncf %94 : vector<1x1024xf32> to vector<1x1024xbf16>
      %c0_58 = arith.constant 0 : index
      %c0_59 = arith.constant 0 : index
      %96 = vector.load %arg9[%c0_58, %c0_59] : memref<1024x512xbf16, #tpu.memory_space<vmem>>, vector<1024x512xbf16>
      %cst_60 = arith.constant dense<0.000000e+00> : vector<1x512xf32>
      %97 = tpu.matmul %95, %96, %cst_60 {dimension_numbers = #tpu.dot_dimension_numbers<[1], [0], [0], [1], [0, 0, 1, 1], [], []>} : vector<1x1024xbf16>, vector<1024x512xbf16>, vector<1x512xf32> -> vector<1x512xf32>
      %c0_61 = arith.constant 0 : index
      %c0_62 = arith.constant 0 : index
      %98 = vector.load %arg10[%c0_61, %c0_62] : memref<1x512xf32, #tpu.memory_space<vmem>>, vector<1x512xf32>
      %99 = arith.addf %97, %98 : vector<1x512xf32>
      %cst_63 = arith.constant 0.000000e+00 : f32
      %100 = vector.broadcast %cst_63 : f32 to vector<1x512xf32>
      %101 = arith.maximumf %99, %100 : vector<1x512xf32>
      %102 = arith.truncf %101 : vector<1x512xf32> to vector<1x512xbf16>
      %c0_64 = arith.constant 0 : index
      %c0_65 = arith.constant 0 : index
      %103 = vector.load %arg11[%c0_64, %c0_65] : memref<512x256xbf16, #tpu.memory_space<vmem>>, vector<512x256xbf16>
      %cst_66 = arith.constant dense<0.000000e+00> : vector<1x256xf32>
      %104 = tpu.matmul %102, %103, %cst_66 {dimension_numbers = #tpu.dot_dimension_numbers<[1], [0], [0], [1], [0, 0, 1, 1], [], []>} : vector<1x512xbf16>, vector<512x256xbf16>, vector<1x256xf32> -> vector<1x256xf32>
      %c0_67 = arith.constant 0 : index
      %c0_68 = arith.constant 0 : index
      %105 = vector.load %arg12[%c0_67, %c0_68] : memref<1x256xf32, #tpu.memory_space<vmem>>, vector<1x256xf32>
      %106 = arith.addf %104, %105 : vector<1x256xf32>
      %cst_69 = arith.constant 0.000000e+00 : f32
      %107 = vector.broadcast %cst_69 : f32 to vector<1x256xf32>
      %108 = arith.maximumf %106, %107 : vector<1x256xf32>
      %109 = arith.truncf %108 : vector<1x256xf32> to vector<1x256xbf16>
      %c0_70 = arith.constant 0 : index
      %c0_71 = arith.constant 0 : index
      %110 = vector.load %arg13[%c0_70, %c0_71] : memref<256x128xbf16, #tpu.memory_space<vmem>>, vector<256x128xbf16>
      %cst_72 = arith.constant dense<0.000000e+00> : vector<1x128xf32>
      %111 = tpu.matmul %109, %110, %cst_72 {dimension_numbers = #tpu.dot_dimension_numbers<[1], [0], [0], [1], [0, 0, 1, 1], [], []>} : vector<1x256xbf16>, vector<256x128xbf16>, vector<1x128xf32> -> vector<1x128xf32>
      %c0_73 = arith.constant 0 : index
      %c0_74 = arith.constant 0 : index
      %112 = vector.load %arg14[%c0_73, %c0_74] : memref<1x128xf32, #tpu.memory_space<vmem>>, vector<1x128xf32>
      %113 = arith.addf %111, %112 : vector<1x128xf32>
      %c0_75 = arith.constant 0 : index
      %c0_76 = arith.constant 0 : index
      %114 = vector.load %arg15[%c0_75, %c0_76] : memref<1x128xf32, #tpu.memory_space<vmem>>, vector<1x128xf32>
      %115 = arith.addf %113, %114 : vector<1x128xf32>
      %c0_77 = arith.constant 0 : index
      %c0_78 = arith.constant 0 : index
      %c0_79 = arith.constant 0 : index
      %116 = vector.load %arg16[%c0_77, %c0_78, %c0_79] : memref<1x1x128xf32, #tpu.memory_space<vmem>>, vector<1x1x128xf32>
      %117 = vector.shape_cast %116 : vector<1x1x128xf32> to vector<1x128xf32>
      %118 = vector.shape_cast %115 : vector<1x128xf32> to vector<1x1x128xf32>
      tpu.vector_store %arg16[%c0_77, %c0_78, %c0_79], %118 {strides = array<i32>} : memref<1x1x128xf32, #tpu.memory_space<vmem>>, vector<1x1x128xf32>,
    } else {
    }
    return
  }
  func.func @transform_0(%arg0: i32, %arg1: i32) -> (i32, i32, i32) {
    %c0_i32 = arith.constant 0 : i32
    %c0_i32_0 = arith.constant 0 : i32
    return %arg0, %arg1, %c0_i32 : i32, i32, i32
  }
  func.func @transform_1(%arg0: i32, %arg1: i32) -> (i32, i32) {
    %c0_i32 = arith.constant 0 : i32
    %c0_i32_0 = arith.constant 0 : i32
    %c0_i32_1 = arith.constant 0 : i32
    return %c0_i32, %c0_i32_0 : i32, i32
  }
  func.func @transform_2(%arg0: i32, %arg1: i32) -> (i32, i32) {
    %c0_i32 = arith.constant 0 : i32
    %c0_i32_0 = arith.constant 0 : i32
    %c0_i32_1 = arith.constant 0 : i32
    return %c0_i32, %c0_i32_0 : i32, i32
  }
  func.func @transform_3(%arg0: i32, %arg1: i32) -> (i32, i32) {
    %c0_i32 = arith.constant 0 : i32
    %c0_i32_0 = arith.constant 0 : i32
    %c0_i32_1 = arith.constant 0 : i32
    return %c0_i32, %c0_i32_0 : i32, i32
  }
  func.func @transform_4(%arg0: i32, %arg1: i32) -> (i32, i32) {
    %c0_i32 = arith.constant 0 : i32
    %c0_i32_0 = arith.constant 0 : i32
    %c0_i32_1 = arith.constant 0 : i32
    return %c0_i32, %c0_i32_0 : i32, i32
  }
  func.func @transform_5(%arg0: i32, %arg1: i32) -> (i32, i32) {
    %c0_i32 = arith.constant 0 : i32
    %c0_i32_0 = arith.constant 0 : i32
    %c0_i32_1 = arith.constant 0 : i32
    return %c0_i32, %c0_i32_0 : i32, i32
  }
  func.func @transform_6(%arg0: i32, %arg1: i32) -> (i32, i32) {
    %c0_i32 = arith.constant 0 : i32
    %c0_i32_0 = arith.constant 0 : i32
    %c0_i32_1 = arith.constant 0 : i32
    return %c0_i32, %c0_i32_0 : i32, i32
  }
  func.func @transform_7(%arg0: i32, %arg1: i32) -> (i32, i32) {
    %c0_i32 = arith.constant 0 : i32
    %c0_i32_0 = arith.constant 0 : i32
    %c0_i32_1 = arith.constant 0 : i32
    return %c0_i32, %c0_i32_0 : i32, i32
  }
  func.func @transform_8(%arg0: i32, %arg1: i32) -> (i32, i32) {
    %c0_i32 = arith.constant 0 : i32
    %c0_i32_0 = arith.constant 0 : i32
    %c0_i32_1 = arith.constant 0 : i32
    return %c0_i32, %c0_i32_0 : i32, i32
  }
  func.func @transform_9(%arg0: i32, %arg1: i32) -> (i32, i32) {
    %c0_i32 = arith.constant 0 : i32
    %c0_i32_0 = arith.constant 0 : i32
    %c0_i32_1 = arith.constant 0 : i32
    return %c0_i32, %c0_i32_0 : i32, i32
  }
  func.func @transform_10(%arg0: i32, %arg1: i32) -> (i32, i32) {
    %c0_i32 = arith.constant 0 : i32
    %c0_i32_0 = arith.constant 0 : i32
    %c0_i32_1 = arith.constant 0 : i32
    return %c0_i32, %c0_i32_0 : i32, i32
  }
  func.func @transform_11(%arg0: i32, %arg1: i32) -> (i32, i32) {
    %c0_i32 = arith.constant 0 : i32
    %c0_i32_0 = arith.constant 0 : i32
    %c0_i32_1 = arith.constant 0 : i32
    return %c0_i32, %c0_i32_0 : i32, i32
  }
  func.func @transform_12(%arg0: i32, %arg1: i32) -> (i32, i32) {
    %c0_i32 = arith.constant 0 : i32
    %c0_i32_0 = arith.constant 0 : i32
    %c0_i32_1 = arith.constant 0 : i32
    return %c0_i32, %c0_i32_0 : i32, i32
  }
  func.func @transform_13(%arg0: i32, %arg1: i32) -> (i32, i32) {
    %c0_i32 = arith.constant 0 : i32
    %c0_i32_0 = arith.constant 0 : i32
    %c0_i32_1 = arith.constant 0 : i32
    return %c0_i32, %c0_i32_0 : i32, i32
  }
  func.func @transform_14(%arg0: i32, %arg1: i32) -> (i32, i32, i32) {
    %c0_i32 = arith.constant 0 : i32
    %c0_i32_0 = arith.constant 0 : i32
    %c0_i32_1 = arith.constant 0 : i32
    return %arg0, %c0_i32, %c0_i32_0 : i32, i32, i32
  }
}

</mosaic_0001>

<llo_original>
// kernel: transform_net_forward.1
$region0: #{transform_net_forward.1}
  #allocation0 [shape = 'u32[]', space=smem, size = 0x4, offset = 0x4, fixed_abs, tag = 'smem constant byte address 0x4 - core index']
  #allocation1 [shape = 'u32[72,128]{1,0:T(1,128)}', space=vmem, size = 0x9000, scoped, tag = 'internal scratch']
  #allocation2 [shape = 'f32[1,1024]{1,0:T(1,128)}', space=vmem, size = 0x1000, scoped, tag = 'scratch operand']
  %s0 = inlined_call_operand.vmem [shape: f32[2,16,4], index: 0, kind: input, shape index: {}]
  %s1 = inlined_call_operand.vmem [shape: f32[4,128], index: 1, kind: input, shape index: {}]
  %s2 = inlined_call_operand.vmem [shape: f32[1,128], index: 2, kind: input, shape index: {}]
  %s3 = inlined_call_operand.vmem [shape: bf16[128,128], index: 3, kind: input, shape index: {}]
  %s4 = inlined_call_operand.vmem [shape: f32[1,128], index: 4, kind: input, shape index: {}]
  %s5 = inlined_call_operand.vmem [shape: bf16[128,1024], index: 5, kind: input, shape index: {}]
  %s6 = inlined_call_operand.vmem [shape: f32[1,1024], index: 6, kind: input, shape index: {}]
  %s7 = inlined_call_operand.vmem [shape: bf16[1024,512], index: 7, kind: input, shape index: {}]
  %s8 = inlined_call_operand.vmem [shape: f32[1,512], index: 8, kind: input, shape index: {}]
  %s9 = inlined_call_operand.vmem [shape: bf16[512,256], index: 9, kind: input, shape index: {}]
  %s10 = inlined_call_operand.vmem [shape: f32[1,256], index: 10, kind: input, shape index: {}]
  %s11 = inlined_call_operand.vmem [shape: bf16[256,128], index: 11, kind: input, shape index: {}]
  %s12 = inlined_call_operand.vmem [shape: f32[1,128], index: 12, kind: input, shape index: {}]
  %s13 = inlined_call_operand.vmem [shape: f32[1,128], index: 13, kind: input, shape index: {}]
  %s14 = inlined_call_operand.vmem [shape: f32[2,1,128], index: 14, kind: output, shape index: {}]
  %s15 = sld [smem:[#allocation0]]
  $region97: #{transform_net_forward.1} parent=0
    _
  %s17 = ssub.s32 1, %s15
  %s18 = scalar_select 0, %s17, %s15
  loop: start=0, step=1, limit=4
  $region2: #{transform_net_forward.1} parent=0 // loop_pre_header
    _
  $region3: #{transform_net_forward.1} parent=0 // loop_header
    %s20 = sphi 0, %s24
    %p21 = scmp.ge.s32.totalorder %s20, 4
    %s27 = sphi 0, %s39
    %s28 = sphi 0, %s35
    %s29 = sphi 0, %s27
    %s30 = sphi 0, %s28
    %s31 = sphi 0, %s29
    %s32 = sphi 0, %s30
    %s44 = sphi 0, %s46
    %s47 = sphi 0, %s44
    %s48 = sphi 0, %s47
    %s64 = sphi 0, %s48
    %s68 = sphi 0, %s68
    %s70 = sphi 0, %s68
    %s71 = sphi 0, %s70
    %s85 = sphi 0, %s71
    %s89 = sphi 0, %s89
    %s91 = sphi 0, %s89
    %s92 = sphi 0, %s91
    %s106 = sphi 0, %s92
    %s110 = sphi 0, %s110
    %s112 = sphi 0, %s110
    %s113 = sphi 0, %s112
    %s127 = sphi 0, %s113
    %s131 = sphi 0, %s131
    %s133 = sphi 0, %s131
    %s134 = sphi 0, %s133
    %s148 = sphi 0, %s134
    %s152 = sphi 0, %s152
    %s154 = sphi 0, %s152
    %s155 = sphi 0, %s154
    %s169 = sphi 0, %s155
    %s173 = sphi 0, %s173
    %s175 = sphi 0, %s173
    %s176 = sphi 0, %s175
    %s190 = sphi 0, %s176
    %s194 = sphi 0, %s194
    %s196 = sphi 0, %s194
    %s197 = sphi 0, %s196
    %s211 = sphi 0, %s197
    %s215 = sphi 0, %s215
    %s217 = sphi 0, %s215
    %s218 = sphi 0, %s217
    %s232 = sphi 0, %s218
    %s236 = sphi 0, %s236
    %s238 = sphi 0, %s236
    %s239 = sphi 0, %s238
    %s253 = sphi 0, %s239
    %s257 = sphi 0, %s257
    %s259 = sphi 0, %s257
    %s260 = sphi 0, %s259
    %s274 = sphi 0, %s260
    %s278 = sphi 0, %s278
    %s280 = sphi 0, %s278
    %s281 = sphi 0, %s280
    %s295 = sphi 0, %s281
    %s299 = sphi 0, %s299
    %s301 = sphi 0, %s299
    %s302 = sphi 0, %s301
    %s316 = sphi 0, %s302
    %s320 = sphi 0, %s320
    %s322 = sphi 0, %s320
    %s323 = sphi 0, %s322
    %s337 = sphi 0, %s323
    %s343 = sphi 0, %s345
    %s346 = sphi 0, %s343
    %s347 = sphi 0, %s346
    %s363 = sphi 0, %s347
  $region4: #{transform_net_forward.1} parent=0 // loop_header_branch
    %23 = sbr.rel (%p21) target = $region8
  $region5: #{transform_net_forward.1} parent=0 // loop_body
    %s25 = ssub.s32 %s20, 1
    %s26 = ssub.s32 %s20, 2
    %s33 = sadd.s32 1, %s28
    %p34 = scmp.ge.s32.totalorder %s33, 1
    %s35 = scalar_select %p34, 0, %s33
    %s36 = sadd.s32 1, %s27
    %s37 = scalar_select %p34, %s36, %s27
    %p38 = scmp.ge.s32.totalorder %s37, 2
    %s39 = scalar_select %p38, 0, %s37
    %s40 = ssub.s32 %s27, %s39
    %s41 = ssub.s32 %s28, %s35
    %s42 = sor.u32 %s40, %s41
    %p43 = scmp.eq.s32.totalorder %s42, 0
    %s45 = sadd.s32 %s44, 1
    %s46 = scalar_select %p43, %s44, %s45
    %p49 = pneg %p43
    %p50 = scmp.eq.s32.totalorder %s20, 1
    %p51 = por %p49, %p50
    %p52 = scmp.ne.s32.totalorder %s44, %s47
    %p53 = scmp.eq.s32.totalorder %s20, 0
    %p54 = por %p52, %p53
    %p55 = scmp.ne.s32.totalorder %s44, %s47
    %p56 = scmp.eq.s32.totalorder %s25, 1
    %p57 = por %p55, %p56
    %p58 = scmp.ne.s32.totalorder %s47, %s48
    %p59 = scmp.eq.s32.totalorder %s25, 0
    %p60 = por %p58, %p59
    %p61 = scmp.ne.s32.totalorder %s47, %s48
    %p62 = scmp.eq.s32.totalorder %s26, 1
    %p63 = por %p61, %p62
    %p65 = scmp.ne.s32.totalorder %s48, %s64
    %p66 = scmp.eq.s32.totalorder %s26, 0
    %p67 = por %p65, %p66
    %s69 = sadd.s32 %s68, 1
    %p72 = scmp.eq.s32.totalorder %s20, 1
    %p73 = scmp.ne.s32.totalorder %s68, %s70
    %p74 = scmp.eq.s32.totalorder %s20, 0
    %p75 = por %p73, %p74
    %p76 = scmp.ne.s32.totalorder %s68, %s70
    %p77 = scmp.eq.s32.totalorder %s25, 1
    %p78 = por %p76, %p77
    %p79 = scmp.ne.s32.totalorder %s70, %s71
    %p80 = scmp.eq.s32.totalorder %s25, 0
    %p81 = por %p79, %p80
    %p82 = scmp.ne.s32.totalorder %s70, %s71
    %p83 = scmp.eq.s32.totalorder %s26, 1
    %p84 = por %p82, %p83
    %p86 = scmp.ne.s32.totalorder %s71, %s85
    %p87 = scmp.eq.s32.totalorder %s26, 0
    %p88 = por %p86, %p87
    %s90 = sadd.s32 %s89, 1
    %p93 = scmp.eq.s32.totalorder %s20, 1
    %p94 = scmp.ne.s32.totalorder %s89, %s91
    %p95 = scmp.eq.s32.totalorder %s20, 0
    %p96 = por %p94, %p95
    %p97 = scmp.ne.s32.totalorder %s89, %s91
    %p98 = scmp.eq.s32.totalorder %s25, 1
    %p99 = por %p97, %p98
    %p100 = scmp.ne.s32.totalorder %s91, %s92
    %p101 = scmp.eq.s32.totalorder %s25, 0
    %p102 = por %p100, %p101
    %p103 = scmp.ne.s32.totalorder %s91, %s92
    %p104 = scmp.eq.s32.totalorder %s26, 1
    %p105 = por %p103, %p104
    %p107 = scmp.ne.s32.totalorder %s92, %s106
    %p108 = scmp.eq.s32.totalorder %s26, 0
    %p109 = por %p107, %p108
    %s111 = sadd.s32 %s110, 1
    %p114 = scmp.eq.s32.totalorder %s20, 1
    %p115 = scmp.ne.s32.totalorder %s110, %s112
    %p116 = scmp.eq.s32.totalorder %s20, 0
    %p117 = por %p115, %p116
    %p118 = scmp.ne.s32.totalorder %s110, %s112
    %p119 = scmp.eq.s32.totalorder %s25, 1
    %p120 = por %p118, %p119
    %p121 = scmp.ne.s32.totalorder %s112, %s113
    %p122 = scmp.eq.s32.totalorder %s25, 0
    %p123 = por %p121, %p122
    %p124 = scmp.ne.s32.totalorder %s112, %s113
    %p125 = scmp.eq.s32.totalorder %s26, 1
    %p126 = por %p124, %p125
    %p128 = scmp.ne.s32.totalorder %s113, %s127
    %p129 = scmp.eq.s32.totalorder %s26, 0
    %p130 = por %p128, %p129
    %s132 = sadd.s32 %s131, 1
    %p135 = scmp.eq.s32.totalorder %s20, 1
    %p136 = scmp.ne.s32.totalorder %s131, %s133
    %p137 = scmp.eq.s32.totalorder %s20, 0
    %p138 = por %p136, %p137
    %p139 = scmp.ne.s32.totalorder %s131, %s133
    %p140 = scmp.eq.s32.totalorder %s25, 1
    %p141 = por %p139, %p140
    %p142 = scmp.ne.s32.totalorder %s133, %s134
    %p143 = scmp.eq.s32.totalorder %s25, 0
    %p144 = por %p142, %p143
    %p145 = scmp.ne.s32.totalorder %s133, %s134
    %p146 = scmp.eq.s32.totalorder %s26, 1
    %p147 = por %p145, %p146
    %p149 = scmp.ne.s32.totalorder %s134, %s148
    %p150 = scmp.eq.s32.totalorder %s26, 0
    %p151 = por %p149, %p150
    %s153 = sadd.s32 %s152, 1
    %p156 = scmp.eq.s32.totalorder %s20, 1
    %p157 = scmp.ne.s32.totalorder %s152, %s154
    %p158 = scmp.eq.s32.totalorder %s20, 0
    %p159 = por %p157, %p158
    %p160 = scmp.ne.s32.totalorder %s152, %s154
    %p161 = scmp.eq.s32.totalorder %s25, 1
    %p162 = por %p160, %p161
    %p163 = scmp.ne.s32.totalorder %s154, %s155
    %p164 = scmp.eq.s32.totalorder %s25, 0
    %p165 = por %p163, %p164
    %p166 = scmp.ne.s32.totalorder %s154, %s155
    %p167 = scmp.eq.s32.totalorder %s26, 1
    %p168 = por %p166, %p167
    %p170 = scmp.ne.s32.totalorder %s155, %s169
    %p171 = scmp.eq.s32.totalorder %s26, 0
    %p172 = por %p170, %p171
    %s174 = sadd.s32 %s173, 1
    %p177 = scmp.eq.s32.totalorder %s20, 1
    %p178 = scmp.ne.s32.totalorder %s173, %s175
    %p179 = scmp.eq.s32.totalorder %s20, 0
    %p180 = por %p178, %p179
    %p181 = scmp.ne.s32.totalorder %s173, %s175
    %p182 = scmp.eq.s32.totalorder %s25, 1
    %p183 = por %p181, %p182
    %p184 = scmp.ne.s32.totalorder %s175, %s176
    %p185 = scmp.eq.s32.totalorder %s25, 0
    %p186 = por %p184, %p185
    %p187 = scmp.ne.s32.totalorder %s175, %s176
    %p188 = scmp.eq.s32.totalorder %s26, 1
    %p189 = por %p187, %p188
    %p191 = scmp.ne.s32.totalorder %s176, %s190
    %p192 = scmp.eq.s32.totalorder %s26, 0
    %p193 = por %p191, %p192
    %s195 = sadd.s32 %s194, 1
    %p198 = scmp.eq.s32.totalorder %s20, 1
    %p199 = scmp.ne.s32.totalorder %s194, %s196
    %p200 = scmp.eq.s32.totalorder %s20, 0
    %p201 = por %p199, %p200
    %p202 = scmp.ne.s32.totalorder %s194, %s196
    %p203 = scmp.eq.s32.totalorder %s25, 1
    %p204 = por %p202, %p203
    %p205 = scmp.ne.s32.totalorder %s196, %s197
    %p206 = scmp.eq.s32.totalorder %s25, 0
    %p207 = por %p205, %p206
    %p208 = scmp.ne.s32.totalorder %s196, %s197
    %p209 = scmp.eq.s32.totalorder %s26, 1
    %p210 = por %p208, %p209
    %p212 = scmp.ne.s32.totalorder %s197, %s211
    %p213 = scmp.eq.s32.totalorder %s26, 0
    %p214 = por %p212, %p213
    %s216 = sadd.s32 %s215, 1
    %p219 = scmp.eq.s32.totalorder %s20, 1
    %p220 = scmp.ne.s32.totalorder %s215, %s217
    %p221 = scmp.eq.s32.totalorder %s20, 0
    %p222 = por %p220, %p221
    %p223 = scmp.ne.s32.totalorder %s215, %s217
    %p224 = scmp.eq.s32.totalorder %s25, 1
    %p225 = por %p223, %p224
    %p226 = scmp.ne.s32.totalorder %s217, %s218
    %p227 = scmp.eq.s32.totalorder %s25, 0
    %p228 = por %p226, %p227
    %p229 = scmp.ne.s32.totalorder %s217, %s218
    %p230 = scmp.eq.s32.totalorder %s26, 1
    %p231 = por %p229, %p230
    %p233 = scmp.ne.s32.totalorder %s218, %s232
    %p234 = scmp.eq.s32.totalorder %s26, 0
    %p235 = por %p233, %p234
    %s237 = sadd.s32 %s236, 1
    %p240 = scmp.eq.s32.totalorder %s20, 1
    %p241 = scmp.ne.s32.totalorder %s236, %s238
    %p242 = scmp.eq.s32.totalorder %s20, 0
    %p243 = por %p241, %p242
    %p244 = scmp.ne.s32.totalorder %s236, %s238
    %p245 = scmp.eq.s32.totalorder %s25, 1
    %p246 = por %p244, %p245
    %p247 = scmp.ne.s32.totalorder %s238, %s239
    %p248 = scmp.eq.s32.totalorder %s25, 0
    %p249 = por %p247, %p248
    %p250 = scmp.ne.s32.totalorder %s238, %s239
    %p251 = scmp.eq.s32.totalorder %s26, 1
    %p252 = por %p250, %p251
    %p254 = scmp.ne.s32.totalorder %s239, %s253
    %p255 = scmp.eq.s32.totalorder %s26, 0
    %p256 = por %p254, %p255
    %s258 = sadd.s32 %s257, 1
    %p261 = scmp.eq.s32.totalorder %s20, 1
    %p262 = scmp.ne.s32.totalorder %s257, %s259
    %p263 = scmp.eq.s32.totalorder %s20, 0
    %p264 = por %p262, %p263
    %p265 = scmp.ne.s32.totalorder %s257, %s259
    %p266 = scmp.eq.s32.totalorder %s25, 1
    %p267 = por %p265, %p266
    %p268 = scmp.ne.s32.totalorder %s259, %s260
    %p269 = scmp.eq.s32.totalorder %s25, 0
    %p270 = por %p268, %p269
    %p271 = scmp.ne.s32.totalorder %s259, %s260
    %p272 = scmp.eq.s32.totalorder %s26, 1
    %p273 = por %p271, %p272
    %p275 = scmp.ne.s32.totalorder %s260, %s274
    %p276 = scmp.eq.s32.totalorder %s26, 0
    %p277 = por %p275, %p276
    %s279 = sadd.s32 %s278, 1
    %p282 = scmp.eq.s32.totalorder %s20, 1
    %p283 = scmp.ne.s32.totalorder %s278, %s280
    %p284 = scmp.eq.s32.totalorder %s20, 0
    %p285 = por %p283, %p284
    %p286 = scmp.ne.s32.totalorder %s278, %s280
    %p287 = scmp.eq.s32.totalorder %s25, 1
    %p288 = por %p286, %p287
    %p289 = scmp.ne.s32.totalorder %s280, %s281
    %p290 = scmp.eq.s32.totalorder %s25, 0
    %p291 = por %p289, %p290
    %p292 = scmp.ne.s32.totalorder %s280, %s281
    %p293 = scmp.eq.s32.totalorder %s26, 1
    %p294 = por %p292, %p293
    %p296 = scmp.ne.s32.totalorder %s281, %s295
    %p297 = scmp.eq.s32.totalorder %s26, 0
    %p298 = por %p296, %p297
    %s300 = sadd.s32 %s299, 1
    %p303 = scmp.eq.s32.totalorder %s20, 1
    %p304 = scmp.ne.s32.totalorder %s299, %s301
    %p305 = scmp.eq.s32.totalorder %s20, 0
    %p306 = por %p304, %p305
    %p307 = scmp.ne.s32.totalorder %s299, %s301
    %p308 = scmp.eq.s32.totalorder %s25, 1
    %p309 = por %p307, %p308
    %p310 = scmp.ne.s32.totalorder %s301, %s302
    %p311 = scmp.eq.s32.totalorder %s25, 0
    %p312 = por %p310, %p311
    %p313 = scmp.ne.s32.totalorder %s301, %s302
    %p314 = scmp.eq.s32.totalorder %s26, 1
    %p315 = por %p313, %p314
    %p317 = scmp.ne.s32.totalorder %s302, %s316
    %p318 = scmp.eq.s32.totalorder %s26, 0
    %p319 = por %p317, %p318
    %s321 = sadd.s32 %s320, 1
    %p324 = scmp.eq.s32.totalorder %s20, 1
    %p325 = scmp.ne.s32.totalorder %s320, %s322
    %p326 = scmp.eq.s32.totalorder %s20, 0
    %p327 = por %p325, %p326
    %p328 = scmp.ne.s32.totalorder %s320, %s322
    %p329 = scmp.eq.s32.totalorder %s25, 1
    %p330 = por %p328, %p329
    %p331 = scmp.ne.s32.totalorder %s322, %s323
    %p332 = scmp.eq.s32.totalorder %s25, 0
    %p333 = por %p331, %p332
    %p334 = scmp.ne.s32.totalorder %s322, %s323
    %p335 = scmp.eq.s32.totalorder %s26, 1
    %p336 = por %p334, %p335
    %p338 = scmp.ne.s32.totalorder %s323, %s337
    %p339 = scmp.eq.s32.totalorder %s26, 0
    %p340 = por %p338, %p339
    %s341 = ssub.s32 %s27, %s39
    %p342 = scmp.eq.s32.totalorder %s341, 0
    %s344 = sadd.s32 %s343, 1
    %s345 = scalar_select %p342, %s343, %s344
    %p348 = pneg %p342
    %p349 = scmp.eq.s32.totalorder %s20, 1
    %p350 = por %p348, %p349
    %p351 = scmp.ne.s32.totalorder %s343, %s346
    %p352 = scmp.eq.s32.totalorder %s20, 0
    %p353 = por %p351, %p352
    %p354 = scmp.ne.s32.totalorder %s343, %s346
    %p355 = scmp.eq.s32.totalorder %s25, 1
    %p356 = por %p354, %p355
    %p357 = scmp.ne.s32.totalorder %s346, %s347
    %p358 = scmp.eq.s32.totalorder %s25, 0
    %p359 = por %p357, %p358
    %p360 = scmp.ne.s32.totalorder %s346, %s347
    %p361 = scmp.eq.s32.totalorder %s26, 1
    %p362 = por %p360, %p361
    %p364 = scmp.ne.s32.totalorder %s347, %s363
    %p365 = scmp.eq.s32.totalorder %s26, 0
    %p366 = por %p364, %p365
    %p367 = scmp.le.s32.totalorder 1, %s20
    %p368 = scmp.lt.s32.totalorder %s20, 3
    %p369 = pnand %p367, %p368
    %p370 = pneg %p369
    // Predicated region
    $region9: #{transform_net_forward.1} parent=5 // pred_check
      _
    $region10: #{transform_net_forward.1} parent=5 // pred_check_branch
      %372 = sbr.rel (%p369) target = $region12
    $region11: #{transform_net_forward.1} parent=5 // pred_region
      %s373 = ssub.s32 %s20, 1
      // Predicated region
      $region13: #{transform_net_forward.1} parent=11 // pred_check
        %p374 = pneg %p81
      $region14: #{transform_net_forward.1} parent=11 // pred_check_branch
        %376 = sbr.rel (%p374) target = $region16
      $region15: #{transform_net_forward.1} parent=11 // pred_region
        _
      $region16: #{transform_net_forward.1} parent=11 // pred_fallthru
        _
      // Predicated region
      $region17: #{transform_net_forward.1} parent=11 // pred_check
        %p377 = pneg %p102
      $region18: #{transform_net_forward.1} parent=11 // pred_check_branch
        %379 = sbr.rel (%p377) target = $region20
      $region19: #{transform_net_forward.1} parent=11 // pred_region
        _
      $region20: #{transform_net_forward.1} parent=11 // pred_fallthru
        _
      // Predicated region
      $region21: #{transform_net_forward.1} parent=11 // pred_check
        %p380 = pneg %p123
      $region22: #{transform_net_forward.1} parent=11 // pred_check_branch
        %382 = sbr.rel (%p380) target = $region24
      $region23: #{transform_net_forward.1} parent=11 // pred_region
        _
      $region24: #{transform_net_forward.1} parent=11 // pred_fallthru
        _
      // Predicated region
      $region25: #{transform_net_forward.1} parent=11 // pred_check
        %p383 = pneg %p144
      $region26: #{transform_net_forward.1} parent=11 // pred_check_branch
        %385 = sbr.rel (%p383) target = $region28
      $region27: #{transform_net_forward.1} parent=11 // pred_region
        _
      $region28: #{transform_net_forward.1} parent=11 // pred_fallthru
        _
      // Predicated region
      $region29: #{transform_net_forward.1} parent=11 // pred_check
        %p386 = pneg %p165
      $region30: #{transform_net_forward.1} parent=11 // pred_check_branch
        %388 = sbr.rel (%p386) target = $region32
      $region31: #{transform_net_forward.1} parent=11 // pred_region
        _
      $region32: #{transform_net_forward.1} parent=11 // pred_fallthru
        _
      // Predicated region
      $region33: #{transform_net_forward.1} parent=11 // pred_check
        %p389 = pneg %p186
      $region34: #{transform_net_forward.1} parent=11 // pred_check_branch
        %391 = sbr.rel (%p389) target = $region36
      $region35: #{transform_net_forward.1} parent=11 // pred_region
        _
      $region36: #{transform_net_forward.1} parent=11 // pred_fallthru
        _
      // Predicated region
      $region37: #{transform_net_forward.1} parent=11 // pred_check
        %p392 = pneg %p207
      $region38: #{transform_net_forward.1} parent=11 // pred_check_branch
        %394 = sbr.rel (%p392) target = $region40
      $region39: #{transform_net_forward.1} parent=11 // pred_region
        _
      $region40: #{transform_net_forward.1} parent=11 // pred_fallthru
        _
      // Predicated region
      $region41: #{transform_net_forward.1} parent=11 // pred_check
        %p395 = pneg %p228
      $region42: #{transform_net_forward.1} parent=11 // pred_check_branch
        %397 = sbr.rel (%p395) target = $region44
      $region43: #{transform_net_forward.1} parent=11 // pred_region
        _
      $region44: #{transform_net_forward.1} parent=11 // pred_fallthru
        _
      // Predicated region
      $region45: #{transform_net_forward.1} parent=11 // pred_check
        %p398 = pneg %p249
      $region46: #{transform_net_forward.1} parent=11 // pred_check_branch
        %400 = sbr.rel (%p398) target = $region48
      $region47: #{transform_net_forward.1} parent=11 // pred_region
        _
      $region48: #{transform_net_forward.1} parent=11 // pred_fallthru
        _
      // Predicated region
      $region49: #{transform_net_forward.1} parent=11 // pred_check
        %p401 = pneg %p270
      $region50: #{transform_net_forward.1} parent=11 // pred_check_branch
        %403 = sbr.rel (%p401) target = $region52
      $region51: #{transform_net_forward.1} parent=11 // pred_region
        _
      $region52: #{transform_net_forward.1} parent=11 // pred_fallthru
        _
      // Predicated region
      $region53: #{transform_net_forward.1} parent=11 // pred_check
        %p404 = pneg %p291
      $region54: #{transform_net_forward.1} parent=11 // pred_check_branch
        %406 = sbr.rel (%p404) target = $region56
      $region55: #{transform_net_forward.1} parent=11 // pred_region
        _
      $region56: #{transform_net_forward.1} parent=11 // pred_fallthru
        _
      // Predicated region
      $region57: #{transform_net_forward.1} parent=11 // pred_check
        %p407 = pneg %p312
      $region58: #{transform_net_forward.1} parent=11 // pred_check_branch
        %409 = sbr.rel (%p407) target = $region60
      $region59: #{transform_net_forward.1} parent=11 // pred_region
        _
      $region60: #{transform_net_forward.1} parent=11 // pred_fallthru
        _
      // Predicated region
      $region61: #{transform_net_forward.1} parent=11 // pred_check
        %p410 = pneg %p333
      $region62: #{transform_net_forward.1} parent=11 // pred_check_branch
        %412 = sbr.rel (%p410) target = $region64
      $region63: #{transform_net_forward.1} parent=11 // pred_region
        _
      $region64: #{transform_net_forward.1} parent=11 // pred_fallthru
        _
    $region12: #{transform_net_forward.1} parent=5 // pred_fallthru
      _
    %p413 = scmp.lt.s32.totalorder %s20, 2
    // Predicated region
    $region65: #{transform_net_forward.1} parent=5 // pred_check
      %p414 = pneg %p413
    $region66: #{transform_net_forward.1} parent=5 // pred_check_branch
      %416 = sbr.rel (%p414) target = $region68
    $region67: #{transform_net_forward.1} parent=5 // pred_region
      // Predicated region
      $region69: #{transform_net_forward.1} parent=67 // pred_check
        %p417 = pneg %p54
      $region70: #{transform_net_forward.1} parent=67 // pred_check_branch
        %419 = sbr.rel (%p417) target = $region72
      $region71: #{transform_net_forward.1} parent=67 // pred_region
        %s420 = smul.u32 2, %s28
        %p421 = scmp.lt.s32.totalorder %s27, 1
        %s422 = scalar_select %p421, %s27, 1
        %p423 = scmp.lt.s32.totalorder %s420, 1
        %s424 = scalar_select %p423, %s420, 1
        %s425 = smul.addr %s422, 2
        %s426 = sadd.s32 %s424, %s425
        %s427 = smul.addr %s426, 8
        %s428 = scalar_lea.vmem %s0, %s427
        %s429 = smul.u32 2, %s28
      $region72: #{transform_net_forward.1} parent=67 // pred_fallthru
        _
    $region68: #{transform_net_forward.1} parent=5 // pred_fallthru
      _
    %p430 = scmp.le.s32.totalorder 1, %s20
    %p431 = scmp.lt.s32.totalorder %s20, 3
    %p432 = pnand %p430, %p431
    %p433 = pneg %p432
    // Predicated region
    $region73: #{transform_net_forward.1} parent=5 // pred_check
      _
    $region74: #{transform_net_forward.1} parent=5 // pred_check_branch
      %435 = sbr.rel (%p432) target = $region76
    $region75: #{transform_net_forward.1} parent=5 // pred_region
      %s436 = ssub.s32 %s20, 1
      %s437 = smul.u32 2, %s30
      %p438 = scmp.lt.s32.totalorder %s29, 1
      %s439 = scalar_select %p438, %s29, 1
      %p440 = scmp.lt.s32.totalorder %s437, 1
      %s441 = scalar_select %p440, %s437, 1
      %s442 = smul.addr %s439, 2
      %s443 = sadd.s32 %s441, %s442
      %s444 = smul.addr %s443, 8
      %s445 = scalar_lea.vmem %s0, %s444
      %p446 = pneg %p60
      %p447 = pneg %p57
      %p448 = pneg %p81
      %p449 = pneg %p78
      %p450 = pneg %p102
      %p451 = pneg %p99
      %p452 = pneg %p123
      %p453 = pneg %p120
      %p454 = pneg %p144
      %p455 = pneg %p141
      %p456 = pneg %p165
      %p457 = pneg %p162
      %p458 = pneg %p186
      %p459 = pneg %p183
      %p460 = pneg %p207
      %p461 = pneg %p204
      %p462 = pneg %p228
      %p463 = pneg %p225
      %p464 = pneg %p249
      %p465 = pneg %p246
      %p466 = pneg %p270
      %p467 = pneg %p267
      %p468 = pneg %p291
      %p469 = pneg %p288
      %p470 = pneg %p312
      %p471 = pneg %p309
      %p472 = pneg %p333
      %p473 = pneg %p330
      %p474 = pneg %p359
      %p475 = pneg %p356
      %p476 = scmp.lt.s32.totalorder %s29, 1
      %s477 = scalar_select %p476, %s29, 1
      %s478 = scalar_lea.vmem %s14, %s477
      %s479 = smul.u32 2, %s30
      %p480 = scmp.lt.s32.totalorder %s29, 1
      %s481 = scalar_select %p480, %s29, 1
      %p482 = scmp.lt.s32.totalorder %s479, 1
      %s483 = scalar_select %p482, %s479, 1
      %s484 = smul.addr %s481, 2
      %s485 = sadd.s32 %s483, %s484
      %s486 = smul.addr %s485, 8
      %s487 = scalar_lea.vmem %s0, %s486
      %s488 = smul.u32 2, %s30
      %p489 = scmp.lt.s32.totalorder %s29, 1
      %s490 = scalar_select %p489, %s29, 1
      %s491 = scalar_lea.vmem %s14, %s490
      %v492 = vld [vmem:[%s487] sm:$0xff]
      %v493 = vld [vmem:[%s487 + $0x8] sm:$0xff]
      %v494 = vld [vmem:[%s1] sm:$0xf]
      %v495 = vld [vmem:[%s2] sm:$0x1]
      %497 = vset.pattern.permute.xlu0 0
      %498 = vperm.xlu0 %497, %v492
      %v499 = vpop.permute.xlu0 %498
      %502 = vset.pattern.permute.xlu0 0
      %503 = vperm.xlu0 %502, %v493
      %v504 = vpop.permute.xlu0 %503
      %v506 = vperm.slane %v494, 0
      %v507 = vmul.f32 %v499, %v506
      %v508 = vmul.f32 %v504, %v506
      %v510 = vperm.slane %v495, 0
      %v512 = vadd.f32 %v510, %v507
      %v513 = vadd.f32 %v510, %v508
      %514 = vset.pattern.permute.xlu0 1
      %515 = vperm.xlu0 %514, %v492
      %v516 = vpop.permute.xlu0 %515
      %518 = vset.pattern.permute.xlu0 1
      %519 = vperm.xlu0 %518, %v493
      %v520 = vpop.permute.xlu0 %519
      %v522 = vperm.slane %v494, 1
      %v523 = vmul.f32 %v516, %v522
      %v524 = vmul.f32 %v520, %v522
      %v525 = vadd.f32 %v512, %v523
      %v526 = vadd.f32 %v513, %v524
      %527 = vset.pattern.permute.xlu0 2
      %528 = vperm.xlu0 %527, %v492
      %v529 = vpop.permute.xlu0 %528
      %531 = vset.pattern.permute.xlu0 2
      %532 = vperm.xlu0 %531, %v493
      %v533 = vpop.permute.xlu0 %532
      %v535 = vperm.slane %v494, 2
      %v536 = vmul.f32 %v529, %v535
      %v537 = vmul.f32 %v533, %v535
      %v538 = vadd.f32 %v525, %v536
      %v539 = vadd.f32 %v526, %v537
      %540 = vset.pattern.permute.xlu0 3
      %541 = vperm.xlu0 %540, %v492
      %v542 = vpop.permute.xlu0 %541
      %544 = vset.pattern.permute.xlu0 3
      %545 = vperm.xlu0 %544, %v493
      %v546 = vpop.permute.xlu0 %545
      %v548 = vperm.slane %v494, 3
      %v549 = vmul.f32 %v542, %v548
      %v550 = vmul.f32 %v546, %v548
      %v551 = vadd.f32 %v538, %v549
      %v552 = vadd.f32 %v539, %v550
      %v553 = vmax.f32 %v551, 0.0
      %v554 = vmax.f32 %v552, 0.0
      %v555 = vpack.c.bf16 %v554, %v553
      %v556 = vld [vmem:[%s3] sm:$0xf]
      %v557 = vld [vmem:[%s3 + $0x4] sm:$0xf]
      %v558 = vld [vmem:[%s3 + $0x8] sm:$0xf]
      %v559 = vld [vmem:[%s3 + $0xc] sm:$0xf]
      %v560 = vld [vmem:[%s3 + $0x10] sm:$0xf]
      %v561 = vld [vmem:[%s3 + $0x14] sm:$0xf]
      %v562 = vld [vmem:[%s3 + $0x18] sm:$0xf]
      %v563 = vld [vmem:[%s3 + $0x1c] sm:$0xf]
      %v564 = vld [vmem:[%s3 + $0x20] sm:$0xf]
      %v565 = vld [vmem:[%s3 + $0x24] sm:$0xf]
      %v566 = vld [vmem:[%s3 + $0x28] sm:$0xf]
      %v567 = vld [vmem:[%s3 + $0x2c] sm:$0xf]
      %v568 = vld [vmem:[%s3 + $0x30] sm:$0xf]
      %v569 = vld [vmem:[%s3 + $0x34] sm:$0xf]
      %v570 = vld [vmem:[%s3 + $0x38] sm:$0xf]
      %v571 = vld [vmem:[%s3 + $0x3c] sm:$0xf]
      %v572 = vld [vmem:[%s4] sm:$0x1]
      %v574 = vperm.slane %v572, 0
      %v592 = vunpack.c.l.b16 %v556
      %v593 = vunpack.c.l.b16 %v557
      %v594 = vunpack.c.l.b16 %v558
      %v595 = vunpack.c.l.b16 %v559
      %v596 = vunpack.c.l.b16 %v560
      %v597 = vunpack.c.l.b16 %v561
      %v598 = vunpack.c.l.b16 %v562
      %v599 = vunpack.c.l.b16 %v563
      %v600 = vunpack.c.l.b16 %v564
      %v601 = vunpack.c.l.b16 %v565
      %v602 = vunpack.c.l.b16 %v566
      %v603 = vunpack.c.l.b16 %v567
      %v604 = vunpack.c.l.b16 %v568
      %v605 = vunpack.c.l.b16 %v569
      %v606 = vunpack.c.l.b16 %v570
      %v607 = vunpack.c.l.b16 %v571
      %v608 = vpack.c.b16 %v593, %v592
      %v609 = vpack.c.b16 %v595, %v594
      %v610 = vpack.c.b16 %v597, %v596
      %v611 = vpack.c.b16 %v599, %v598
      %v612 = vpack.c.b16 %v601, %v600
      %v613 = vpack.c.b16 %v603, %v602
      %v614 = vpack.c.b16 %v605, %v604
      %v615 = vpack.c.b16 %v607, %v606
      %624 = vmatpush.bf16.msra.mxu0 %v615
      %625 = vmatpush.bf16.msra.mxu0 %v614
      %626 = vmatpush.bf16.msra.mxu0 %v613
      %627 = vmatpush.bf16.msra.mxu0 %v612
      %628 = vmatpush.bf16.msra.mxu0 %v611
      %629 = vmatpush.bf16.msra.mxu0 %v610
      %630 = vmatpush.bf16.msra.mxu0 %v609
      %631 = vmatpush.bf16.msra.mxu0 %v608
      %632 = vmatmul.bf16.gmra.mxu0 %v555
      %v633 = vpop.f32.mrf.mxu0
      %v634 = vadd.f32 %v574, %v633
      %v635 = vpop.f32.mrf.mxu0
      %v636 = vadd.f32 %v574, %v635
      %637 = vdwg.mxu0
      %v638 = vmax.f32 %v634, 0.0
      %v639 = vmax.f32 %v636, 0.0
      %v640 = vpack.c.bf16 %v639, %v638
      %p641 = scmp.eq.s32.totalorder %s30, 0
      // Predicated region
      $region77: #{transform_net_forward.1} parent=75 // pred_check
        %p642 = pneg %p641
      $region78: #{transform_net_forward.1} parent=75 // pred_check_branch
        %644 = sbr.rel (%p642) target = $region80
      $region79: #{transform_net_forward.1} parent=75 // pred_region
        %645 = vst [vmem:[#allocation2] sm:$0xff] 0.0
      $region80: #{transform_net_forward.1} parent=75 // pred_fallthru
        _
      %v646 = vld [vmem:[%s5] sm:$0xff]
      %v647 = vld [vmem:[%s5 + $0x20] sm:$0xff]
      %v648 = vld [vmem:[%s5 + $0x40] sm:$0xff]
      %v649 = vld [vmem:[%s5 + $0x60] sm:$0xff]
      %v650 = vld [vmem:[%s5 + $0x80] sm:$0xff]
      %v651 = vld [vmem:[%s5 + $0xa0] sm:$0xff]
      %v652 = vld [vmem:[%s5 + $0xc0] sm:$0xff]
      %v653 = vld [vmem:[%s5 + $0xe0] sm:$0xff]
      %v654 = vld [vmem:[%s5 + $0x100] sm:$0xff]
      %v655 = vld [vmem:[%s5 + $0x120] sm:$0xff]
      %v656 = vld [vmem:[%s5 + $0x140] sm:$0xff]
      %v657 = vld [vmem:[%s5 + $0x160] sm:$0xff]
      %v658 = vld [vmem:[%s5 + $0x180] sm:$0xff]
      %v659 = vld [vmem:[%s5 + $0x1a0] sm:$0xff]
      %v660 = vld [vmem:[%s5 + $0x1c0] sm:$0xff]
      %v661 = vld [vmem:[%s5 + $0x1e0] sm:$0xff]
      %v662 = vld [vmem:[%s6] sm:$0x3]
      %v664 = vperm.slane %v662, 0
      %v665 = vperm.slane %v662, 1
      %v684 = vunpack.c.l.b16 %v646
      %v685 = vunpack.c.h.b16 %v646
      %v686 = vunpack.c.l.b16 %v647
      %v687 = vunpack.c.h.b16 %v647
      %v688 = vunpack.c.l.b16 %v648
      %v689 = vunpack.c.h.b16 %v648
      %v690 = vunpack.c.l.b16 %v649
      %v691 = vunpack.c.h.b16 %v649
      %v692 = vunpack.c.l.b16 %v650
      %v693 = vunpack.c.h.b16 %v650
      %v694 = vunpack.c.l.b16 %v651
      %v695 = vunpack.c.h.b16 %v651
      %v696 = vunpack.c.l.b16 %v652
      %v697 = vunpack.c.h.b16 %v652
      %v698 = vunpack.c.l.b16 %v653
      %v699 = vunpack.c.h.b16 %v653
      %v700 = vunpack.c.l.b16 %v654
      %v701 = vunpack.c.h.b16 %v654
      %v702 = vunpack.c.l.b16 %v655
      %v703 = vunpack.c.h.b16 %v655
      %v704 = vunpack.c.l.b16 %v656
      %v705 = vunpack.c.h.b16 %v656
      %v706 = vunpack.c.l.b16 %v657
      %v707 = vunpack.c.h.b16 %v657
      %v708 = vunpack.c.l.b16 %v658
      %v709 = vunpack.c.h.b16 %v658
      %v710 = vunpack.c.l.b16 %v659
      %v711 = vunpack.c.h.b16 %v659
      %v712 = vunpack.c.l.b16 %v660
      %v713 = vunpack.c.h.b16 %v660
      %v714 = vunpack.c.l.b16 %v661
      %v715 = vunpack.c.h.b16 %v661
      %v716 = vpack.c.b16 %v686, %v684
      %v717 = vpack.c.b16 %v687, %v685
      %v718 = vpack.c.b16 %v690, %v688
      %v719 = vpack.c.b16 %v691, %v689
      %v720 = vpack.c.b16 %v694, %v692
      %v721 = vpack.c.b16 %v695, %v693
      %v722 = vpack.c.b16 %v698, %v696
      %v723 = vpack.c.b16 %v699, %v697
      %v724 = vpack.c.b16 %v702, %v700
      %v725 = vpack.c.b16 %v703, %v701
      %v726 = vpack.c.b16 %v706, %v704
      %v727 = vpack.c.b16 %v707, %v705
      %v728 = vpack.c.b16 %v710, %v708
      %v729 = vpack.c.b16 %v711, %v709
      %v730 = vpack.c.b16 %v714, %v712
      %v731 = vpack.c.b16 %v715, %v713
      %748 = vmatpush.bf16.msra.mxu0 %v730
      %749 = vmatpush.bf16.msra.mxu0 %v728
      %750 = vmatpush.bf16.msra.mxu0 %v726
      %751 = vmatpush.bf16.msra.mxu0 %v724
      %752 = vmatpush.bf16.msra.mxu0 %v722
      %753 = vmatpush.bf16.msra.mxu0 %v720
      %754 = vmatpush.bf16.msra.mxu0 %v718
      %755 = vmatpush.bf16.msra.mxu0 %v716
      %756 = vmatmul.bf16.gmra.mxu0 %v640
      %v757 = vpop.f32.mrf.mxu0
      %v758 = vadd.f32 %v664, %v757
      %v759 = vpop.f32.mrf.mxu0
      %v760 = vadd.f32 %v664, %v759
      %761 = vdwg.mxu0
      %762 = vmatpush.bf16.msra.mxu0 %v731
      %763 = vmatpush.bf16.msra.mxu0 %v729
      %764 = vmatpush.bf16.msra.mxu0 %v727
      %765 = vmatpush.bf16.msra.mxu0 %v725
      %766 = vmatpush.bf16.msra.mxu0 %v723
      %767 = vmatpush.bf16.msra.mxu0 %v721
      %768 = vmatpush.bf16.msra.mxu0 %v719
      %769 = vmatpush.bf16.msra.mxu0 %v717
      %770 = vmatmul.bf16.gmra.mxu0 %v640
      %v771 = vpop.f32.mrf.mxu0
      %v772 = vadd.f32 %v665, %v771
      %v773 = vpop.f32.mrf.mxu0
      %v774 = vadd.f32 %v665, %v773
      %775 = vdwg.mxu0
      %v776 = vmax.f32 %v758, 0.0
      %v777 = vmax.f32 %v772, 0.0
      %v778 = vmax.f32 %v760, 0.0
      %v779 = vmax.f32 %v774, 0.0
      %v780 = vmax.f32 %v776, %v778
      %v781 = vrot.slane %v780, 4
      %v782 = vmax.f32 %v780, %v781
      %v783 = vrot.slane %v782, 2
      %v784 = vmax.f32 %v782, %v783
      %v785 = vrot.slane %v784, 1
      %v786 = vmax.f32 %v784, %v785
      %v787 = vmax.f32 %v777, %v779
      %v788 = vrot.slane %v787, 4
      %v789 = vmax.f32 %v787, %v788
      %v790 = vrot.slane %v789, 2
      %v791 = vmax.f32 %v789, %v790
      %v792 = vrot.slane %v791, 1
      %v793 = vmax.f32 %v791, %v792
      %v794 = vld [vmem:[#allocation2] sm:$0x3]
      %v797 = vrot.slane %v793, 7
      %vm798 = vcmask 1040384
      %v799 = vsel %vm798, %v786, %v797
      %v801 = vmax.f32 %v794, %v799
      %v802 = vlaneseq
      %vm803 = vcmp.ge.s32.totalorder %v802, 0
      %vm804 = vcmp.lt.s32.totalorder %v802, 256
      %vm805 = vmand %vm803, %vm804
      %806 = vst.msk [vmem:[#allocation2] sm:$0x3] %vm805, %v801
      %v807 = vld [vmem:[%s5 + $0x8] sm:$0xff]
      %v808 = vld [vmem:[%s5 + $0x28] sm:$0xff]
      %v809 = vld [vmem:[%s5 + $0x48] sm:$0xff]
      %v810 = vld [vmem:[%s5 + $0x68] sm:$0xff]
      %v811 = vld [vmem:[%s5 + $0x88] sm:$0xff]
      %v812 = vld [vmem:[%s5 + $0xa8] sm:$0xff]
      %v813 = vld [vmem:[%s5 + $0xc8] sm:$0xff]
      %v814 = vld [vmem:[%s5 + $0xe8] sm:$0xff]
      %v815 = vld [vmem:[%s5 + $0x108] sm:$0xff]
      %v816 = vld [vmem:[%s5 + $0x128] sm:$0xff]
      %v817 = vld [vmem:[%s5 + $0x148] sm:$0xff]
      %v818 = vld [vmem:[%s5 + $0x168] sm:$0xff]
      %v819 = vld [vmem:[%s5 + $0x188] sm:$0xff]
      %v820 = vld [vmem:[%s5 + $0x1a8] sm:$0xff]
      %v821 = vld [vmem:[%s5 + $0x1c8] sm:$0xff]
      %v822 = vld [vmem:[%s5 + $0x1e8] sm:$0xff]
      %v823 = vld [vmem:[%s6 + $0x2] sm:$0x3]
      %v825 = vperm.slane %v823, 0
      %v826 = vperm.slane %v823, 1
      %v845 = vunpack.c.l.b16 %v807
      %v846 = vunpack.c.h.b16 %v807
      %v847 = vunpack.c.l.b16 %v808
      %v848 = vunpack.c.h.b16 %v808
      %v849 = vunpack.c.l.b16 %v809
      %v850 = vunpack.c.h.b16 %v809
      %v851 = vunpack.c.l.b16 %v810
      %v852 = vunpack.c.h.b16 %v810
      %v853 = vunpack.c.l.b16 %v811
      %v854 = vunpack.c.h.b16 %v811
      %v855 = vunpack.c.l.b16 %v812
      %v856 = vunpack.c.h.b16 %v812
      %v857 = vunpack.c.l.b16 %v813
      %v858 = vunpack.c.h.b16 %v813
      %v859 = vunpack.c.l.b16 %v814
      %v860 = vunpack.c.h.b16 %v814
      %v861 = vunpack.c.l.b16 %v815
      %v862 = vunpack.c.h.b16 %v815
      %v863 = vunpack.c.l.b16 %v816
      %v864 = vunpack.c.h.b16 %v816
      %v865 = vunpack.c.l.b16 %v817
      %v866 = vunpack.c.h.b16 %v817
      %v867 = vunpack.c.l.b16 %v818
      %v868 = vunpack.c.h.b16 %v818
      %v869 = vunpack.c.l.b16 %v819
      %v870 = vunpack.c.h.b16 %v819
      %v871 = vunpack.c.l.b16 %v820
      %v872 = vunpack.c.h.b16 %v820
      %v873 = vunpack.c.l.b16 %v821
      %v874 = vunpack.c.h.b16 %v821
      %v875 = vunpack.c.l.b16 %v822
      %v876 = vunpack.c.h.b16 %v822
      %v877 = vpack.c.b16 %v847, %v845
      %v878 = vpack.c.b16 %v848, %v846
      %v879 = vpack.c.b16 %v851, %v849
      %v880 = vpack.c.b16 %v852, %v850
      %v881 = vpack.c.b16 %v855, %v853
      %v882 = vpack.c.b16 %v856, %v854
      %v883 = vpack.c.b16 %v859, %v857
      %v884 = vpack.c.b16 %v860, %v858
      %v885 = vpack.c.b16 %v863, %v861
      %v886 = vpack.c.b16 %v864, %v862
      %v887 = vpack.c.b16 %v867, %v865
      %v888 = vpack.c.b16 %v868, %v866
      %v889 = vpack.c.b16 %v871, %v869
      %v890 = vpack.c.b16 %v872, %v870
      %v891 = vpack.c.b16 %v875, %v873
      %v892 = vpack.c.b16 %v876, %v874
      %909 = vmatpush.bf16.msra.mxu0 %v891
      %910 = vmatpush.bf16.msra.mxu0 %v889
      %911 = vmatpush.bf16.msra.mxu0 %v887
      %912 = vmatpush.bf16.msra.mxu0 %v885
      %913 = vmatpush.bf16.msra.mxu0 %v883
      %914 = vmatpush.bf16.msra.mxu0 %v881
      %915 = vmatpush.bf16.msra.mxu0 %v879
      %916 = vmatpush.bf16.msra.mxu0 %v877
      %917 = vmatmul.bf16.gmra.mxu0 %v640
      %v918 = vpop.f32.mrf.mxu0
      %v919 = vadd.f32 %v825, %v918
      %v920 = vpop.f32.mrf.mxu0
      %v921 = vadd.f32 %v825, %v920
      %922 = vdwg.mxu0
      %923 = vmatpush.bf16.msra.mxu0 %v892
      %924 = vmatpush.bf16.msra.mxu0 %v890
      %925 = vmatpush.bf16.msra.mxu0 %v888
      %926 = vmatpush.bf16.msra.mxu0 %v886
      %927 = vmatpush.bf16.msra.mxu0 %v884
      %928 = vmatpush.bf16.msra.mxu0 %v882
      %929 = vmatpush.bf16.msra.mxu0 %v880
      %930 = vmatpush.bf16.msra.mxu0 %v878
      %931 = vmatmul.bf16.gmra.mxu0 %v640
      %v932 = vpop.f32.mrf.mxu0
      %v933 = vadd.f32 %v826, %v932
      %v934 = vpop.f32.mrf.mxu0
      %v935 = vadd.f32 %v826, %v934
      %936 = vdwg.mxu0
      %v937 = vmax.f32 %v919, 0.0
      %v938 = vmax.f32 %v933, 0.0
      %v939 = vmax.f32 %v921, 0.0
      %v940 = vmax.f32 %v935, 0.0
      %v941 = vmax.f32 %v937, %v939
      %v942 = vrot.slane %v941, 4
      %v943 = vmax.f32 %v941, %v942
      %v944 = vrot.slane %v943, 2
      %v945 = vmax.f32 %v943, %v944
      %v946 = vrot.slane %v945, 1
      %v947 = vmax.f32 %v945, %v946
      %v948 = vmax.f32 %v938, %v940
      %v949 = vrot.slane %v948, 4
      %v950 = vmax.f32 %v948, %v949
      %v951 = vrot.slane %v950, 2
      %v952 = vmax.f32 %v950, %v951
      %v953 = vrot.slane %v952, 1
      %v954 = vmax.f32 %v952, %v953
      %v955 = vld [vmem:[#allocation2 + $0x2] sm:$0x3]
      %v958 = vrot.slane %v954, 7
      %v959 = vsel %vm798, %v947, %v958
      %v961 = vmax.f32 %v955, %v959
      %962 = vst.msk [vmem:[#allocation2 + $0x2] sm:$0x3] %vm805, %v961
      %v963 = vld [vmem:[%s5 + $0x10] sm:$0xff]
      %v964 = vld [vmem:[%s5 + $0x30] sm:$0xff]
      %v965 = vld [vmem:[%s5 + $0x50] sm:$0xff]
      %v966 = vld [vmem:[%s5 + $0x70] sm:$0xff]
      %v967 = vld [vmem:[%s5 + $0x90] sm:$0xff]
      %v968 = vld [vmem:[%s5 + $0xb0] sm:$0xff]
      %v969 = vld [vmem:[%s5 + $0xd0] sm:$0xff]
      %v970 = vld [vmem:[%s5 + $0xf0] sm:$0xff]
      %v971 = vld [vmem:[%s5 + $0x110] sm:$0xff]
      %v972 = vld [vmem:[%s5 + $0x130] sm:$0xff]
      %v973 = vld [vmem:[%s5 + $0x150] sm:$0xff]
      %v974 = vld [vmem:[%s5 + $0x170] sm:$0xff]
      %v975 = vld [vmem:[%s5 + $0x190] sm:$0xff]
      %v976 = vld [vmem:[%s5 + $0x1b0] sm:$0xff]
      %v977 = vld [vmem:[%s5 + $0x1d0] sm:$0xff]
      %v978 = vld [vmem:[%s5 + $0x1f0] sm:$0xff]
      %v979 = vld [vmem:[%s6 + $0x4] sm:$0x3]
      %v981 = vperm.slane %v979, 0
      %v982 = vperm.slane %v979, 1
      %v1001 = vunpack.c.l.b16 %v963
      %v1002 = vunpack.c.h.b16 %v963
      %v1003 = vunpack.c.l.b16 %v964
      %v1004 = vunpack.c.h.b16 %v964
      %v1005 = vunpack.c.l.b16 %v965
      %v1006 = vunpack.c.h.b16 %v965
      %v1007 = vunpack.c.l.b16 %v966
      %v1008 = vunpack.c.h.b16 %v966
      %v1009 = vunpack.c.l.b16 %v967
      %v1010 = vunpack.c.h.b16 %v967
      %v1011 = vunpack.c.l.b16 %v968
      %v1012 = vunpack.c.h.b16 %v968
      %v1013 = vunpack.c.l.b16 %v969
      %v1014 = vunpack.c.h.b16 %v969
      %v1015 = vunpack.c.l.b16 %v970
      %v1016 = vunpack.c.h.b16 %v970
      %v1017 = vunpack.c.l.b16 %v971
      %v1018 = vunpack.c.h.b16 %v971
      %v1019 = vunpack.c.l.b16 %v972
      %v1020 = vunpack.c.h.b16 %v972
      %v1021 = vunpack.c.l.b16 %v973
      %v1022 = vunpack.c.h.b16 %v973
      %v1023 = vunpack.c.l.b16 %v974
      %v1024 = vunpack.c.h.b16 %v974
      %v1025 = vunpack.c.l.b16 %v975
      %v1026 = vunpack.c.h.b16 %v975
      %v1027 = vunpack.c.l.b16 %v976
      %v1028 = vunpack.c.h.b16 %v976
      %v1029 = vunpack.c.l.b16 %v977
      %v1030 = vunpack.c.h.b16 %v977
      %v1031 = vunpack.c.l.b16 %v978
      %v1032 = vunpack.c.h.b16 %v978
      %v1033 = vpack.c.b16 %v1003, %v1001
      %v1034 = vpack.c.b16 %v1004, %v1002
      %v1035 = vpack.c.b16 %v1007, %v1005
      %v1036 = vpack.c.b16 %v1008, %v1006
      %v1037 = vpack.c.b16 %v1011, %v1009
      %v1038 = vpack.c.b16 %v1012, %v1010
      %v1039 = vpack.c.b16 %v1015, %v1013
      %v1040 = vpack.c.b16 %v1016, %v1014
      %v1041 = vpack.c.b16 %v1019, %v1017
      %v1042 = vpack.c.b16 %v1020, %v1018
      %v1043 = vpack.c.b16 %v1023, %v1021
      %v1044 = vpack.c.b16 %v1024, %v1022
      %v1045 = vpack.c.b16 %v1027, %v1025
      %v1046 = vpack.c.b16 %v1028, %v1026
      %v1047 = vpack.c.b16 %v1031, %v1029
      %v1048 = vpack.c.b16 %v1032, %v1030
      %1065 = vmatpush.bf16.msra.mxu0 %v1047
      %1066 = vmatpush.bf16.msra.mxu0 %v1045
      %1067 = vmatpush.bf16.msra.mxu0 %v1043
      %1068 = vmatpush.bf16.msra.mxu0 %v1041
      %1069 = vmatpush.bf16.msra.mxu0 %v1039
      %1070 = vmatpush.bf16.msra.mxu0 %v1037
      %1071 = vmatpush.bf16.msra.mxu0 %v1035
      %1072 = vmatpush.bf16.msra.mxu0 %v1033
      %1073 = vmatmul.bf16.gmra.mxu0 %v640
      %v1074 = vpop.f32.mrf.mxu0
      %v1075 = vadd.f32 %v981, %v1074
      %v1076 = vpop.f32.mrf.mxu0
      %v1077 = vadd.f32 %v981, %v1076
      %1078 = vdwg.mxu0
      %1079 = vmatpush.bf16.msra.mxu0 %v1048
      %1080 = vmatpush.bf16.msra.mxu0 %v1046
      %1081 = vmatpush.bf16.msra.mxu0 %v1044
      %1082 = vmatpush.bf16.msra.mxu0 %v1042
      %1083 = vmatpush.bf16.msra.mxu0 %v1040
      %1084 = vmatpush.bf16.msra.mxu0 %v1038
      %1085 = vmatpush.bf16.msra.mxu0 %v1036
      %1086 = vmatpush.bf16.msra.mxu0 %v1034
      %1087 = vmatmul.bf16.gmra.mxu0 %v640
      %v1088 = vpop.f32.mrf.mxu0
      %v1089 = vadd.f32 %v982, %v1088
      %v1090 = vpop.f32.mrf.mxu0
      %v1091 = vadd.f32 %v982, %v1090
      %1092 = vdwg.mxu0
      %v1093 = vmax.f32 %v1075, 0.0
      %v1094 = vmax.f32 %v1089, 0.0
      %v1095 = vmax.f32 %v1077, 0.0
      %v1096 = vmax.f32 %v1091, 0.0
      %v1097 = vmax.f32 %v1093, %v1095
      %v1098 = vrot.slane %v1097, 4
      %v1099 = vmax.f32 %v1097, %v1098
      %v1100 = vrot.slane %v1099, 2
      %v1101 = vmax.f32 %v1099, %v1100
      %v1102 = vrot.slane %v1101, 1
      %v1103 = vmax.f32 %v1101, %v1102
      %v1104 = vmax.f32 %v1094, %v1096
      %v1105 = vrot.slane %v1104, 4
      %v1106 = vmax.f32 %v1104, %v1105
      %v1107 = vrot.slane %v1106, 2
      %v1108 = vmax.f32 %v1106, %v1107
      %v1109 = vrot.slane %v1108, 1
      %v1110 = vmax.f32 %v1108, %v1109
      %v1111 = vld [vmem:[#allocation2 + $0x4] sm:$0x3]
      %v1114 = vrot.slane %v1110, 7
      %v1115 = vsel %vm798, %v1103, %v1114
      %v1117 = vmax.f32 %v1111, %v1115
      %1118 = vst.msk [vmem:[#allocation2 + $0x4] sm:$0x3] %vm805, %v1117
      %v1119 = vld [vmem:[%s5 + $0x18] sm:$0xff]
      %v1120 = vld [vmem:[%s5 + $0x38] sm:$0xff]
      %v1121 = vld [vmem:[%s5 + $0x58] sm:$0xff]
      %v1122 = vld [vmem:[%s5 + $0x78] sm:$0xff]
      %v1123 = vld [vmem:[%s5 + $0x98] sm:$0xff]
      %v1124 = vld [vmem:[%s5 + $0xb8] sm:$0xff]
      %v1125 = vld [vmem:[%s5 + $0xd8] sm:$0xff]
      %v1126 = vld [vmem:[%s5 + $0xf8] sm:$0xff]
      %v1127 = vld [vmem:[%s5 + $0x118] sm:$0xff]
      %v1128 = vld [vmem:[%s5 + $0x138] sm:$0xff]
      %v1129 = vld [vmem:[%s5 + $0x158] sm:$0xff]
      %v1130 = vld [vmem:[%s5 + $0x178] sm:$0xff]
      %v1131 = vld [vmem:[%s5 + $0x198] sm:$0xff]
      %v1132 = vld [vmem:[%s5 + $0x1b8] sm:$0xff]
      %v1133 = vld [vmem:[%s5 + $0x1d8] sm:$0xff]
      %v1134 = vld [vmem:[%s5 + $0x1f8] sm:$0xff]
      %v1135 = vld [vmem:[%s6 + $0x6] sm:$0x3]
      %v1137 = vperm.slane %v1135, 0
      %v1138 = vperm.slane %v1135, 1
      %v1157 = vunpack.c.l.b16 %v1119
      %v1158 = vunpack.c.h.b16 %v1119
      %v1159 = vunpack.c.l.b16 %v1120
      %v1160 = vunpack.c.h.b16 %v1120
      %v1161 = vunpack.c.l.b16 %v1121
      %v1162 = vunpack.c.h.b16 %v1121
      %v1163 = vunpack.c.l.b16 %v1122
      %v1164 = vunpack.c.h.b16 %v1122
      %v1165 = vunpack.c.l.b16 %v1123
      %v1166 = vunpack.c.h.b16 %v1123
      %v1167 = vunpack.c.l.b16 %v1124
      %v1168 = vunpack.c.h.b16 %v1124
      %v1169 = vunpack.c.l.b16 %v1125
      %v1170 = vunpack.c.h.b16 %v1125
      %v1171 = vunpack.c.l.b16 %v1126
      %v1172 = vunpack.c.h.b16 %v1126
      %v1173 = vunpack.c.l.b16 %v1127
      %v1174 = vunpack.c.h.b16 %v1127
      %v1175 = vunpack.c.l.b16 %v1128
      %v1176 = vunpack.c.h.b16 %v1128
      %v1177 = vunpack.c.l.b16 %v1129
      %v1178 = vunpack.c.h.b16 %v1129
      %v1179 = vunpack.c.l.b16 %v1130
      %v1180 = vunpack.c.h.b16 %v1130
      %v1181 = vunpack.c.l.b16 %v1131
      %v1182 = vunpack.c.h.b16 %v1131
      %v1183 = vunpack.c.l.b16 %v1132
      %v1184 = vunpack.c.h.b16 %v1132
      %v1185 = vunpack.c.l.b16 %v1133
      %v1186 = vunpack.c.h.b16 %v1133
      %v1187 = vunpack.c.l.b16 %v1134
      %v1188 = vunpack.c.h.b16 %v1134
      %v1189 = vpack.c.b16 %v1159, %v1157
      %v1190 = vpack.c.b16 %v1160, %v1158
      %v1191 = vpack.c.b16 %v1163, %v1161
      %v1192 = vpack.c.b16 %v1164, %v1162
      %v1193 = vpack.c.b16 %v1167, %v1165
      %v1194 = vpack.c.b16 %v1168, %v1166
      %v1195 = vpack.c.b16 %v1171, %v1169
      %v1196 = vpack.c.b16 %v1172, %v1170
      %v1197 = vpack.c.b16 %v1175, %v1173
      %v1198 = vpack.c.b16 %v1176, %v1174
      %v1199 = vpack.c.b16 %v1179, %v1177
      %v1200 = vpack.c.b16 %v1180, %v1178
      %v1201 = vpack.c.b16 %v1183, %v1181
      %v1202 = vpack.c.b16 %v1184, %v1182
      %v1203 = vpack.c.b16 %v1187, %v1185
      %v1204 = vpack.c.b16 %v1188, %v1186
      %1221 = vmatpush.bf16.msra.mxu0 %v1203
      %1222 = vmatpush.bf16.msra.mxu0 %v1201
      %1223 = vmatpush.bf16.msra.mxu0 %v1199
      %1224 = vmatpush.bf16.msra.mxu0 %v1197
      %1225 = vmatpush.bf16.msra.mxu0 %v1195
      %1226 = vmatpush.bf16.msra.mxu0 %v1193
      %1227 = vmatpush.bf16.msra.mxu0 %v1191
      %1228 = vmatpush.bf16.msra.mxu0 %v1189
      %1229 = vmatmul.bf16.gmra.mxu0 %v640
      %v1230 = vpop.f32.mrf.mxu0
      %v1231 = vadd.f32 %v1137, %v1230
      %v1232 = vpop.f32.mrf.mxu0
      %v1233 = vadd.f32 %v1137, %v1232
      %1234 = vdwg.mxu0
      %1235 = vmatpush.bf16.msra.mxu0 %v1204
      %1236 = vmatpush.bf16.msra.mxu0 %v1202
      %1237 = vmatpush.bf16.msra.mxu0 %v1200
      %1238 = vmatpush.bf16.msra.mxu0 %v1198
      %1239 = vmatpush.bf16.msra.mxu0 %v1196
      %1240 = vmatpush.bf16.msra.mxu0 %v1194
      %1241 = vmatpush.bf16.msra.mxu0 %v1192
      %1242 = vmatpush.bf16.msra.mxu0 %v1190
      %1243 = vmatmul.bf16.gmra.mxu0 %v640
      %v1244 = vpop.f32.mrf.mxu0
      %v1245 = vadd.f32 %v1138, %v1244
      %v1246 = vpop.f32.mrf.mxu0
      %v1247 = vadd.f32 %v1138, %v1246
      %1248 = vdwg.mxu0
      %v1249 = vmax.f32 %v1231, 0.0
      %v1250 = vmax.f32 %v1245, 0.0
      %v1251 = vmax.f32 %v1233, 0.0
      %v1252 = vmax.f32 %v1247, 0.0
      %v1253 = vmax.f32 %v1249, %v1251
      %v1254 = vrot.slane %v1253, 4
      %v1255 = vmax.f32 %v1253, %v1254
      %v1256 = vrot.slane %v1255, 2
      %v1257 = vmax.f32 %v1255, %v1256
      %v1258 = vrot.slane %v1257, 1
      %v1259 = vmax.f32 %v1257, %v1258
      %v1260 = vmax.f32 %v1250, %v1252
      %v1261 = vrot.slane %v1260, 4
      %v1262 = vmax.f32 %v1260, %v1261
      %v1263 = vrot.slane %v1262, 2
      %v1264 = vmax.f32 %v1262, %v1263
      %v1265 = vrot.slane %v1264, 1
      %v1266 = vmax.f32 %v1264, %v1265
      %v1267 = vld [vmem:[#allocation2 + $0x6] sm:$0x3]
      %v1270 = vrot.slane %v1266, 7
      %v1271 = vsel %vm798, %v1259, %v1270
      %v1273 = vmax.f32 %v1267, %v1271
      %1274 = vst.msk [vmem:[#allocation2 + $0x6] sm:$0x3] %vm805, %v1273
      // Predicated region
      $region81: #{transform_net_forward.1} parent=75 // pred_check
        %p1275 = pneg %p641
      $region82: #{transform_net_forward.1} parent=75 // pred_check_branch
        %1277 = sbr.rel (%p1275) target = $region84
      $region83: #{transform_net_forward.1} parent=75 // pred_region
        %v1278 = vld [vmem:[#allocation2] sm:$0xff]
        %v1280 = vperm.slane %v1278, 0
        %v1281 = vperm.slane %v1278, 1
        %v1282 = vperm.slane %v1278, 2
        %v1283 = vperm.slane %v1278, 3
        %v1284 = vperm.slane %v1278, 4
        %v1285 = vperm.slane %v1278, 5
        %v1286 = vperm.slane %v1278, 6
        %v1287 = vperm.slane %v1278, 7
        %v1296 = vpack.c.bf16 %v1280, %v1280
        %v1297 = vpack.c.bf16 %v1281, %v1281
        %v1298 = vpack.c.bf16 %v1282, %v1282
        %v1299 = vpack.c.bf16 %v1283, %v1283
        %v1300 = vpack.c.bf16 %v1284, %v1284
        %v1301 = vpack.c.bf16 %v1285, %v1285
        %v1302 = vpack.c.bf16 %v1286, %v1286
        %v1303 = vpack.c.bf16 %v1287, %v1287
        %v1304 = vld [vmem:[%s7] sm:$0xff]
        %v1305 = vld [vmem:[%s7 + $0x8] sm:$0xff]
        %v1306 = vld [vmem:[%s7 + $0x10] sm:$0xff]
        %v1307 = vld [vmem:[%s7 + $0x18] sm:$0xff]
        %v1308 = vld [vmem:[%s7 + $0x20] sm:$0xff]
        %v1309 = vld [vmem:[%s7 + $0x28] sm:$0xff]
        %v1310 = vld [vmem:[%s7 + $0x30] sm:$0xff]
        %v1311 = vld [vmem:[%s7 + $0x38] sm:$0xff]
        %v1312 = vld [vmem:[%s7 + $0x40] sm:$0xff]
        %v1313 = vld [vmem:[%s7 + $0x48] sm:$0xff]
        %v1314 = vld [vmem:[%s7 + $0x50] sm:$0xff]
        %v1315 = vld [vmem:[%s7 + $0x58] sm:$0xff]
        %v1316 = vld [vmem:[%s7 + $0x60] sm:$0xff]
        %v1317 = vld [vmem:[%s7 + $0x68] sm:$0xff]
        %v1318 = vld [vmem:[%s7 + $0x70] sm:$0xff]
        %v1319 = vld [vmem:[%s7 + $0x78] sm:$0xff]
        %v1320 = vld [vmem:[%s7 + $0x80] sm:$0xff]
        %v1321 = vld [vmem:[%s7 + $0x88] sm:$0xff]
        %v1322 = vld [vmem:[%s7 + $0x90] sm:$0xff]
        %v1323 = vld [vmem:[%s7 + $0x98] sm:$0xff]
        %v1324 = vld [vmem:[%s7 + $0xa0] sm:$0xff]
        %v1325 = vld [vmem:[%s7 + $0xa8] sm:$0xff]
        %v1326 = vld [vmem:[%s7 + $0xb0] sm:$0xff]
        %v1327 = vld [vmem:[%s7 + $0xb8] sm:$0xff]
        %v1328 = vld [vmem:[%s7 + $0xc0] sm:$0xff]
        %v1329 = vld [vmem:[%s7 + $0xc8] sm:$0xff]
        %v1330 = vld [vmem:[%s7 + $0xd0] sm:$0xff]
        %v1331 = vld [vmem:[%s7 + $0xd8] sm:$0xff]
        %v1332 = vld [vmem:[%s7 + $0xe0] sm:$0xff]
        %v1333 = vld [vmem:[%s7 + $0xe8] sm:$0xff]
        %v1334 = vld [vmem:[%s7 + $0xf0] sm:$0xff]
        %v1335 = vld [vmem:[%s7 + $0xf8] sm:$0xff]
        %v1336 = vld [vmem:[%s7 + $0x100] sm:$0xff]
        %v1337 = vld [vmem:[%s7 + $0x108] sm:$0xff]
        %v1338 = vld [vmem:[%s7 + $0x110] sm:$0xff]
        %v1339 = vld [vmem:[%s7 + $0x118] sm:$0xff]
        %v1340 = vld [vmem:[%s7 + $0x120] sm:$0xff]
        %v1341 = vld [vmem:[%s7 + $0x128] sm:$0xff]
        %v1342 = vld [vmem:[%s7 + $0x130] sm:$0xff]
        %v1343 = vld [vmem:[%s7 + $0x138] sm:$0xff]
        %v1344 = vld [vmem:[%s7 + $0x140] sm:$0xff]
        %v1345 = vld [vmem:[%s7 + $0x148] sm:$0xff]
        %v1346 = vld [vmem:[%s7 + $0x150] sm:$0xff]
        %v1347 = vld [vmem:[%s7 + $0x158] sm:$0xff]
        %v1348 = vld [vmem:[%s7 + $0x160] sm:$0xff]
        %v1349 = vld [vmem:[%s7 + $0x168] sm:$0xff]
        %v1350 = vld [vmem:[%s7 + $0x170] sm:$0xff]
        %v1351 = vld [vmem:[%s7 + $0x178] sm:$0xff]
        %v1352 = vld [vmem:[%s7 + $0x180] sm:$0xff]
        %v1353 = vld [vmem:[%s7 + $0x188] sm:$0xff]
        %v1354 = vld [vmem:[%s7 + $0x190] sm:$0xff]
        %v1355 = vld [vmem:[%s7 + $0x198] sm:$0xff]
        %v1356 = vld [vmem:[%s7 + $0x1a0] sm:$0xff]
        %v1357 = vld [vmem:[%s7 + $0x1a8] sm:$0xff]
        %v1358 = vld [vmem:[%s7 + $0x1b0] sm:$0xff]
        %v1359 = vld [vmem:[%s7 + $0x1b8] sm:$0xff]
        %v1360 = vld [vmem:[%s7 + $0x1c0] sm:$0xff]
        %v1361 = vld [vmem:[%s7 + $0x1c8] sm:$0xff]
        %v1362 = vld [vmem:[%s7 + $0x1d0] sm:$0xff]
        %v1363 = vld [vmem:[%s7 + $0x1d8] sm:$0xff]
        %v1364 = vld [vmem:[%s7 + $0x1e0] sm:$0xff]
        %v1365 = vld [vmem:[%s7 + $0x1e8] sm:$0xff]
        %v1366 = vld [vmem:[%s7 + $0x1f0] sm:$0xff]
        %v1367 = vld [vmem:[%s7 + $0x1f8] sm:$0xff]
        %v1368 = vld [vmem:[%s7 + $0x200] sm:$0xff]
        %v1369 = vld [vmem:[%s7 + $0x208] sm:$0xff]
        %v1370 = vld [vmem:[%s7 + $0x210] sm:$0xff]
        %v1371 = vld [vmem:[%s7 + $0x218] sm:$0xff]
        %v1372 = vld [vmem:[%s7 + $0x220] sm:$0xff]
        %v1373 = vld [vmem:[%s7 + $0x228] sm:$0xff]
        %v1374 = vld [vmem:[%s7 + $0x230] sm:$0xff]
        %v1375 = vld [vmem:[%s7 + $0x238] sm:$0xff]
        %v1376 = vld [vmem:[%s7 + $0x240] sm:$0xff]
        %v1377 = vld [vmem:[%s7 + $0x248] sm:$0xff]
        %v1378 = vld [vmem:[%s7 + $0x250] sm:$0xff]
        %v1379 = vld [vmem:[%s7 + $0x258] sm:$0xff]
        %v1380 = vld [vmem:[%s7 + $0x260] sm:$0xff]
        %v1381 = vld [vmem:[%s7 + $0x268] sm:$0xff]
        %v1382 = vld [vmem:[%s7 + $0x270] sm:$0xff]
        %v1383 = vld [vmem:[%s7 + $0x278] sm:$0xff]
        %v1384 = vld [vmem:[%s7 + $0x280] sm:$0xff]
        %v1385 = vld [vmem:[%s7 + $0x288] sm:$0xff]
        %v1386 = vld [vmem:[%s7 + $0x290] sm:$0xff]
        %v1387 = vld [vmem:[%s7 + $0x298] sm:$0xff]
        %v1388 = vld [vmem:[%s7 + $0x2a0] sm:$0xff]
        %v1389 = vld [vmem:[%s7 + $0x2a8] sm:$0xff]
        %v1390 = vld [vmem:[%s7 + $0x2b0] sm:$0xff]
        %v1391 = vld [vmem:[%s7 + $0x2b8] sm:$0xff]
        %v1392 = vld [vmem:[%s7 + $0x2c0] sm:$0xff]
        %v1393 = vld [vmem:[%s7 + $0x2c8] sm:$0xff]
        %v1394 = vld [vmem:[%s7 + $0x2d0] sm:$0xff]
        %v1395 = vld [vmem:[%s7 + $0x2d8] sm:$0xff]
        %v1396 = vld [vmem:[%s7 + $0x2e0] sm:$0xff]
        %v1397 = vld [vmem:[%s7 + $0x2e8] sm:$0xff]
        %v1398 = vld [vmem:[%s7 + $0x2f0] sm:$0xff]
        %v1399 = vld [vmem:[%s7 + $0x2f8] sm:$0xff]
        %v1400 = vld [vmem:[%s7 + $0x300] sm:$0xff]
        %v1401 = vld [vmem:[%s7 + $0x308] sm:$0xff]
        %v1402 = vld [vmem:[%s7 + $0x310] sm:$0xff]
        %v1403 = vld [vmem:[%s7 + $0x318] sm:$0xff]
        %v1404 = vld [vmem:[%s7 + $0x320] sm:$0xff]
        %v1405 = vld [vmem:[%s7 + $0x328] sm:$0xff]
        %v1406 = vld [vmem:[%s7 + $0x330] sm:$0xff]
        %v1407 = vld [vmem:[%s7 + $0x338] sm:$0xff]
        %v1408 = vld [vmem:[%s7 + $0x340] sm:$0xff]
        %v1409 = vld [vmem:[%s7 + $0x348] sm:$0xff]
        %v1410 = vld [vmem:[%s7 + $0x350] sm:$0xff]
        %v1411 = vld [vmem:[%s7 + $0x358] sm:$0xff]
        %v1412 = vld [vmem:[%s7 + $0x360] sm:$0xff]
        %v1413 = vld [vmem:[%s7 + $0x368] sm:$0xff]
        %v1414 = vld [vmem:[%s7 + $0x370] sm:$0xff]
        %v1415 = vld [vmem:[%s7 + $0x378] sm:$0xff]
        %v1416 = vld [vmem:[%s7 + $0x380] sm:$0xff]
        %v1417 = vld [vmem:[%s7 + $0x388] sm:$0xff]
        %v1418 = vld [vmem:[%s7 + $0x390] sm:$0xff]
        %v1419 = vld [vmem:[%s7 + $0x398] sm:$0xff]
        %v1420 = vld [vmem:[%s7 + $0x3a0] sm:$0xff]
        %v1421 = vld [vmem:[%s7 + $0x3a8] sm:$0xff]
        %v1422 = vld [vmem:[%s7 + $0x3b0] sm:$0xff]
        %v1423 = vld [vmem:[%s7 + $0x3b8] sm:$0xff]
        %v1424 = vld [vmem:[%s7 + $0x3c0] sm:$0xff]
        %v1425 = vld [vmem:[%s7 + $0x3c8] sm:$0xff]
        %v1426 = vld [vmem:[%s7 + $0x3d0] sm:$0xff]
        %v1427 = vld [vmem:[%s7 + $0x3d8] sm:$0xff]
        %v1428 = vld [vmem:[%s7 + $0x3e0] sm:$0xff]
        %v1429 = vld [vmem:[%s7 + $0x3e8] sm:$0xff]
        %v1430 = vld [vmem:[%s7 + $0x3f0] sm:$0xff]
        %v1431 = vld [vmem:[%s7 + $0x3f8] sm:$0xff]
        %v1432 = vld [vmem:[%s7 + $0x400] sm:$0xff]
        %v1433 = vld [vmem:[%s7 + $0x408] sm:$0xff]
        %v1434 = vld [vmem:[%s7 + $0x410] sm:$0xff]
        %v1435 = vld [vmem:[%s7 + $0x418] sm:$0xff]
        %v1436 = vld [vmem:[%s7 + $0x420] sm:$0xff]
        %v1437 = vld [vmem:[%s7 + $0x428] sm:$0xff]
        %v1438 = vld [vmem:[%s7 + $0x430] sm:$0xff]
        %v1439 = vld [vmem:[%s7 + $0x438] sm:$0xff]
        %v1440 = vld [vmem:[%s7 + $0x440] sm:$0xff]
        %v1441 = vld [vmem:[%s7 + $0x448] sm:$0xff]
        %v1442 = vld [vmem:[%s7 + $0x450] sm:$0xff]
        %v1443 = vld [vmem:[%s7 + $0x458] sm:$0xff]
        %v1444 = vld [vmem:[%s7 + $0x460] sm:$0xff]
        %v1445 = vld [vmem:[%s7 + $0x468] sm:$0xff]
        %v1446 = vld [vmem:[%s7 + $0x470] sm:$0xff]
        %v1447 = vld [vmem:[%s7 + $0x478] sm:$0xff]
        %v1448 = vld [vmem:[%s7 + $0x480] sm:$0xff]
        %v1449 = vld [vmem:[%s7 + $0x488] sm:$0xff]
        %v1450 = vld [vmem:[%s7 + $0x490] sm:$0xff]
        %v1451 = vld [vmem:[%s7 + $0x498] sm:$0xff]
        %v1452 = vld [vmem:[%s7 + $0x4a0] sm:$0xff]
        %v1453 = vld [vmem:[%s7 + $0x4a8] sm:$0xff]
        %v1454 = vld [vmem:[%s7 + $0x4b0] sm:$0xff]
        %v1455 = vld [vmem:[%s7 + $0x4b8] sm:$0xff]
        %v1456 = vld [vmem:[%s7 + $0x4c0] sm:$0xff]
        %v1457 = vld [vmem:[%s7 + $0x4c8] sm:$0xff]
        %v1458 = vld [vmem:[%s7 + $0x4d0] sm:$0xff]
        %v1459 = vld [vmem:[%s7 + $0x4d8] sm:$0xff]
        %v1460 = vld [vmem:[%s7 + $0x4e0] sm:$0xff]
        %v1461 = vld [vmem:[%s7 + $0x4e8] sm:$0xff]
        %v1462 = vld [vmem:[%s7 + $0x4f0] sm:$0xff]
        %v1463 = vld [vmem:[%s7 + $0x4f8] sm:$0xff]
        %v1464 = vld [vmem:[%s7 + $0x500] sm:$0xff]
        %v1465 = vld [vmem:[%s7 + $0x508] sm:$0xff]
        %v1466 = vld [vmem:[%s7 + $0x510] sm:$0xff]
        %v1467 = vld [vmem:[%s7 + $0x518] sm:$0xff]
        %v1468 = vld [vmem:[%s7 + $0x520] sm:$0xff]
        %v1469 = vld [vmem:[%s7 + $0x528] sm:$0xff]
        %v1470 = vld [vmem:[%s7 + $0x530] sm:$0xff]
        %v1471 = vld [vmem:[%s7 + $0x538] sm:$0xff]
        %v1472 = vld [vmem:[%s7 + $0x540] sm:$0xff]
        %v1473 = vld [vmem:[%s7 + $0x548] sm:$0xff]
        %v1474 = vld [vmem:[%s7 + $0x550] sm:$0xff]
        %v1475 = vld [vmem:[%s7 + $0x558] sm:$0xff]
        %v1476 = vld [vmem:[%s7 + $0x560] sm:$0xff]
        %v1477 = vld [vmem:[%s7 + $0x568] sm:$0xff]
        %v1478 = vld [vmem:[%s7 + $0x570] sm:$0xff]
        %v1479 = vld [vmem:[%s7 + $0x578] sm:$0xff]
        %v1480 = vld [vmem:[%s7 + $0x580] sm:$0xff]
        %v1481 = vld [vmem:[%s7 + $0x588] sm:$0xff]
        %v1482 = vld [vmem:[%s7 + $0x590] sm:$0xff]
        %v1483 = vld [vmem:[%s7 + $0x598] sm:$0xff]
        %v1484 = vld [vmem:[%s7 + $0x5a0] sm:$0xff]
        %v1485 = vld [vmem:[%s7 + $0x5a8] sm:$0xff]
        %v1486 = vld [vmem:[%s7 + $0x5b0] sm:$0xff]
        %v1487 = vld [vmem:[%s7 + $0x5b8] sm:$0xff]
        %v1488 = vld [vmem:[%s7 + $0x5c0] sm:$0xff]
        %v1489 = vld [vmem:[%s7 + $0x5c8] sm:$0xff]
        %v1490 = vld [vmem:[%s7 + $0x5d0] sm:$0xff]
        %v1491 = vld [vmem:[%s7 + $0x5d8] sm:$0xff]
        %v1492 = vld [vmem:[%s7 + $0x5e0] sm:$0xff]
        %v1493 = vld [vmem:[%s7 + $0x5e8] sm:$0xff]
        %v1494 = vld [vmem:[%s7 + $0x5f0] sm:$0xff]
        %v1495 = vld [vmem:[%s7 + $0x5f8] sm:$0xff]
        %v1496 = vld [vmem:[%s7 + $0x600] sm:$0xff]
        %v1497 = vld [vmem:[%s7 + $0x608] sm:$0xff]
        %v1498 = vld [vmem:[%s7 + $0x610] sm:$0xff]
        %v1499 = vld [vmem:[%s7 + $0x618] sm:$0xff]
        %v1500 = vld [vmem:[%s7 + $0x620] sm:$0xff]
        %v1501 = vld [vmem:[%s7 + $0x628] sm:$0xff]
        %v1502 = vld [vmem:[%s7 + $0x630] sm:$0xff]
        %v1503 = vld [vmem:[%s7 + $0x638] sm:$0xff]
        %v1504 = vld [vmem:[%s7 + $0x640] sm:$0xff]
        %v1505 = vld [vmem:[%s7 + $0x648] sm:$0xff]
        %v1506 = vld [vmem:[%s7 + $0x650] sm:$0xff]
        %v1507 = vld [vmem:[%s7 + $0x658] sm:$0xff]
        %v1508 = vld [vmem:[%s7 + $0x660] sm:$0xff]
        %v1509 = vld [vmem:[%s7 + $0x668] sm:$0xff]
        %v1510 = vld [vmem:[%s7 + $0x670] sm:$0xff]
        %v1511 = vld [vmem:[%s7 + $0x678] sm:$0xff]
        %v1512 = vld [vmem:[%s7 + $0x680] sm:$0xff]
        %v1513 = vld [vmem:[%s7 + $0x688] sm:$0xff]
        %v1514 = vld [vmem:[%s7 + $0x690] sm:$0xff]
        %v1515 = vld [vmem:[%s7 + $0x698] sm:$0xff]
        %v1516 = vld [vmem:[%s7 + $0x6a0] sm:$0xff]
        %v1517 = vld [vmem:[%s7 + $0x6a8] sm:$0xff]
        %v1518 = vld [vmem:[%s7 + $0x6b0] sm:$0xff]
        %v1519 = vld [vmem:[%s7 + $0x6b8] sm:$0xff]
        %v1520 = vld [vmem:[%s7 + $0x6c0] sm:$0xff]
        %v1521 = vld [vmem:[%s7 + $0x6c8] sm:$0xff]
        %v1522 = vld [vmem:[%s7 + $0x6d0] sm:$0xff]
        %v1523 = vld [vmem:[%s7 + $0x6d8] sm:$0xff]
        %v1524 = vld [vmem:[%s7 + $0x6e0] sm:$0xff]
        %v1525 = vld [vmem:[%s7 + $0x6e8] sm:$0xff]
        %v1526 = vld [vmem:[%s7 + $0x6f0] sm:$0xff]
        %v1527 = vld [vmem:[%s7 + $0x6f8] sm:$0xff]
        %v1528 = vld [vmem:[%s7 + $0x700] sm:$0xff]
        %v1529 = vld [vmem:[%s7 + $0x708] sm:$0xff]
        %v1530 = vld [vmem:[%s7 + $0x710] sm:$0xff]
        %v1531 = vld [vmem:[%s7 + $0x718] sm:$0xff]
        %v1532 = vld [vmem:[%s7 + $0x720] sm:$0xff]
        %v1533 = vld [vmem:[%s7 + $0x728] sm:$0xff]
        %v1534 = vld [vmem:[%s7 + $0x730] sm:$0xff]
        %v1535 = vld [vmem:[%s7 + $0x738] sm:$0xff]
        %v1536 = vld [vmem:[%s7 + $0x740] sm:$0xff]
        %v1537 = vld [vmem:[%s7 + $0x748] sm:$0xff]
        %v1538 = vld [vmem:[%s7 + $0x750] sm:$0xff]
        %v1539 = vld [vmem:[%s7 + $0x758] sm:$0xff]
        %v1540 = vld [vmem:[%s7 + $0x760] sm:$0xff]
        %v1541 = vld [vmem:[%s7 + $0x768] sm:$0xff]
        %v1542 = vld [vmem:[%s7 + $0x770] sm:$0xff]
        %v1543 = vld [vmem:[%s7 + $0x778] sm:$0xff]
        %v1544 = vld [vmem:[%s7 + $0x780] sm:$0xff]
        %v1545 = vld [vmem:[%s7 + $0x788] sm:$0xff]
        %v1546 = vld [vmem:[%s7 + $0x790] sm:$0xff]
        %v1547 = vld [vmem:[%s7 + $0x798] sm:$0xff]
        %v1548 = vld [vmem:[%s7 + $0x7a0] sm:$0xff]
        %v1549 = vld [vmem:[%s7 + $0x7a8] sm:$0xff]
        %v1550 = vld [vmem:[%s7 + $0x7b0] sm:$0xff]
        %v1551 = vld [vmem:[%s7 + $0x7b8] sm:$0xff]
        %v1552 = vld [vmem:[%s7 + $0x7c0] sm:$0xff]
        %v1553 = vld [vmem:[%s7 + $0x7c8] sm:$0xff]
        %v1554 = vld [vmem:[%s7 + $0x7d0] sm:$0xff]
        %v1555 = vld [vmem:[%s7 + $0x7d8] sm:$0xff]
        %v1556 = vld [vmem:[%s7 + $0x7e0] sm:$0xff]
        %v1557 = vld [vmem:[%s7 + $0x7e8] sm:$0xff]
        %v1558 = vld [vmem:[%s7 + $0x7f0] sm:$0xff]
        %v1559 = vld [vmem:[%s7 + $0x7f8] sm:$0xff]
        %v1560 = vld [vmem:[%s8] sm:$0xf]
        %v1817 = vunpack.c.l.b16 %v1304
        %v1818 = vunpack.c.h.b16 %v1304
        %v1819 = vunpack.c.l.b16 %v1305
        %v1820 = vunpack.c.h.b16 %v1305
        %v1821 = vunpack.c.l.b16 %v1306
        %v1822 = vunpack.c.h.b16 %v1306
        %v1823 = vunpack.c.l.b16 %v1307
        %v1824 = vunpack.c.h.b16 %v1307
        %v1825 = vunpack.c.l.b16 %v1308
        %v1826 = vunpack.c.h.b16 %v1308
        %v1827 = vunpack.c.l.b16 %v1309
        %v1828 = vunpack.c.h.b16 %v1309
        %v1829 = vunpack.c.l.b16 %v1310
        %v1830 = vunpack.c.h.b16 %v1310
        %v1831 = vunpack.c.l.b16 %v1311
        %v1832 = vunpack.c.h.b16 %v1311
        %v1833 = vunpack.c.l.b16 %v1312
        %v1834 = vunpack.c.h.b16 %v1312
        %v1835 = vunpack.c.l.b16 %v1313
        %v1836 = vunpack.c.h.b16 %v1313
        %v1837 = vunpack.c.l.b16 %v1314
        %v1838 = vunpack.c.h.b16 %v1314
        %v1839 = vunpack.c.l.b16 %v1315
        %v1840 = vunpack.c.h.b16 %v1315
        %v1841 = vunpack.c.l.b16 %v1316
        %v1842 = vunpack.c.h.b16 %v1316
        %v1843 = vunpack.c.l.b16 %v1317
        %v1844 = vunpack.c.h.b16 %v1317
        %v1845 = vunpack.c.l.b16 %v1318
        %v1846 = vunpack.c.h.b16 %v1318
        %v1847 = vunpack.c.l.b16 %v1319
        %v1848 = vunpack.c.h.b16 %v1319
        %v1849 = vunpack.c.l.b16 %v1320
        %v1850 = vunpack.c.h.b16 %v1320
        %v1851 = vunpack.c.l.b16 %v1321
        %v1852 = vunpack.c.h.b16 %v1321
        %v1853 = vunpack.c.l.b16 %v1322
        %v1854 = vunpack.c.h.b16 %v1322
        %v1855 = vunpack.c.l.b16 %v1323
        %v1856 = vunpack.c.h.b16 %v1323
        %v1857 = vunpack.c.l.b16 %v1324
        %v1858 = vunpack.c.h.b16 %v1324
        %v1859 = vunpack.c.l.b16 %v1325
        %v1860 = vunpack.c.h.b16 %v1325
        %v1861 = vunpack.c.l.b16 %v1326
        %v1862 = vunpack.c.h.b16 %v1326
        %v1863 = vunpack.c.l.b16 %v1327
        %v1864 = vunpack.c.h.b16 %v1327
        %v1865 = vunpack.c.l.b16 %v1328
        %v1866 = vunpack.c.h.b16 %v1328
        %v1867 = vunpack.c.l.b16 %v1329
        %v1868 = vunpack.c.h.b16 %v1329
        %v1869 = vunpack.c.l.b16 %v1330
        %v1870 = vunpack.c.h.b16 %v1330
        %v1871 = vunpack.c.l.b16 %v1331
        %v1872 = vunpack.c.h.b16 %v1331
        %v1873 = vunpack.c.l.b16 %v1332
        %v1874 = vunpack.c.h.b16 %v1332
        %v1875 = vunpack.c.l.b16 %v1333
        %v1876 = vunpack.c.h.b16 %v1333
        %v1877 = vunpack.c.l.b16 %v1334
        %v1878 = vunpack.c.h.b16 %v1334
        %v1879 = vunpack.c.l.b16 %v1335
        %v1880 = vunpack.c.h.b16 %v1335
        %v1881 = vunpack.c.l.b16 %v1336
        %v1882 = vunpack.c.h.b16 %v1336
        %v1883 = vunpack.c.l.b16 %v1337
        %v1884 = vunpack.c.h.b16 %v1337
        %v1885 = vunpack.c.l.b16 %v1338
        %v1886 = vunpack.c.h.b16 %v1338
        %v1887 = vunpack.c.l.b16 %v1339
        %v1888 = vunpack.c.h.b16 %v1339
        %v1889 = vunpack.c.l.b16 %v1340
        %v1890 = vunpack.c.h.b16 %v1340
        %v1891 = vunpack.c.l.b16 %v1341
        %v1892 = vunpack.c.h.b16 %v1341
        %v1893 = vunpack.c.l.b16 %v1342
        %v1894 = vunpack.c.h.b16 %v1342
        %v1895 = vunpack.c.l.b16 %v1343
        %v1896 = vunpack.c.h.b16 %v1343
        %v1897 = vunpack.c.l.b16 %v1344
        %v1898 = vunpack.c.h.b16 %v1344
        %v1899 = vunpack.c.l.b16 %v1345
        %v1900 = vunpack.c.h.b16 %v1345
        %v1901 = vunpack.c.l.b16 %v1346
        %v1902 = vunpack.c.h.b16 %v1346
        %v1903 = vunpack.c.l.b16 %v1347
        %v1904 = vunpack.c.h.b16 %v1347
        %v1905 = vunpack.c.l.b16 %v1348
        %v1906 = vunpack.c.h.b16 %v1348
        %v1907 = vunpack.c.l.b16 %v1349
        %v1908 = vunpack.c.h.b16 %v1349
        %v1909 = vunpack.c.l.b16 %v1350
        %v1910 = vunpack.c.h.b16 %v1350
        %v1911 = vunpack.c.l.b16 %v1351
        %v1912 = vunpack.c.h.b16 %v1351
        %v1913 = vunpack.c.l.b16 %v1352
        %v1914 = vunpack.c.h.b16 %v1352
        %v1915 = vunpack.c.l.b16 %v1353
        %v1916 = vunpack.c.h.b16 %v1353
        %v1917 = vunpack.c.l.b16 %v1354
        %v1918 = vunpack.c.h.b16 %v1354
        %v1919 = vunpack.c.l.b16 %v1355
        %v1920 = vunpack.c.h.b16 %v1355
        %v1921 = vunpack.c.l.b16 %v1356
        %v1922 = vunpack.c.h.b16 %v1356
        %v1923 = vunpack.c.l.b16 %v1357
        %v1924 = vunpack.c.h.b16 %v1357
        %v1925 = vunpack.c.l.b16 %v1358
        %v1926 = vunpack.c.h.b16 %v1358
        %v1927 = vunpack.c.l.b16 %v1359
        %v1928 = vunpack.c.h.b16 %v1359
        %v1929 = vunpack.c.l.b16 %v1360
        %v1930 = vunpack.c.h.b16 %v1360
        %v1931 = vunpack.c.l.b16 %v1361
        %v1932 = vunpack.c.h.b16 %v1361
        %v1933 = vunpack.c.l.b16 %v1362
        %v1934 = vunpack.c.h.b16 %v1362
        %v1935 = vunpack.c.l.b16 %v1363
        %v1936 = vunpack.c.h.b16 %v1363
        %v1937 = vunpack.c.l.b16 %v1364
        %v1938 = vunpack.c.h.b16 %v1364
        %v1939 = vunpack.c.l.b16 %v1365
        %v1940 = vunpack.c.h.b16 %v1365
        %v1941 = vunpack.c.l.b16 %v1366
        %v1942 = vunpack.c.h.b16 %v1366
        %v1943 = vunpack.c.l.b16 %v1367
        %v1944 = vunpack.c.h.b16 %v1367
        %v1945 = vunpack.c.l.b16 %v1368
        %v1946 = vunpack.c.h.b16 %v1368
        %v1947 = vunpack.c.l.b16 %v1369
        %v1948 = vunpack.c.h.b16 %v1369
        %v1949 = vunpack.c.l.b16 %v1370
        %v1950 = vunpack.c.h.b16 %v1370
        %v1951 = vunpack.c.l.b16 %v1371
        %v1952 = vunpack.c.h.b16 %v1371
        %v1953 = vunpack.c.l.b16 %v1372
        %v1954 = vunpack.c.h.b16 %v1372
        %v1955 = vunpack.c.l.b16 %v1373
        %v1956 = vunpack.c.h.b16 %v1373
        %v1957 = vunpack.c.l.b16 %v1374
        %v1958 = vunpack.c.h.b16 %v1374
        %v1959 = vunpack.c.l.b16 %v1375
        %v1960 = vunpack.c.h.b16 %v1375
        %v1961 = vunpack.c.l.b16 %v1376
        %v1962 = vunpack.c.h.b16 %v1376
        %v1963 = vunpack.c.l.b16 %v1377
        %v1964 = vunpack.c.h.b16 %v1377
        %v1965 = vunpack.c.l.b16 %v1378
        %v1966 = vunpack.c.h.b16 %v1378
        %v1967 = vunpack.c.l.b16 %v1379
        %v1968 = vunpack.c.h.b16 %v1379
        %v1969 = vunpack.c.l.b16 %v1380
        %v1970 = vunpack.c.h.b16 %v1380
        %v1971 = vunpack.c.l.b16 %v1381
        %v1972 = vunpack.c.h.b16 %v1381
        %v1973 = vunpack.c.l.b16 %v1382
        %v1974 = vunpack.c.h.b16 %v1382
        %v1975 = vunpack.c.l.b16 %v1383
        %v1976 = vunpack.c.h.b16 %v1383
        %v1977 = vunpack.c.l.b16 %v1384
        %v1978 = vunpack.c.h.b16 %v1384
        %v1979 = vunpack.c.l.b16 %v1385
        %v1980 = vunpack.c.h.b16 %v1385
        %v1981 = vunpack.c.l.b16 %v1386
        %v1982 = vunpack.c.h.b16 %v1386
        %v1983 = vunpack.c.l.b16 %v1387
        %v1984 = vunpack.c.h.b16 %v1387
        %v1985 = vunpack.c.l.b16 %v1388
        %v1986 = vunpack.c.h.b16 %v1388
        %v1987 = vunpack.c.l.b16 %v1389
        %v1988 = vunpack.c.h.b16 %v1389
        %v1989 = vunpack.c.l.b16 %v1390
        %v1990 = vunpack.c.h.b16 %v1390
        %v1991 = vunpack.c.l.b16 %v1391
        %v1992 = vunpack.c.h.b16 %v1391
        %v1993 = vunpack.c.l.b16 %v1392
        %v1994 = vunpack.c.h.b16 %v1392
        %v1995 = vunpack.c.l.b16 %v1393
        %v1996 = vunpack.c.h.b16 %v1393
        %v1997 = vunpack.c.l.b16 %v1394
        %v1998 = vunpack.c.h.b16 %v1394
        %v1999 = vunpack.c.l.b16 %v1395
        %v2000 = vunpack.c.h.b16 %v1395
        %v2001 = vunpack.c.l.b16 %v1396
        %v2002 = vunpack.c.h.b16 %v1396
        %v2003 = vunpack.c.l.b16 %v1397
        %v2004 = vunpack.c.h.b16 %v1397
        %v2005 = vunpack.c.l.b16 %v1398
        %v2006 = vunpack.c.h.b16 %v1398
        %v2007 = vunpack.c.l.b16 %v1399
        %v2008 = vunpack.c.h.b16 %v1399
        %v2009 = vunpack.c.l.b16 %v1400
        %v2010 = vunpack.c.h.b16 %v1400
        %v2011 = vunpack.c.l.b16 %v1401
        %v2012 = vunpack.c.h.b16 %v1401
        %v2013 = vunpack.c.l.b16 %v1402
        %v2014 = vunpack.c.h.b16 %v1402
        %v2015 = vunpack.c.l.b16 %v1403
        %v2016 = vunpack.c.h.b16 %v1403
        %v2017 = vunpack.c.l.b16 %v1404
        %v2018 = vunpack.c.h.b16 %v1404
        %v2019 = vunpack.c.l.b16 %v1405
        %v2020 = vunpack.c.h.b16 %v1405
        %v2021 = vunpack.c.l.b16 %v1406
        %v2022 = vunpack.c.h.b16 %v1406
        %v2023 = vunpack.c.l.b16 %v1407
        %v2024 = vunpack.c.h.b16 %v1407
        %v2025 = vunpack.c.l.b16 %v1408
        %v2026 = vunpack.c.h.b16 %v1408
        %v2027 = vunpack.c.l.b16 %v1409
        %v2028 = vunpack.c.h.b16 %v1409
        %v2029 = vunpack.c.l.b16 %v1410
        %v2030 = vunpack.c.h.b16 %v1410
        %v2031 = vunpack.c.l.b16 %v1411
        %v2032 = vunpack.c.h.b16 %v1411
        %v2033 = vunpack.c.l.b16 %v1412
        %v2034 = vunpack.c.h.b16 %v1412
        %v2035 = vunpack.c.l.b16 %v1413
        %v2036 = vunpack.c.h.b16 %v1413
        %v2037 = vunpack.c.l.b16 %v1414
        %v2038 = vunpack.c.h.b16 %v1414
        %v2039 = vunpack.c.l.b16 %v1415
        %v2040 = vunpack.c.h.b16 %v1415
        %v2041 = vunpack.c.l.b16 %v1416
        %v2042 = vunpack.c.h.b16 %v1416
        %v2043 = vunpack.c.l.b16 %v1417
        %v2044 = vunpack.c.h.b16 %v1417
        %v2045 = vunpack.c.l.b16 %v1418
        %v2046 = vunpack.c.h.b16 %v1418
        %v2047 = vunpack.c.l.b16 %v1419
        %v2048 = vunpack.c.h.b16 %v1419
        %v2049 = vunpack.c.l.b16 %v1420
        %v2050 = vunpack.c.h.b16 %v1420
        %v2051 = vunpack.c.l.b16 %v1421
        %v2052 = vunpack.c.h.b16 %v1421
        %v2053 = vunpack.c.l.b16 %v1422
        %v2054 = vunpack.c.h.b16 %v1422
        %v2055 = vunpack.c.l.b16 %v1423
        %v2056 = vunpack.c.h.b16 %v1423
        %v2057 = vunpack.c.l.b16 %v1424
        %v2058 = vunpack.c.h.b16 %v1424
        %v2059 = vunpack.c.l.b16 %v1425
        %v2060 = vunpack.c.h.b16 %v1425
        %v2061 = vunpack.c.l.b16 %v1426
        %v2062 = vunpack.c.h.b16 %v1426
        %v2063 = vunpack.c.l.b16 %v1427
        %v2064 = vunpack.c.h.b16 %v1427
        %v2065 = vunpack.c.l.b16 %v1428
        %v2066 = vunpack.c.h.b16 %v1428
        %v2067 = vunpack.c.l.b16 %v1429
        %v2068 = vunpack.c.h.b16 %v1429
        %v2069 = vunpack.c.l.b16 %v1430
        %v2070 = vunpack.c.h.b16 %v1430
        %v2071 = vunpack.c.l.b16 %v1431
        %v2072 = vunpack.c.h.b16 %v1431
        %v2073 = vunpack.c.l.b16 %v1432
        %v2074 = vunpack.c.h.b16 %v1432
        %v2075 = vunpack.c.l.b16 %v1433
        %v2076 = vunpack.c.h.b16 %v1433
        %v2077 = vunpack.c.l.b16 %v1434
        %v2078 = vunpack.c.h.b16 %v1434
        %v2079 = vunpack.c.l.b16 %v1435
        %v2080 = vunpack.c.h.b16 %v1435
        %v2081 = vunpack.c.l.b16 %v1436
        %v2082 = vunpack.c.h.b16 %v1436
        %v2083 = vunpack.c.l.b16 %v1437
        %v2084 = vunpack.c.h.b16 %v1437
        %v2085 = vunpack.c.l.b16 %v1438
        %v2086 = vunpack.c.h.b16 %v1438
        %v2087 = vunpack.c.l.b16 %v1439
        %v2088 = vunpack.c.h.b16 %v1439
        %v2089 = vunpack.c.l.b16 %v1440
        %v2090 = vunpack.c.h.b16 %v1440
        %v2091 = vunpack.c.l.b16 %v1441
        %v2092 = vunpack.c.h.b16 %v1441
        %v2093 = vunpack.c.l.b16 %v1442
        %v2094 = vunpack.c.h.b16 %v1442
        %v2095 = vunpack.c.l.b16 %v1443
        %v2096 = vunpack.c.h.b16 %v1443
        %v2097 = vunpack.c.l.b16 %v1444
        %v2098 = vunpack.c.h.b16 %v1444
        %v2099 = vunpack.c.l.b16 %v1445
        %v2100 = vunpack.c.h.b16 %v1445
        %v2101 = vunpack.c.l.b16 %v1446
        %v2102 = vunpack.c.h.b16 %v1446
        %v2103 = vunpack.c.l.b16 %v1447
        %v2104 = vunpack.c.h.b16 %v1447
        %v2105 = vunpack.c.l.b16 %v1448
        %v2106 = vunpack.c.h.b16 %v1448
        %v2107 = vunpack.c.l.b16 %v1449
        %v2108 = vunpack.c.h.b16 %v1449
        %v2109 = vunpack.c.l.b16 %v1450
        %v2110 = vunpack.c.h.b16 %v1450
        %v2111 = vunpack.c.l.b16 %v1451
        %v2112 = vunpack.c.h.b16 %v1451
        %v2113 = vunpack.c.l.b16 %v1452
        %v2114 = vunpack.c.h.b16 %v1452
        %v2115 = vunpack.c.l.b16 %v1453
        %v2116 = vunpack.c.h.b16 %v1453
        %v2117 = vunpack.c.l.b16 %v1454
        %v2118 = vunpack.c.h.b16 %v1454
        %v2119 = vunpack.c.l.b16 %v1455
        %v2120 = vunpack.c.h.b16 %v1455
        %v2121 = vunpack.c.l.b16 %v1456
        %v2122 = vunpack.c.h.b16 %v1456
        %v2123 = vunpack.c.l.b16 %v1457
        %v2124 = vunpack.c.h.b16 %v1457
        %v2125 = vunpack.c.l.b16 %v1458
        %v2126 = vunpack.c.h.b16 %v1458
        %v2127 = vunpack.c.l.b16 %v1459
        %v2128 = vunpack.c.h.b16 %v1459
        %v2129 = vunpack.c.l.b16 %v1460
        %v2130 = vunpack.c.h.b16 %v1460
        %v2131 = vunpack.c.l.b16 %v1461
        %v2132 = vunpack.c.h.b16 %v1461
        %v2133 = vunpack.c.l.b16 %v1462
        %v2134 = vunpack.c.h.b16 %v1462
        %v2135 = vunpack.c.l.b16 %v1463
        %v2136 = vunpack.c.h.b16 %v1463
        %v2137 = vunpack.c.l.b16 %v1464
        %v2138 = vunpack.c.h.b16 %v1464
        %v2139 = vunpack.c.l.b16 %v1465
        %v2140 = vunpack.c.h.b16 %v1465
        %v2141 = vunpack.c.l.b16 %v1466
        %v2142 = vunpack.c.h.b16 %v1466
        %v2143 = vunpack.c.l.b16 %v1467
        %v2144 = vunpack.c.h.b16 %v1467
        %v2145 = vunpack.c.l.b16 %v1468
        %v2146 = vunpack.c.h.b16 %v1468
        %v2147 = vunpack.c.l.b16 %v1469
        %v2148 = vunpack.c.h.b16 %v1469
        %v2149 = vunpack.c.l.b16 %v1470
        %v2150 = vunpack.c.h.b16 %v1470
        %v2151 = vunpack.c.l.b16 %v1471
        %v2152 = vunpack.c.h.b16 %v1471
        %v2153 = vunpack.c.l.b16 %v1472
        %v2154 = vunpack.c.h.b16 %v1472
        %v2155 = vunpack.c.l.b16 %v1473
        %v2156 = vunpack.c.h.b16 %v1473
        %v2157 = vunpack.c.l.b16 %v1474
        %v2158 = vunpack.c.h.b16 %v1474
        %v2159 = vunpack.c.l.b16 %v1475
        %v2160 = vunpack.c.h.b16 %v1475
        %v2161 = vunpack.c.l.b16 %v1476
        %v2162 = vunpack.c.h.b16 %v1476
        %v2163 = vunpack.c.l.b16 %v1477
        %v2164 = vunpack.c.h.b16 %v1477
        %v2165 = vunpack.c.l.b16 %v1478
        %v2166 = vunpack.c.h.b16 %v1478
        %v2167 = vunpack.c.l.b16 %v1479
        %v2168 = vunpack.c.h.b16 %v1479
        %v2169 = vunpack.c.l.b16 %v1480
        %v2170 = vunpack.c.h.b16 %v1480
        %v2171 = vunpack.c.l.b16 %v1481
        %v2172 = vunpack.c.h.b16 %v1481
        %v2173 = vunpack.c.l.b16 %v1482
        %v2174 = vunpack.c.h.b16 %v1482
        %v2175 = vunpack.c.l.b16 %v1483
        %v2176 = vunpack.c.h.b16 %v1483
        %v2177 = vunpack.c.l.b16 %v1484
        %v2178 = vunpack.c.h.b16 %v1484
        %v2179 = vunpack.c.l.b16 %v1485
        %v2180 = vunpack.c.h.b16 %v1485
        %v2181 = vunpack.c.l.b16 %v1486
        %v2182 = vunpack.c.h.b16 %v1486
        %v2183 = vunpack.c.l.b16 %v1487
        %v2184 = vunpack.c.h.b16 %v1487
        %v2185 = vunpack.c.l.b16 %v1488
        %v2186 = vunpack.c.h.b16 %v1488
        %v2187 = vunpack.c.l.b16 %v1489
        %v2188 = vunpack.c.h.b16 %v1489
        %v2189 = vunpack.c.l.b16 %v1490
        %v2190 = vunpack.c.h.b16 %v1490
        %v2191 = vunpack.c.l.b16 %v1491
        %v2192 = vunpack.c.h.b16 %v1491
        %v2193 = vunpack.c.l.b16 %v1492
        %v2194 = vunpack.c.h.b16 %v1492
        %v2195 = vunpack.c.l.b16 %v1493
        %v2196 = vunpack.c.h.b16 %v1493
        %v2197 = vunpack.c.l.b16 %v1494
        %v2198 = vunpack.c.h.b16 %v1494
        %v2199 = vunpack.c.l.b16 %v1495
        %v2200 = vunpack.c.h.b16 %v1495
        %v2201 = vunpack.c.l.b16 %v1496
        %v2202 = vunpack.c.h.b16 %v1496
        %v2203 = vunpack.c.l.b16 %v1497
        %v2204 = vunpack.c.h.b16 %v1497
        %v2205 = vunpack.c.l.b16 %v1498
        %v2206 = vunpack.c.h.b16 %v1498
        %v2207 = vunpack.c.l.b16 %v1499
        %v2208 = vunpack.c.h.b16 %v1499
        %v2209 = vunpack.c.l.b16 %v1500
        %v2210 = vunpack.c.h.b16 %v1500
        %v2211 = vunpack.c.l.b16 %v1501
        %v2212 = vunpack.c.h.b16 %v1501
        %v2213 = vunpack.c.l.b16 %v1502
        %v2214 = vunpack.c.h.b16 %v1502
        %v2215 = vunpack.c.l.b16 %v1503
        %v2216 = vunpack.c.h.b16 %v1503
        %v2217 = vunpack.c.l.b16 %v1504
        %v2218 = vunpack.c.h.b16 %v1504
        %v2219 = vunpack.c.l.b16 %v1505
        %v2220 = vunpack.c.h.b16 %v1505
        %v2221 = vunpack.c.l.b16 %v1506
        %v2222 = vunpack.c.h.b16 %v1506
        %v2223 = vunpack.c.l.b16 %v1507
        %v2224 = vunpack.c.h.b16 %v1507
        %v2225 = vunpack.c.l.b16 %v1508
        %v2226 = vunpack.c.h.b16 %v1508
        %v2227 = vunpack.c.l.b16 %v1509
        %v2228 = vunpack.c.h.b16 %v1509
        %v2229 = vunpack.c.l.b16 %v1510
        %v2230 = vunpack.c.h.b16 %v1510
        %v2231 = vunpack.c.l.b16 %v1511
        %v2232 = vunpack.c.h.b16 %v1511
        %v2233 = vunpack.c.l.b16 %v1512
        %v2234 = vunpack.c.h.b16 %v1512
        %v2235 = vunpack.c.l.b16 %v1513
        %v2236 = vunpack.c.h.b16 %v1513
        %v2237 = vunpack.c.l.b16 %v1514
        %v2238 = vunpack.c.h.b16 %v1514
        %v2239 = vunpack.c.l.b16 %v1515
        %v2240 = vunpack.c.h.b16 %v1515
        %v2241 = vunpack.c.l.b16 %v1516
        %v2242 = vunpack.c.h.b16 %v1516
        %v2243 = vunpack.c.l.b16 %v1517
        %v2244 = vunpack.c.h.b16 %v1517
        %v2245 = vunpack.c.l.b16 %v1518
        %v2246 = vunpack.c.h.b16 %v1518
        %v2247 = vunpack.c.l.b16 %v1519
        %v2248 = vunpack.c.h.b16 %v1519
        %v2249 = vunpack.c.l.b16 %v1520
        %v2250 = vunpack.c.h.b16 %v1520
        %v2251 = vunpack.c.l.b16 %v1521
        %v2252 = vunpack.c.h.b16 %v1521
        %v2253 = vunpack.c.l.b16 %v1522
        %v2254 = vunpack.c.h.b16 %v1522
        %v2255 = vunpack.c.l.b16 %v1523
        %v2256 = vunpack.c.h.b16 %v1523
        %v2257 = vunpack.c.l.b16 %v1524
        %v2258 = vunpack.c.h.b16 %v1524
        %v2259 = vunpack.c.l.b16 %v1525
        %v2260 = vunpack.c.h.b16 %v1525
        %v2261 = vunpack.c.l.b16 %v1526
        %v2262 = vunpack.c.h.b16 %v1526
        %v2263 = vunpack.c.l.b16 %v1527
        %v2264 = vunpack.c.h.b16 %v1527
        %v2265 = vunpack.c.l.b16 %v1528
        %v2266 = vunpack.c.h.b16 %v1528
        %v2267 = vunpack.c.l.b16 %v1529
        %v2268 = vunpack.c.h.b16 %v1529
        %v2269 = vunpack.c.l.b16 %v1530
        %v2270 = vunpack.c.h.b16 %v1530
        %v2271 = vunpack.c.l.b16 %v1531
        %v2272 = vunpack.c.h.b16 %v1531
        %v2273 = vunpack.c.l.b16 %v1532
        %v2274 = vunpack.c.h.b16 %v1532
        %v2275 = vunpack.c.l.b16 %v1533
        %v2276 = vunpack.c.h.b16 %v1533
        %v2277 = vunpack.c.l.b16 %v1534
        %v2278 = vunpack.c.h.b16 %v1534
        %v2279 = vunpack.c.l.b16 %v1535
        %v2280 = vunpack.c.h.b16 %v1535
        %v2281 = vunpack.c.l.b16 %v1536
        %v2282 = vunpack.c.h.b16 %v1536
        %v2283 = vunpack.c.l.b16 %v1537
        %v2284 = vunpack.c.h.b16 %v1537
        %v2285 = vunpack.c.l.b16 %v1538
        %v2286 = vunpack.c.h.b16 %v1538
        %v2287 = vunpack.c.l.b16 %v1539
        %v2288 = vunpack.c.h.b16 %v1539
        %v2289 = vunpack.c.l.b16 %v1540
        %v2290 = vunpack.c.h.b16 %v1540
        %v2291 = vunpack.c.l.b16 %v1541
        %v2292 = vunpack.c.h.b16 %v1541
        %v2293 = vunpack.c.l.b16 %v1542
        %v2294 = vunpack.c.h.b16 %v1542
        %v2295 = vunpack.c.l.b16 %v1543
        %v2296 = vunpack.c.h.b16 %v1543
        %v2297 = vunpack.c.l.b16 %v1544
        %v2298 = vunpack.c.h.b16 %v1544
        %v2299 = vunpack.c.l.b16 %v1545
        %v2300 = vunpack.c.h.b16 %v1545
        %v2301 = vunpack.c.l.b16 %v1546
        %v2302 = vunpack.c.h.b16 %v1546
        %v2303 = vunpack.c.l.b16 %v1547
        %v2304 = vunpack.c.h.b16 %v1547
        %v2305 = vunpack.c.l.b16 %v1548
        %v2306 = vunpack.c.h.b16 %v1548
        %v2307 = vunpack.c.l.b16 %v1549
        %v2308 = vunpack.c.h.b16 %v1549
        %v2309 = vunpack.c.l.b16 %v1550
        %v2310 = vunpack.c.h.b16 %v1550
        %v2311 = vunpack.c.l.b16 %v1551
        %v2312 = vunpack.c.h.b16 %v1551
        %v2313 = vunpack.c.l.b16 %v1552
        %v2314 = vunpack.c.h.b16 %v1552
        %v2315 = vunpack.c.l.b16 %v1553
        %v2316 = vunpack.c.h.b16 %v1553
        %v2317 = vunpack.c.l.b16 %v1554
        %v2318 = vunpack.c.h.b16 %v1554
        %v2319 = vunpack.c.l.b16 %v1555
        %v2320 = vunpack.c.h.b16 %v1555
        %v2321 = vunpack.c.l.b16 %v1556
        %v2322 = vunpack.c.h.b16 %v1556
        %v2323 = vunpack.c.l.b16 %v1557
        %v2324 = vunpack.c.h.b16 %v1557
        %v2325 = vunpack.c.l.b16 %v1558
        %v2326 = vunpack.c.h.b16 %v1558
        %v2327 = vunpack.c.l.b16 %v1559
        %v2328 = vunpack.c.h.b16 %v1559
        %v2329 = vpack.c.b16 %v1821, %v1817
        %v2330 = vpack.c.b16 %v1822, %v1818
        %v2331 = vpack.c.b16 %v1823, %v1819
        %v2332 = vpack.c.b16 %v1824, %v1820
        %v2333 = vpack.c.b16 %v1829, %v1825
        %v2334 = vpack.c.b16 %v1830, %v1826
        %v2335 = vpack.c.b16 %v1831, %v1827
        %v2336 = vpack.c.b16 %v1832, %v1828
        %v2337 = vpack.c.b16 %v1837, %v1833
        %v2338 = vpack.c.b16 %v1838, %v1834
        %v2339 = vpack.c.b16 %v1839, %v1835
        %v2340 = vpack.c.b16 %v1840, %v1836
        %v2341 = vpack.c.b16 %v1845, %v1841
        %v2342 = vpack.c.b16 %v1846, %v1842
        %v2343 = vpack.c.b16 %v1847, %v1843
        %v2344 = vpack.c.b16 %v1848, %v1844
        %v2345 = vpack.c.b16 %v1853, %v1849
        %v2346 = vpack.c.b16 %v1854, %v1850
        %v2347 = vpack.c.b16 %v1855, %v1851
        %v2348 = vpack.c.b16 %v1856, %v1852
        %v2349 = vpack.c.b16 %v1861, %v1857
        %v2350 = vpack.c.b16 %v1862, %v1858
        %v2351 = vpack.c.b16 %v1863, %v1859
        %v2352 = vpack.c.b16 %v1864, %v1860
        %v2353 = vpack.c.b16 %v1869, %v1865
        %v2354 = vpack.c.b16 %v1870, %v1866
        %v2355 = vpack.c.b16 %v1871, %v1867
        %v2356 = vpack.c.b16 %v1872, %v1868
        %v2357 = vpack.c.b16 %v1877, %v1873
        %v2358 = vpack.c.b16 %v1878, %v1874
        %v2359 = vpack.c.b16 %v1879, %v1875
        %v2360 = vpack.c.b16 %v1880, %v1876
        %v2361 = vpack.c.b16 %v1885, %v1881
        %v2362 = vpack.c.b16 %v1886, %v1882
        %v2363 = vpack.c.b16 %v1887, %v1883
        %v2364 = vpack.c.b16 %v1888, %v1884
        %v2365 = vpack.c.b16 %v1893, %v1889
        %v2366 = vpack.c.b16 %v1894, %v1890
        %v2367 = vpack.c.b16 %v1895, %v1891
        %v2368 = vpack.c.b16 %v1896, %v1892
        %v2369 = vpack.c.b16 %v1901, %v1897
        %v2370 = vpack.c.b16 %v1902, %v1898
        %v2371 = vpack.c.b16 %v1903, %v1899
        %v2372 = vpack.c.b16 %v1904, %v1900
        %v2373 = vpack.c.b16 %v1909, %v1905
        %v2374 = vpack.c.b16 %v1910, %v1906
        %v2375 = vpack.c.b16 %v1911, %v1907
        %v2376 = vpack.c.b16 %v1912, %v1908
        %v2377 = vpack.c.b16 %v1917, %v1913
        %v2378 = vpack.c.b16 %v1918, %v1914
        %v2379 = vpack.c.b16 %v1919, %v1915
        %v2380 = vpack.c.b16 %v1920, %v1916
        %v2381 = vpack.c.b16 %v1925, %v1921
        %v2382 = vpack.c.b16 %v1926, %v1922
        %v2383 = vpack.c.b16 %v1927, %v1923
        %v2384 = vpack.c.b16 %v1928, %v1924
        %v2385 = vpack.c.b16 %v1933, %v1929
        %v2386 = vpack.c.b16 %v1934, %v1930
        %v2387 = vpack.c.b16 %v1935, %v1931
        %v2388 = vpack.c.b16 %v1936, %v1932
        %v2389 = vpack.c.b16 %v1941, %v1937
        %v2390 = vpack.c.b16 %v1942, %v1938
        %v2391 = vpack.c.b16 %v1943, %v1939
        %v2392 = vpack.c.b16 %v1944, %v1940
        %v2393 = vpack.c.b16 %v1949, %v1945
        %v2394 = vpack.c.b16 %v1950, %v1946
        %v2395 = vpack.c.b16 %v1951, %v1947
        %v2396 = vpack.c.b16 %v1952, %v1948
        %v2397 = vpack.c.b16 %v1957, %v1953
        %v2398 = vpack.c.b16 %v1958, %v1954
        %v2399 = vpack.c.b16 %v1959, %v1955
        %v2400 = vpack.c.b16 %v1960, %v1956
        %v2401 = vpack.c.b16 %v1965, %v1961
        %v2402 = vpack.c.b16 %v1966, %v1962
        %v2403 = vpack.c.b16 %v1967, %v1963
        %v2404 = vpack.c.b16 %v1968, %v1964
        %v2405 = vpack.c.b16 %v1973, %v1969
        %v2406 = vpack.c.b16 %v1974, %v1970
        %v2407 = vpack.c.b16 %v1975, %v1971
        %v2408 = vpack.c.b16 %v1976, %v1972
        %v2409 = vpack.c.b16 %v1981, %v1977
        %v2410 = vpack.c.b16 %v1982, %v1978
        %v2411 = vpack.c.b16 %v1983, %v1979
        %v2412 = vpack.c.b16 %v1984, %v1980
        %v2413 = vpack.c.b16 %v1989, %v1985
        %v2414 = vpack.c.b16 %v1990, %v1986
        %v2415 = vpack.c.b16 %v1991, %v1987
        %v2416 = vpack.c.b16 %v1992, %v1988
        %v2417 = vpack.c.b16 %v1997, %v1993
        %v2418 = vpack.c.b16 %v1998, %v1994
        %v2419 = vpack.c.b16 %v1999, %v1995
        %v2420 = vpack.c.b16 %v2000, %v1996
        %v2421 = vpack.c.b16 %v2005, %v2001
        %v2422 = vpack.c.b16 %v2006, %v2002
        %v2423 = vpack.c.b16 %v2007, %v2003
        %v2424 = vpack.c.b16 %v2008, %v2004
        %v2425 = vpack.c.b16 %v2013, %v2009
        %v2426 = vpack.c.b16 %v2014, %v2010
        %v2427 = vpack.c.b16 %v2015, %v2011
        %v2428 = vpack.c.b16 %v2016, %v2012
        %v2429 = vpack.c.b16 %v2021, %v2017
        %v2430 = vpack.c.b16 %v2022, %v2018
        %v2431 = vpack.c.b16 %v2023, %v2019
        %v2432 = vpack.c.b16 %v2024, %v2020
        %v2433 = vpack.c.b16 %v2029, %v2025
        %v2434 = vpack.c.b16 %v2030, %v2026
        %v2435 = vpack.c.b16 %v2031, %v2027
        %v2436 = vpack.c.b16 %v2032, %v2028
        %v2437 = vpack.c.b16 %v2037, %v2033
        %v2438 = vpack.c.b16 %v2038, %v2034
        %v2439 = vpack.c.b16 %v2039, %v2035
        %v2440 = vpack.c.b16 %v2040, %v2036
        %v2441 = vpack.c.b16 %v2045, %v2041
        %v2442 = vpack.c.b16 %v2046, %v2042
        %v2443 = vpack.c.b16 %v2047, %v2043
        %v2444 = vpack.c.b16 %v2048, %v2044
        %v2445 = vpack.c.b16 %v2053, %v2049
        %v2446 = vpack.c.b16 %v2054, %v2050
        %v2447 = vpack.c.b16 %v2055, %v2051
        %v2448 = vpack.c.b16 %v2056, %v2052
        %v2449 = vpack.c.b16 %v2061, %v2057
        %v2450 = vpack.c.b16 %v2062, %v2058
        %v2451 = vpack.c.b16 %v2063, %v2059
        %v2452 = vpack.c.b16 %v2064, %v2060
        %v2453 = vpack.c.b16 %v2069, %v2065
        %v2454 = vpack.c.b16 %v2070, %v2066
        %v2455 = vpack.c.b16 %v2071, %v2067
        %v2456 = vpack.c.b16 %v2072, %v2068
        %v2457 = vpack.c.b16 %v2077, %v2073
        %v2458 = vpack.c.b16 %v2078, %v2074
        %v2459 = vpack.c.b16 %v2079, %v2075
        %v2460 = vpack.c.b16 %v2080, %v2076
        %v2461 = vpack.c.b16 %v2085, %v2081
        %v2462 = vpack.c.b16 %v2086, %v2082
        %v2463 = vpack.c.b16 %v2087, %v2083
        %v2464 = vpack.c.b16 %v2088, %v2084
        %v2465 = vpack.c.b16 %v2093, %v2089
        %v2466 = vpack.c.b16 %v2094, %v2090
        %v2467 = vpack.c.b16 %v2095, %v2091
        %v2468 = vpack.c.b16 %v2096, %v2092
        %v2469 = vpack.c.b16 %v2101, %v2097
        %v2470 = vpack.c.b16 %v2102, %v2098
        %v2471 = vpack.c.b16 %v2103, %v2099
        %v2472 = vpack.c.b16 %v2104, %v2100
        %v2473 = vpack.c.b16 %v2109, %v2105
        %v2474 = vpack.c.b16 %v2110, %v2106
        %v2475 = vpack.c.b16 %v2111, %v2107
        %v2476 = vpack.c.b16 %v2112, %v2108
        %v2477 = vpack.c.b16 %v2117, %v2113
        %v2478 = vpack.c.b16 %v2118, %v2114
        %v2479 = vpack.c.b16 %v2119, %v2115
        %v2480 = vpack.c.b16 %v2120, %v2116
        %v2481 = vpack.c.b16 %v2125, %v2121
        %v2482 = vpack.c.b16 %v2126, %v2122
        %v2483 = vpack.c.b16 %v2127, %v2123
        %v2484 = vpack.c.b16 %v2128, %v2124
        %v2485 = vpack.c.b16 %v2133, %v2129
        %v2486 = vpack.c.b16 %v2134, %v2130
        %v2487 = vpack.c.b16 %v2135, %v2131
        %v2488 = vpack.c.b16 %v2136, %v2132
        %v2489 = vpack.c.b16 %v2141, %v2137
        %v2490 = vpack.c.b16 %v2142, %v2138
        %v2491 = vpack.c.b16 %v2143, %v2139
        %v2492 = vpack.c.b16 %v2144, %v2140
        %v2493 = vpack.c.b16 %v2149, %v2145
        %v2494 = vpack.c.b16 %v2150, %v2146
        %v2495 = vpack.c.b16 %v2151, %v2147
        %v2496 = vpack.c.b16 %v2152, %v2148
        %v2497 = vpack.c.b16 %v2157, %v2153
        %v2498 = vpack.c.b16 %v2158, %v2154
        %v2499 = vpack.c.b16 %v2159, %v2155
        %v2500 = vpack.c.b16 %v2160, %v2156
        %v2501 = vpack.c.b16 %v2165, %v2161
        %v2502 = vpack.c.b16 %v2166, %v2162
        %v2503 = vpack.c.b16 %v2167, %v2163
        %v2504 = vpack.c.b16 %v2168, %v2164
        %v2505 = vpack.c.b16 %v2173, %v2169
        %v2506 = vpack.c.b16 %v2174, %v2170
        %v2507 = vpack.c.b16 %v2175, %v2171
        %v2508 = vpack.c.b16 %v2176, %v2172
        %v2509 = vpack.c.b16 %v2181, %v2177
        %v2510 = vpack.c.b16 %v2182, %v2178
        %v2511 = vpack.c.b16 %v2183, %v2179
        %v2512 = vpack.c.b16 %v2184, %v2180
        %v2513 = vpack.c.b16 %v2189, %v2185
        %v2514 = vpack.c.b16 %v2190, %v2186
        %v2515 = vpack.c.b16 %v2191, %v2187
        %v2516 = vpack.c.b16 %v2192, %v2188
        %v2517 = vpack.c.b16 %v2197, %v2193
        %v2518 = vpack.c.b16 %v2198, %v2194
        %v2519 = vpack.c.b16 %v2199, %v2195
        %v2520 = vpack.c.b16 %v2200, %v2196
        %v2521 = vpack.c.b16 %v2205, %v2201
        %v2522 = vpack.c.b16 %v2206, %v2202
        %v2523 = vpack.c.b16 %v2207, %v2203
        %v2524 = vpack.c.b16 %v2208, %v2204
        %v2525 = vpack.c.b16 %v2213, %v2209
        %v2526 = vpack.c.b16 %v2214, %v2210
        %v2527 = vpack.c.b16 %v2215, %v2211
        %v2528 = vpack.c.b16 %v2216, %v2212
        %v2529 = vpack.c.b16 %v2221, %v2217
        %v2530 = vpack.c.b16 %v2222, %v2218
        %v2531 = vpack.c.b16 %v2223, %v2219
        %v2532 = vpack.c.b16 %v2224, %v2220
        %v2533 = vpack.c.b16 %v2229, %v2225
        %v2534 = vpack.c.b16 %v2230, %v2226
        %v2535 = vpack.c.b16 %v2231, %v2227
        %v2536 = vpack.c.b16 %v2232, %v2228
        %v2537 = vpack.c.b16 %v2237, %v2233
        %v2538 = vpack.c.b16 %v2238, %v2234
        %v2539 = vpack.c.b16 %v2239, %v2235
        %v2540 = vpack.c.b16 %v2240, %v2236
        %v2541 = vpack.c.b16 %v2245, %v2241
        %v2542 = vpack.c.b16 %v2246, %v2242
        %v2543 = vpack.c.b16 %v2247, %v2243
        %v2544 = vpack.c.b16 %v2248, %v2244
        %v2545 = vpack.c.b16 %v2253, %v2249
        %v2546 = vpack.c.b16 %v2254, %v2250
        %v2547 = vpack.c.b16 %v2255, %v2251
        %v2548 = vpack.c.b16 %v2256, %v2252
        %v2549 = vpack.c.b16 %v2261, %v2257
        %v2550 = vpack.c.b16 %v2262, %v2258
        %v2551 = vpack.c.b16 %v2263, %v2259
        %v2552 = vpack.c.b16 %v2264, %v2260
        %v2553 = vpack.c.b16 %v2269, %v2265
        %v2554 = vpack.c.b16 %v2270, %v2266
        %v2555 = vpack.c.b16 %v2271, %v2267
        %v2556 = vpack.c.b16 %v2272, %v2268
        %v2557 = vpack.c.b16 %v2277, %v2273
        %v2558 = vpack.c.b16 %v2278, %v2274
        %v2559 = vpack.c.b16 %v2279, %v2275
        %v2560 = vpack.c.b16 %v2280, %v2276
        %v2561 = vpack.c.b16 %v2285, %v2281
        %v2562 = vpack.c.b16 %v2286, %v2282
        %v2563 = vpack.c.b16 %v2287, %v2283
        %v2564 = vpack.c.b16 %v2288, %v2284
        %v2565 = vpack.c.b16 %v2293, %v2289
        %v2566 = vpack.c.b16 %v2294, %v2290
        %v2567 = vpack.c.b16 %v2295, %v2291
        %v2568 = vpack.c.b16 %v2296, %v2292
        %v2569 = vpack.c.b16 %v2301, %v2297
        %v2570 = vpack.c.b16 %v2302, %v2298
        %v2571 = vpack.c.b16 %v2303, %v2299
        %v2572 = vpack.c.b16 %v2304, %v2300
        %v2573 = vpack.c.b16 %v2309, %v2305
        %v2574 = vpack.c.b16 %v2310, %v2306
        %v2575 = vpack.c.b16 %v2311, %v2307
        %v2576 = vpack.c.b16 %v2312, %v2308
        %v2577 = vpack.c.b16 %v2317, %v2313
        %v2578 = vpack.c.b16 %v2318, %v2314
        %v2579 = vpack.c.b16 %v2319, %v2315
        %v2580 = vpack.c.b16 %v2320, %v2316
        %v2581 = vpack.c.b16 %v2325, %v2321
        %v2582 = vpack.c.b16 %v2326, %v2322
        %v2583 = vpack.c.b16 %v2327, %v2323
        %v2584 = vpack.c.b16 %v2328, %v2324
        %v2842 = vperm.slane %v1560, 0
        %v2843 = vperm.slane %v1560, 1
        %v2844 = vperm.slane %v1560, 2
        %v2845 = vperm.slane %v1560, 3
        %2850 = vmatpush.bf16.msra.mxu0 %v2357
        %2851 = vmatpush.bf16.msra.mxu0 %v2353
        %2852 = vmatpush.bf16.msra.mxu0 %v2349
        %2853 = vmatpush.bf16.msra.mxu0 %v2345
        %2854 = vmatpush.bf16.msra.mxu0 %v2341
        %2855 = vmatpush.bf16.msra.mxu0 %v2337
        %2856 = vmatpush.bf16.msra.mxu0 %v2333
        %2857 = vmatpush.bf16.msra.mxu0 %v2329
        %2858 = vmatmul.bf16.gmra.mxu0 %v1296
        %v2859 = vpop.f32.mrf.mxu0
        %v2860 = vadd.f32 %v2842, %v2859
        %v2861 = vpop.f32.mrf.mxu0
        %2862 = vdwg.mxu0
        %2863 = vmatpush.bf16.msra.mxu0 %v2389
        %2864 = vmatpush.bf16.msra.mxu0 %v2385
        %2865 = vmatpush.bf16.msra.mxu0 %v2381
        %2866 = vmatpush.bf16.msra.mxu0 %v2377
        %2867 = vmatpush.bf16.msra.mxu0 %v2373
        %2868 = vmatpush.bf16.msra.mxu0 %v2369
        %2869 = vmatpush.bf16.msra.mxu0 %v2365
        %2870 = vmatpush.bf16.msra.mxu0 %v2361
        %2871 = vmatmul.bf16.gmra.mxu0 %v1297
        %v2872 = vpop.f32.mrf.mxu0
        %v2873 = vadd.f32 %v2860, %v2872
        %v2874 = vpop.f32.mrf.mxu0
        %2875 = vdwg.mxu0
        %2876 = vmatpush.bf16.msra.mxu0 %v2421
        %2877 = vmatpush.bf16.msra.mxu0 %v2417
        %2878 = vmatpush.bf16.msra.mxu0 %v2413
        %2879 = vmatpush.bf16.msra.mxu0 %v2409
        %2880 = vmatpush.bf16.msra.mxu0 %v2405
        %2881 = vmatpush.bf16.msra.mxu0 %v2401
        %2882 = vmatpush.bf16.msra.mxu0 %v2397
        %2883 = vmatpush.bf16.msra.mxu0 %v2393
        %2884 = vmatmul.bf16.gmra.mxu0 %v1298
        %v2885 = vpop.f32.mrf.mxu0
        %v2886 = vadd.f32 %v2873, %v2885
        %v2887 = vpop.f32.mrf.mxu0
        %2888 = vdwg.mxu0
        %2889 = vmatpush.bf16.msra.mxu0 %v2453
        %2890 = vmatpush.bf16.msra.mxu0 %v2449
        %2891 = vmatpush.bf16.msra.mxu0 %v2445
        %2892 = vmatpush.bf16.msra.mxu0 %v2441
        %2893 = vmatpush.bf16.msra.mxu0 %v2437
        %2894 = vmatpush.bf16.msra.mxu0 %v2433
        %2895 = vmatpush.bf16.msra.mxu0 %v2429
        %2896 = vmatpush.bf16.msra.mxu0 %v2425
        %2897 = vmatmul.bf16.gmra.mxu0 %v1299
        %v2898 = vpop.f32.mrf.mxu0
        %v2899 = vadd.f32 %v2886, %v2898
        %v2900 = vpop.f32.mrf.mxu0
        %2901 = vdwg.mxu0
        %2902 = vmatpush.bf16.msra.mxu0 %v2485
        %2903 = vmatpush.bf16.msra.mxu0 %v2481
        %2904 = vmatpush.bf16.msra.mxu0 %v2477
        %2905 = vmatpush.bf16.msra.mxu0 %v2473
        %2906 = vmatpush.bf16.msra.mxu0 %v2469
        %2907 = vmatpush.bf16.msra.mxu0 %v2465
        %2908 = vmatpush.bf16.msra.mxu0 %v2461
        %2909 = vmatpush.bf16.msra.mxu0 %v2457
        %2910 = vmatmul.bf16.gmra.mxu0 %v1300
        %v2911 = vpop.f32.mrf.mxu0
        %v2912 = vadd.f32 %v2899, %v2911
        %v2913 = vpop.f32.mrf.mxu0
        %2914 = vdwg.mxu0
        %2915 = vmatpush.bf16.msra.mxu0 %v2517
        %2916 = vmatpush.bf16.msra.mxu0 %v2513
        %2917 = vmatpush.bf16.msra.mxu0 %v2509
        %2918 = vmatpush.bf16.msra.mxu0 %v2505
        %2919 = vmatpush.bf16.msra.mxu0 %v2501
        %2920 = vmatpush.bf16.msra.mxu0 %v2497
        %2921 = vmatpush.bf16.msra.mxu0 %v2493
        %2922 = vmatpush.bf16.msra.mxu0 %v2489
        %2923 = vmatmul.bf16.gmra.mxu0 %v1301
        %v2924 = vpop.f32.mrf.mxu0
        %v2925 = vadd.f32 %v2912, %v2924
        %v2926 = vpop.f32.mrf.mxu0
        %2927 = vdwg.mxu0
        %2928 = vmatpush.bf16.msra.mxu0 %v2549
        %2929 = vmatpush.bf16.msra.mxu0 %v2545
        %2930 = vmatpush.bf16.msra.mxu0 %v2541
        %2931 = vmatpush.bf16.msra.mxu0 %v2537
        %2932 = vmatpush.bf16.msra.mxu0 %v2533
        %2933 = vmatpush.bf16.msra.mxu0 %v2529
        %2934 = vmatpush.bf16.msra.mxu0 %v2525
        %2935 = vmatpush.bf16.msra.mxu0 %v2521
        %2936 = vmatmul.bf16.gmra.mxu0 %v1302
        %v2937 = vpop.f32.mrf.mxu0
        %v2938 = vadd.f32 %v2925, %v2937
        %v2939 = vpop.f32.mrf.mxu0
        %2940 = vdwg.mxu0
        %2941 = vmatpush.bf16.msra.mxu0 %v2581
        %2942 = vmatpush.bf16.msra.mxu0 %v2577
        %2943 = vmatpush.bf16.msra.mxu0 %v2573
        %2944 = vmatpush.bf16.msra.mxu0 %v2569
        %2945 = vmatpush.bf16.msra.mxu0 %v2565
        %2946 = vmatpush.bf16.msra.mxu0 %v2561
        %2947 = vmatpush.bf16.msra.mxu0 %v2557
        %2948 = vmatpush.bf16.msra.mxu0 %v2553
        %2949 = vmatmul.bf16.gmra.mxu0 %v1303
        %v2950 = vpop.f32.mrf.mxu0
        %v2951 = vadd.f32 %v2938, %v2950
        %v2952 = vpop.f32.mrf.mxu0
        %2953 = vdwg.mxu0
        %2954 = vmatpush.bf16.msra.mxu0 %v2358
        %2955 = vmatpush.bf16.msra.mxu0 %v2354
        %2956 = vmatpush.bf16.msra.mxu0 %v2350
        %2957 = vmatpush.bf16.msra.mxu0 %v2346
        %2958 = vmatpush.bf16.msra.mxu0 %v2342
        %2959 = vmatpush.bf16.msra.mxu0 %v2338
        %2960 = vmatpush.bf16.msra.mxu0 %v2334
        %2961 = vmatpush.bf16.msra.mxu0 %v2330
        %2962 = vmatmul.bf16.gmra.mxu0 %v1296
        %v2963 = vpop.f32.mrf.mxu0
        %v2964 = vadd.f32 %v2843, %v2963
        %v2965 = vpop.f32.mrf.mxu0
        %2966 = vdwg.mxu0
        %2967 = vmatpush.bf16.msra.mxu0 %v2390
        %2968 = vmatpush.bf16.msra.mxu0 %v2386
        %2969 = vmatpush.bf16.msra.mxu0 %v2382
        %2970 = vmatpush.bf16.msra.mxu0 %v2378
        %2971 = vmatpush.bf16.msra.mxu0 %v2374
        %2972 = vmatpush.bf16.msra.mxu0 %v2370
        %2973 = vmatpush.bf16.msra.mxu0 %v2366
        %2974 = vmatpush.bf16.msra.mxu0 %v2362
        %2975 = vmatmul.bf16.gmra.mxu0 %v1297
        %v2976 = vpop.f32.mrf.mxu0
        %v2977 = vadd.f32 %v2964, %v2976
        %v2978 = vpop.f32.mrf.mxu0
        %2979 = vdwg.mxu0
        %2980 = vmatpush.bf16.msra.mxu0 %v2422
        %2981 = vmatpush.bf16.msra.mxu0 %v2418
        %2982 = vmatpush.bf16.msra.mxu0 %v2414
        %2983 = vmatpush.bf16.msra.mxu0 %v2410
        %2984 = vmatpush.bf16.msra.mxu0 %v2406
        %2985 = vmatpush.bf16.msra.mxu0 %v2402
        %2986 = vmatpush.bf16.msra.mxu0 %v2398
        %2987 = vmatpush.bf16.msra.mxu0 %v2394
        %2988 = vmatmul.bf16.gmra.mxu0 %v1298
        %v2989 = vpop.f32.mrf.mxu0
        %v2990 = vadd.f32 %v2977, %v2989
        %v2991 = vpop.f32.mrf.mxu0
        %2992 = vdwg.mxu0
        %2993 = vmatpush.bf16.msra.mxu0 %v2454
        %2994 = vmatpush.bf16.msra.mxu0 %v2450
        %2995 = vmatpush.bf16.msra.mxu0 %v2446
        %2996 = vmatpush.bf16.msra.mxu0 %v2442
        %2997 = vmatpush.bf16.msra.mxu0 %v2438
        %2998 = vmatpush.bf16.msra.mxu0 %v2434
        %2999 = vmatpush.bf16.msra.mxu0 %v2430
        %3000 = vmatpush.bf16.msra.mxu0 %v2426
        %3001 = vmatmul.bf16.gmra.mxu0 %v1299
        %v3002 = vpop.f32.mrf.mxu0
        %v3003 = vadd.f32 %v2990, %v3002
        %v3004 = vpop.f32.mrf.mxu0
        %3005 = vdwg.mxu0
        %3006 = vmatpush.bf16.msra.mxu0 %v2486
        %3007 = vmatpush.bf16.msra.mxu0 %v2482
        %3008 = vmatpush.bf16.msra.mxu0 %v2478
        %3009 = vmatpush.bf16.msra.mxu0 %v2474
        %3010 = vmatpush.bf16.msra.mxu0 %v2470
        %3011 = vmatpush.bf16.msra.mxu0 %v2466
        %3012 = vmatpush.bf16.msra.mxu0 %v2462
        %3013 = vmatpush.bf16.msra.mxu0 %v2458
        %3014 = vmatmul.bf16.gmra.mxu0 %v1300
        %v3015 = vpop.f32.mrf.mxu0
        %v3016 = vadd.f32 %v3003, %v3015
        %v3017 = vpop.f32.mrf.mxu0
        %3018 = vdwg.mxu0
        %3019 = vmatpush.bf16.msra.mxu0 %v2518
        %3020 = vmatpush.bf16.msra.mxu0 %v2514
        %3021 = vmatpush.bf16.msra.mxu0 %v2510
        %3022 = vmatpush.bf16.msra.mxu0 %v2506
        %3023 = vmatpush.bf16.msra.mxu0 %v2502
        %3024 = vmatpush.bf16.msra.mxu0 %v2498
        %3025 = vmatpush.bf16.msra.mxu0 %v2494
        %3026 = vmatpush.bf16.msra.mxu0 %v2490
        %3027 = vmatmul.bf16.gmra.mxu0 %v1301
        %v3028 = vpop.f32.mrf.mxu0
        %v3029 = vadd.f32 %v3016, %v3028
        %v3030 = vpop.f32.mrf.mxu0
        %3031 = vdwg.mxu0
        %3032 = vmatpush.bf16.msra.mxu0 %v2550
        %3033 = vmatpush.bf16.msra.mxu0 %v2546
        %3034 = vmatpush.bf16.msra.mxu0 %v2542
        %3035 = vmatpush.bf16.msra.mxu0 %v2538
        %3036 = vmatpush.bf16.msra.mxu0 %v2534
        %3037 = vmatpush.bf16.msra.mxu0 %v2530
        %3038 = vmatpush.bf16.msra.mxu0 %v2526
        %3039 = vmatpush.bf16.msra.mxu0 %v2522
        %3040 = vmatmul.bf16.gmra.mxu0 %v1302
        %v3041 = vpop.f32.mrf.mxu0
        %v3042 = vadd.f32 %v3029, %v3041
        %v3043 = vpop.f32.mrf.mxu0
        %3044 = vdwg.mxu0
        %3045 = vmatpush.bf16.msra.mxu0 %v2582
        %3046 = vmatpush.bf16.msra.mxu0 %v2578
        %3047 = vmatpush.bf16.msra.mxu0 %v2574
        %3048 = vmatpush.bf16.msra.mxu0 %v2570
        %3049 = vmatpush.bf16.msra.mxu0 %v2566
        %3050 = vmatpush.bf16.msra.mxu0 %v2562
        %3051 = vmatpush.bf16.msra.mxu0 %v2558
        %3052 = vmatpush.bf16.msra.mxu0 %v2554
        %3053 = vmatmul.bf16.gmra.mxu0 %v1303
        %v3054 = vpop.f32.mrf.mxu0
        %v3055 = vadd.f32 %v3042, %v3054
        %v3056 = vpop.f32.mrf.mxu0
        %3057 = vdwg.mxu0
        %3058 = vmatpush.bf16.msra.mxu0 %v2359
        %3059 = vmatpush.bf16.msra.mxu0 %v2355
        %3060 = vmatpush.bf16.msra.mxu0 %v2351
        %3061 = vmatpush.bf16.msra.mxu0 %v2347
        %3062 = vmatpush.bf16.msra.mxu0 %v2343
        %3063 = vmatpush.bf16.msra.mxu0 %v2339
        %3064 = vmatpush.bf16.msra.mxu0 %v2335
        %3065 = vmatpush.bf16.msra.mxu0 %v2331
        %3066 = vmatmul.bf16.gmra.mxu0 %v1296
        %v3067 = vpop.f32.mrf.mxu0
        %v3068 = vadd.f32 %v2844, %v3067
        %v3069 = vpop.f32.mrf.mxu0
        %3070 = vdwg.mxu0
        %3071 = vmatpush.bf16.msra.mxu0 %v2391
        %3072 = vmatpush.bf16.msra.mxu0 %v2387
        %3073 = vmatpush.bf16.msra.mxu0 %v2383
        %3074 = vmatpush.bf16.msra.mxu0 %v2379
        %3075 = vmatpush.bf16.msra.mxu0 %v2375
        %3076 = vmatpush.bf16.msra.mxu0 %v2371
        %3077 = vmatpush.bf16.msra.mxu0 %v2367
        %3078 = vmatpush.bf16.msra.mxu0 %v2363
        %3079 = vmatmul.bf16.gmra.mxu0 %v1297
        %v3080 = vpop.f32.mrf.mxu0
        %v3081 = vadd.f32 %v3068, %v3080
        %v3082 = vpop.f32.mrf.mxu0
        %3083 = vdwg.mxu0
        %3084 = vmatpush.bf16.msra.mxu0 %v2423
        %3085 = vmatpush.bf16.msra.mxu0 %v2419
        %3086 = vmatpush.bf16.msra.mxu0 %v2415
        %3087 = vmatpush.bf16.msra.mxu0 %v2411
        %3088 = vmatpush.bf16.msra.mxu0 %v2407
        %3089 = vmatpush.bf16.msra.mxu0 %v2403
        %3090 = vmatpush.bf16.msra.mxu0 %v2399
        %3091 = vmatpush.bf16.msra.mxu0 %v2395
        %3092 = vmatmul.bf16.gmra.mxu0 %v1298
        %v3093 = vpop.f32.mrf.mxu0
        %v3094 = vadd.f32 %v3081, %v3093
        %v3095 = vpop.f32.mrf.mxu0
        %3096 = vdwg.mxu0
        %3097 = vmatpush.bf16.msra.mxu0 %v2455
        %3098 = vmatpush.bf16.msra.mxu0 %v2451
        %3099 = vmatpush.bf16.msra.mxu0 %v2447
        %3100 = vmatpush.bf16.msra.mxu0 %v2443
        %3101 = vmatpush.bf16.msra.mxu0 %v2439
        %3102 = vmatpush.bf16.msra.mxu0 %v2435
        %3103 = vmatpush.bf16.msra.mxu0 %v2431
        %3104 = vmatpush.bf16.msra.mxu0 %v2427
        %3105 = vmatmul.bf16.gmra.mxu0 %v1299
        %v3106 = vpop.f32.mrf.mxu0
        %v3107 = vadd.f32 %v3094, %v3106
        %v3108 = vpop.f32.mrf.mxu0
        %3109 = vdwg.mxu0
        %3110 = vmatpush.bf16.msra.mxu0 %v2487
        %3111 = vmatpush.bf16.msra.mxu0 %v2483
        %3112 = vmatpush.bf16.msra.mxu0 %v2479
        %3113 = vmatpush.bf16.msra.mxu0 %v2475
        %3114 = vmatpush.bf16.msra.mxu0 %v2471
        %3115 = vmatpush.bf16.msra.mxu0 %v2467
        %3116 = vmatpush.bf16.msra.mxu0 %v2463
        %3117 = vmatpush.bf16.msra.mxu0 %v2459
        %3118 = vmatmul.bf16.gmra.mxu0 %v1300
        %v3119 = vpop.f32.mrf.mxu0
        %v3120 = vadd.f32 %v3107, %v3119
        %v3121 = vpop.f32.mrf.mxu0
        %3122 = vdwg.mxu0
        %3123 = vmatpush.bf16.msra.mxu0 %v2519
        %3124 = vmatpush.bf16.msra.mxu0 %v2515
        %3125 = vmatpush.bf16.msra.mxu0 %v2511
        %3126 = vmatpush.bf16.msra.mxu0 %v2507
        %3127 = vmatpush.bf16.msra.mxu0 %v2503
        %3128 = vmatpush.bf16.msra.mxu0 %v2499
        %3129 = vmatpush.bf16.msra.mxu0 %v2495
        %3130 = vmatpush.bf16.msra.mxu0 %v2491
        %3131 = vmatmul.bf16.gmra.mxu0 %v1301
        %v3132 = vpop.f32.mrf.mxu0
        %v3133 = vadd.f32 %v3120, %v3132
        %v3134 = vpop.f32.mrf.mxu0
        %3135 = vdwg.mxu0
        %3136 = vmatpush.bf16.msra.mxu0 %v2551
        %3137 = vmatpush.bf16.msra.mxu0 %v2547
        %3138 = vmatpush.bf16.msra.mxu0 %v2543
        %3139 = vmatpush.bf16.msra.mxu0 %v2539
        %3140 = vmatpush.bf16.msra.mxu0 %v2535
        %3141 = vmatpush.bf16.msra.mxu0 %v2531
        %3142 = vmatpush.bf16.msra.mxu0 %v2527
        %3143 = vmatpush.bf16.msra.mxu0 %v2523
        %3144 = vmatmul.bf16.gmra.mxu0 %v1302
        %v3145 = vpop.f32.mrf.mxu0
        %v3146 = vadd.f32 %v3133, %v3145
        %v3147 = vpop.f32.mrf.mxu0
        %3148 = vdwg.mxu0
        %3149 = vmatpush.bf16.msra.mxu0 %v2583
        %3150 = vmatpush.bf16.msra.mxu0 %v2579
        %3151 = vmatpush.bf16.msra.mxu0 %v2575
        %3152 = vmatpush.bf16.msra.mxu0 %v2571
        %3153 = vmatpush.bf16.msra.mxu0 %v2567
        %3154 = vmatpush.bf16.msra.mxu0 %v2563
        %3155 = vmatpush.bf16.msra.mxu0 %v2559
        %3156 = vmatpush.bf16.msra.mxu0 %v2555
        %3157 = vmatmul.bf16.gmra.mxu0 %v1303
        %v3158 = vpop.f32.mrf.mxu0
        %v3159 = vadd.f32 %v3146, %v3158
        %v3160 = vpop.f32.mrf.mxu0
        %3161 = vdwg.mxu0
        %3162 = vmatpush.bf16.msra.mxu0 %v2360
        %3163 = vmatpush.bf16.msra.mxu0 %v2356
        %3164 = vmatpush.bf16.msra.mxu0 %v2352
        %3165 = vmatpush.bf16.msra.mxu0 %v2348
        %3166 = vmatpush.bf16.msra.mxu0 %v2344
        %3167 = vmatpush.bf16.msra.mxu0 %v2340
        %3168 = vmatpush.bf16.msra.mxu0 %v2336
        %3169 = vmatpush.bf16.msra.mxu0 %v2332
        %3170 = vmatmul.bf16.gmra.mxu0 %v1296
        %v3171 = vpop.f32.mrf.mxu0
        %v3172 = vadd.f32 %v2845, %v3171
        %v3173 = vpop.f32.mrf.mxu0
        %3174 = vdwg.mxu0
        %3175 = vmatpush.bf16.msra.mxu0 %v2392
        %3176 = vmatpush.bf16.msra.mxu0 %v2388
        %3177 = vmatpush.bf16.msra.mxu0 %v2384
        %3178 = vmatpush.bf16.msra.mxu0 %v2380
        %3179 = vmatpush.bf16.msra.mxu0 %v2376
        %3180 = vmatpush.bf16.msra.mxu0 %v2372
        %3181 = vmatpush.bf16.msra.mxu0 %v2368
        %3182 = vmatpush.bf16.msra.mxu0 %v2364
        %3183 = vmatmul.bf16.gmra.mxu0 %v1297
        %v3184 = vpop.f32.mrf.mxu0
        %v3185 = vadd.f32 %v3172, %v3184
        %v3186 = vpop.f32.mrf.mxu0
        %3187 = vdwg.mxu0
        %3188 = vmatpush.bf16.msra.mxu0 %v2424
        %3189 = vmatpush.bf16.msra.mxu0 %v2420
        %3190 = vmatpush.bf16.msra.mxu0 %v2416
        %3191 = vmatpush.bf16.msra.mxu0 %v2412
        %3192 = vmatpush.bf16.msra.mxu0 %v2408
        %3193 = vmatpush.bf16.msra.mxu0 %v2404
        %3194 = vmatpush.bf16.msra.mxu0 %v2400
        %3195 = vmatpush.bf16.msra.mxu0 %v2396
        %3196 = vmatmul.bf16.gmra.mxu0 %v1298
        %v3197 = vpop.f32.mrf.mxu0
        %v3198 = vadd.f32 %v3185, %v3197
        %v3199 = vpop.f32.mrf.mxu0
        %3200 = vdwg.mxu0
        %3201 = vmatpush.bf16.msra.mxu0 %v2456
        %3202 = vmatpush.bf16.msra.mxu0 %v2452
        %3203 = vmatpush.bf16.msra.mxu0 %v2448
        %3204 = vmatpush.bf16.msra.mxu0 %v2444
        %3205 = vmatpush.bf16.msra.mxu0 %v2440
        %3206 = vmatpush.bf16.msra.mxu0 %v2436
        %3207 = vmatpush.bf16.msra.mxu0 %v2432
        %3208 = vmatpush.bf16.msra.mxu0 %v2428
        %3209 = vmatmul.bf16.gmra.mxu0 %v1299
        %v3210 = vpop.f32.mrf.mxu0
        %v3211 = vadd.f32 %v3198, %v3210
        %v3212 = vpop.f32.mrf.mxu0
        %3213 = vdwg.mxu0
        %3214 = vmatpush.bf16.msra.mxu0 %v2488
        %3215 = vmatpush.bf16.msra.mxu0 %v2484
        %3216 = vmatpush.bf16.msra.mxu0 %v2480
        %3217 = vmatpush.bf16.msra.mxu0 %v2476
        %3218 = vmatpush.bf16.msra.mxu0 %v2472
        %3219 = vmatpush.bf16.msra.mxu0 %v2468
        %3220 = vmatpush.bf16.msra.mxu0 %v2464
        %3221 = vmatpush.bf16.msra.mxu0 %v2460
        %3222 = vmatmul.bf16.gmra.mxu0 %v1300
        %v3223 = vpop.f32.mrf.mxu0
        %v3224 = vadd.f32 %v3211, %v3223
        %v3225 = vpop.f32.mrf.mxu0
        %3226 = vdwg.mxu0
        %3227 = vmatpush.bf16.msra.mxu0 %v2520
        %3228 = vmatpush.bf16.msra.mxu0 %v2516
        %3229 = vmatpush.bf16.msra.mxu0 %v2512
        %3230 = vmatpush.bf16.msra.mxu0 %v2508
        %3231 = vmatpush.bf16.msra.mxu0 %v2504
        %3232 = vmatpush.bf16.msra.mxu0 %v2500
        %3233 = vmatpush.bf16.msra.mxu0 %v2496
        %3234 = vmatpush.bf16.msra.mxu0 %v2492
        %3235 = vmatmul.bf16.gmra.mxu0 %v1301
        %v3236 = vpop.f32.mrf.mxu0
        %v3237 = vadd.f32 %v3224, %v3236
        %v3238 = vpop.f32.mrf.mxu0
        %3239 = vdwg.mxu0
        %3240 = vmatpush.bf16.msra.mxu0 %v2552
        %3241 = vmatpush.bf16.msra.mxu0 %v2548
        %3242 = vmatpush.bf16.msra.mxu0 %v2544
        %3243 = vmatpush.bf16.msra.mxu0 %v2540
        %3244 = vmatpush.bf16.msra.mxu0 %v2536
        %3245 = vmatpush.bf16.msra.mxu0 %v2532
        %3246 = vmatpush.bf16.msra.mxu0 %v2528
        %3247 = vmatpush.bf16.msra.mxu0 %v2524
        %3248 = vmatmul.bf16.gmra.mxu0 %v1302
        %v3249 = vpop.f32.mrf.mxu0
        %v3250 = vadd.f32 %v3237, %v3249
        %v3251 = vpop.f32.mrf.mxu0
        %3252 = vdwg.mxu0
        %3253 = vmatpush.bf16.msra.mxu0 %v2584
        %3254 = vmatpush.bf16.msra.mxu0 %v2580
        %3255 = vmatpush.bf16.msra.mxu0 %v2576
        %3256 = vmatpush.bf16.msra.mxu0 %v2572
        %3257 = vmatpush.bf16.msra.mxu0 %v2568
        %3258 = vmatpush.bf16.msra.mxu0 %v2564
        %3259 = vmatpush.bf16.msra.mxu0 %v2560
        %3260 = vmatpush.bf16.msra.mxu0 %v2556
        %3261 = vmatmul.bf16.gmra.mxu0 %v1303
        %v3262 = vpop.f32.mrf.mxu0
        %v3263 = vadd.f32 %v3250, %v3262
        %v3264 = vpop.f32.mrf.mxu0
        %3265 = vdwg.mxu0
        %v3266 = vmax.f32 %v2951, 0.0
        %v3267 = vmax.f32 %v3055, 0.0
        %v3268 = vmax.f32 %v3159, 0.0
        %v3269 = vmax.f32 %v3263, 0.0
        %v3270 = vpack.c.bf16 %v3266, %v3266
        %v3271 = vpack.c.bf16 %v3267, %v3267
        %v3272 = vpack.c.bf16 %v3268, %v3268
        %v3273 = vpack.c.bf16 %v3269, %v3269
        %v3274 = vld [vmem:[%s9] sm:$0xff]
        %v3275 = vld [vmem:[%s9 + $0x8] sm:$0xff]
        %v3276 = vld [vmem:[%s9 + $0x10] sm:$0xff]
        %v3277 = vld [vmem:[%s9 + $0x18] sm:$0xff]
        %v3278 = vld [vmem:[%s9 + $0x20] sm:$0xff]
        %v3279 = vld [vmem:[%s9 + $0x28] sm:$0xff]
        %v3280 = vld [vmem:[%s9 + $0x30] sm:$0xff]
        %v3281 = vld [vmem:[%s9 + $0x38] sm:$0xff]
        %v3282 = vld [vmem:[%s9 + $0x40] sm:$0xff]
        %v3283 = vld [vmem:[%s9 + $0x48] sm:$0xff]
        %v3284 = vld [vmem:[%s9 + $0x50] sm:$0xff]
        %v3285 = vld [vmem:[%s9 + $0x58] sm:$0xff]
        %v3286 = vld [vmem:[%s9 + $0x60] sm:$0xff]
        %v3287 = vld [vmem:[%s9 + $0x68] sm:$0xff]
        %v3288 = vld [vmem:[%s9 + $0x70] sm:$0xff]
        %v3289 = vld [vmem:[%s9 + $0x78] sm:$0xff]
        %v3290 = vld [vmem:[%s9 + $0x80] sm:$0xff]
        %v3291 = vld [vmem:[%s9 + $0x88] sm:$0xff]
        %v3292 = vld [vmem:[%s9 + $0x90] sm:$0xff]
        %v3293 = vld [vmem:[%s9 + $0x98] sm:$0xff]
        %v3294 = vld [vmem:[%s9 + $0xa0] sm:$0xff]
        %v3295 = vld [vmem:[%s9 + $0xa8] sm:$0xff]
        %v3296 = vld [vmem:[%s9 + $0xb0] sm:$0xff]
        %v3297 = vld [vmem:[%s9 + $0xb8] sm:$0xff]
        %v3298 = vld [vmem:[%s9 + $0xc0] sm:$0xff]
        %v3299 = vld [vmem:[%s9 + $0xc8] sm:$0xff]
        %v3300 = vld [vmem:[%s9 + $0xd0] sm:$0xff]
        %v3301 = vld [vmem:[%s9 + $0xd8] sm:$0xff]
        %v3302 = vld [vmem:[%s9 + $0xe0] sm:$0xff]
        %v3303 = vld [vmem:[%s9 + $0xe8] sm:$0xff]
        %v3304 = vld [vmem:[%s9 + $0xf0] sm:$0xff]
        %v3305 = vld [vmem:[%s9 + $0xf8] sm:$0xff]
        %v3306 = vld [vmem:[%s9 + $0x100] sm:$0xff]
        %v3307 = vld [vmem:[%s9 + $0x108] sm:$0xff]
        %v3308 = vld [vmem:[%s9 + $0x110] sm:$0xff]
        %v3309 = vld [vmem:[%s9 + $0x118] sm:$0xff]
        %v3310 = vld [vmem:[%s9 + $0x120] sm:$0xff]
        %v3311 = vld [vmem:[%s9 + $0x128] sm:$0xff]
        %v3312 = vld [vmem:[%s9 + $0x130] sm:$0xff]
        %v3313 = vld [vmem:[%s9 + $0x138] sm:$0xff]
        %v3314 = vld [vmem:[%s9 + $0x140] sm:$0xff]
        %v3315 = vld [vmem:[%s9 + $0x148] sm:$0xff]
        %v3316 = vld [vmem:[%s9 + $0x150] sm:$0xff]
        %v3317 = vld [vmem:[%s9 + $0x158] sm:$0xff]
        %v3318 = vld [vmem:[%s9 + $0x160] sm:$0xff]
        %v3319 = vld [vmem:[%s9 + $0x168] sm:$0xff]
        %v3320 = vld [vmem:[%s9 + $0x170] sm:$0xff]
        %v3321 = vld [vmem:[%s9 + $0x178] sm:$0xff]
        %v3322 = vld [vmem:[%s9 + $0x180] sm:$0xff]
        %v3323 = vld [vmem:[%s9 + $0x188] sm:$0xff]
        %v3324 = vld [vmem:[%s9 + $0x190] sm:$0xff]
        %v3325 = vld [vmem:[%s9 + $0x198] sm:$0xff]
        %v3326 = vld [vmem:[%s9 + $0x1a0] sm:$0xff]
        %v3327 = vld [vmem:[%s9 + $0x1a8] sm:$0xff]
        %v3328 = vld [vmem:[%s9 + $0x1b0] sm:$0xff]
        %v3329 = vld [vmem:[%s9 + $0x1b8] sm:$0xff]
        %v3330 = vld [vmem:[%s9 + $0x1c0] sm:$0xff]
        %v3331 = vld [vmem:[%s9 + $0x1c8] sm:$0xff]
        %v3332 = vld [vmem:[%s9 + $0x1d0] sm:$0xff]
        %v3333 = vld [vmem:[%s9 + $0x1d8] sm:$0xff]
        %v3334 = vld [vmem:[%s9 + $0x1e0] sm:$0xff]
        %v3335 = vld [vmem:[%s9 + $0x1e8] sm:$0xff]
        %v3336 = vld [vmem:[%s9 + $0x1f0] sm:$0xff]
        %v3337 = vld [vmem:[%s9 + $0x1f8] sm:$0xff]
        %v3338 = vld [vmem:[%s10] sm:$0x3]
        %v3403 = vunpack.c.l.b16 %v3274
        %v3404 = vunpack.c.h.b16 %v3274
        %v3405 = vunpack.c.l.b16 %v3275
        %v3406 = vunpack.c.h.b16 %v3275
        %v3407 = vunpack.c.l.b16 %v3276
        %v3408 = vunpack.c.h.b16 %v3276
        %v3409 = vunpack.c.l.b16 %v3277
        %v3410 = vunpack.c.h.b16 %v3277
        %v3411 = vunpack.c.l.b16 %v3278
        %v3412 = vunpack.c.h.b16 %v3278
        %v3413 = vunpack.c.l.b16 %v3279
        %v3414 = vunpack.c.h.b16 %v3279
        %v3415 = vunpack.c.l.b16 %v3280
        %v3416 = vunpack.c.h.b16 %v3280
        %v3417 = vunpack.c.l.b16 %v3281
        %v3418 = vunpack.c.h.b16 %v3281
        %v3419 = vunpack.c.l.b16 %v3282
        %v3420 = vunpack.c.h.b16 %v3282
        %v3421 = vunpack.c.l.b16 %v3283
        %v3422 = vunpack.c.h.b16 %v3283
        %v3423 = vunpack.c.l.b16 %v3284
        %v3424 = vunpack.c.h.b16 %v3284
        %v3425 = vunpack.c.l.b16 %v3285
        %v3426 = vunpack.c.h.b16 %v3285
        %v3427 = vunpack.c.l.b16 %v3286
        %v3428 = vunpack.c.h.b16 %v3286
        %v3429 = vunpack.c.l.b16 %v3287
        %v3430 = vunpack.c.h.b16 %v3287
        %v3431 = vunpack.c.l.b16 %v3288
        %v3432 = vunpack.c.h.b16 %v3288
        %v3433 = vunpack.c.l.b16 %v3289
        %v3434 = vunpack.c.h.b16 %v3289
        %v3435 = vunpack.c.l.b16 %v3290
        %v3436 = vunpack.c.h.b16 %v3290
        %v3437 = vunpack.c.l.b16 %v3291
        %v3438 = vunpack.c.h.b16 %v3291
        %v3439 = vunpack.c.l.b16 %v3292
        %v3440 = vunpack.c.h.b16 %v3292
        %v3441 = vunpack.c.l.b16 %v3293
        %v3442 = vunpack.c.h.b16 %v3293
        %v3443 = vunpack.c.l.b16 %v3294
        %v3444 = vunpack.c.h.b16 %v3294
        %v3445 = vunpack.c.l.b16 %v3295
        %v3446 = vunpack.c.h.b16 %v3295
        %v3447 = vunpack.c.l.b16 %v3296
        %v3448 = vunpack.c.h.b16 %v3296
        %v3449 = vunpack.c.l.b16 %v3297
        %v3450 = vunpack.c.h.b16 %v3297
        %v3451 = vunpack.c.l.b16 %v3298
        %v3452 = vunpack.c.h.b16 %v3298
        %v3453 = vunpack.c.l.b16 %v3299
        %v3454 = vunpack.c.h.b16 %v3299
        %v3455 = vunpack.c.l.b16 %v3300
        %v3456 = vunpack.c.h.b16 %v3300
        %v3457 = vunpack.c.l.b16 %v3301
        %v3458 = vunpack.c.h.b16 %v3301
        %v3459 = vunpack.c.l.b16 %v3302
        %v3460 = vunpack.c.h.b16 %v3302
        %v3461 = vunpack.c.l.b16 %v3303
        %v3462 = vunpack.c.h.b16 %v3303
        %v3463 = vunpack.c.l.b16 %v3304
        %v3464 = vunpack.c.h.b16 %v3304
        %v3465 = vunpack.c.l.b16 %v3305
        %v3466 = vunpack.c.h.b16 %v3305
        %v3467 = vunpack.c.l.b16 %v3306
        %v3468 = vunpack.c.h.b16 %v3306
        %v3469 = vunpack.c.l.b16 %v3307
        %v3470 = vunpack.c.h.b16 %v3307
        %v3471 = vunpack.c.l.b16 %v3308
        %v3472 = vunpack.c.h.b16 %v3308
        %v3473 = vunpack.c.l.b16 %v3309
        %v3474 = vunpack.c.h.b16 %v3309
        %v3475 = vunpack.c.l.b16 %v3310
        %v3476 = vunpack.c.h.b16 %v3310
        %v3477 = vunpack.c.l.b16 %v3311
        %v3478 = vunpack.c.h.b16 %v3311
        %v3479 = vunpack.c.l.b16 %v3312
        %v3480 = vunpack.c.h.b16 %v3312
        %v3481 = vunpack.c.l.b16 %v3313
        %v3482 = vunpack.c.h.b16 %v3313
        %v3483 = vunpack.c.l.b16 %v3314
        %v3484 = vunpack.c.h.b16 %v3314
        %v3485 = vunpack.c.l.b16 %v3315
        %v3486 = vunpack.c.h.b16 %v3315
        %v3487 = vunpack.c.l.b16 %v3316
        %v3488 = vunpack.c.h.b16 %v3316
        %v3489 = vunpack.c.l.b16 %v3317
        %v3490 = vunpack.c.h.b16 %v3317
        %v3491 = vunpack.c.l.b16 %v3318
        %v3492 = vunpack.c.h.b16 %v3318
        %v3493 = vunpack.c.l.b16 %v3319
        %v3494 = vunpack.c.h.b16 %v3319
        %v3495 = vunpack.c.l.b16 %v3320
        %v3496 = vunpack.c.h.b16 %v3320
        %v3497 = vunpack.c.l.b16 %v3321
        %v3498 = vunpack.c.h.b16 %v3321
        %v3499 = vunpack.c.l.b16 %v3322
        %v3500 = vunpack.c.h.b16 %v3322
        %v3501 = vunpack.c.l.b16 %v3323
        %v3502 = vunpack.c.h.b16 %v3323
        %v3503 = vunpack.c.l.b16 %v3324
        %v3504 = vunpack.c.h.b16 %v3324
        %v3505 = vunpack.c.l.b16 %v3325
        %v3506 = vunpack.c.h.b16 %v3325
        %v3507 = vunpack.c.l.b16 %v3326
        %v3508 = vunpack.c.h.b16 %v3326
        %v3509 = vunpack.c.l.b16 %v3327
        %v3510 = vunpack.c.h.b16 %v3327
        %v3511 = vunpack.c.l.b16 %v3328
        %v3512 = vunpack.c.h.b16 %v3328
        %v3513 = vunpack.c.l.b16 %v3329
        %v3514 = vunpack.c.h.b16 %v3329
        %v3515 = vunpack.c.l.b16 %v3330
        %v3516 = vunpack.c.h.b16 %v3330
        %v3517 = vunpack.c.l.b16 %v3331
        %v3518 = vunpack.c.h.b16 %v3331
        %v3519 = vunpack.c.l.b16 %v3332
        %v3520 = vunpack.c.h.b16 %v3332
        %v3521 = vunpack.c.l.b16 %v3333
        %v3522 = vunpack.c.h.b16 %v3333
        %v3523 = vunpack.c.l.b16 %v3334
        %v3524 = vunpack.c.h.b16 %v3334
        %v3525 = vunpack.c.l.b16 %v3335
        %v3526 = vunpack.c.h.b16 %v3335
        %v3527 = vunpack.c.l.b16 %v3336
        %v3528 = vunpack.c.h.b16 %v3336
        %v3529 = vunpack.c.l.b16 %v3337
        %v3530 = vunpack.c.h.b16 %v3337
        %v3531 = vpack.c.b16 %v3405, %v3403
        %v3532 = vpack.c.b16 %v3406, %v3404
        %v3533 = vpack.c.b16 %v3409, %v3407
        %v3534 = vpack.c.b16 %v3410, %v3408
        %v3535 = vpack.c.b16 %v3413, %v3411
        %v3536 = vpack.c.b16 %v3414, %v3412
        %v3537 = vpack.c.b16 %v3417, %v3415
        %v3538 = vpack.c.b16 %v3418, %v3416
        %v3539 = vpack.c.b16 %v3421, %v3419
        %v3540 = vpack.c.b16 %v3422, %v3420
        %v3541 = vpack.c.b16 %v3425, %v3423
        %v3542 = vpack.c.b16 %v3426, %v3424
        %v3543 = vpack.c.b16 %v3429, %v3427
        %v3544 = vpack.c.b16 %v3430, %v3428
        %v3545 = vpack.c.b16 %v3433, %v3431
        %v3546 = vpack.c.b16 %v3434, %v3432
        %v3547 = vpack.c.b16 %v3437, %v3435
        %v3548 = vpack.c.b16 %v3438, %v3436
        %v3549 = vpack.c.b16 %v3441, %v3439
        %v3550 = vpack.c.b16 %v3442, %v3440
        %v3551 = vpack.c.b16 %v3445, %v3443
        %v3552 = vpack.c.b16 %v3446, %v3444
        %v3553 = vpack.c.b16 %v3449, %v3447
        %v3554 = vpack.c.b16 %v3450, %v3448
        %v3555 = vpack.c.b16 %v3453, %v3451
        %v3556 = vpack.c.b16 %v3454, %v3452
        %v3557 = vpack.c.b16 %v3457, %v3455
        %v3558 = vpack.c.b16 %v3458, %v3456
        %v3559 = vpack.c.b16 %v3461, %v3459
        %v3560 = vpack.c.b16 %v3462, %v3460
        %v3561 = vpack.c.b16 %v3465, %v3463
        %v3562 = vpack.c.b16 %v3466, %v3464
        %v3563 = vpack.c.b16 %v3469, %v3467
        %v3564 = vpack.c.b16 %v3470, %v3468
        %v3565 = vpack.c.b16 %v3473, %v3471
        %v3566 = vpack.c.b16 %v3474, %v3472
        %v3567 = vpack.c.b16 %v3477, %v3475
        %v3568 = vpack.c.b16 %v3478, %v3476
        %v3569 = vpack.c.b16 %v3481, %v3479
        %v3570 = vpack.c.b16 %v3482, %v3480
        %v3571 = vpack.c.b16 %v3485, %v3483
        %v3572 = vpack.c.b16 %v3486, %v3484
        %v3573 = vpack.c.b16 %v3489, %v3487
        %v3574 = vpack.c.b16 %v3490, %v3488
        %v3575 = vpack.c.b16 %v3493, %v3491
        %v3576 = vpack.c.b16 %v3494, %v3492
        %v3577 = vpack.c.b16 %v3497, %v3495
        %v3578 = vpack.c.b16 %v3498, %v3496
        %v3579 = vpack.c.b16 %v3501, %v3499
        %v3580 = vpack.c.b16 %v3502, %v3500
        %v3581 = vpack.c.b16 %v3505, %v3503
        %v3582 = vpack.c.b16 %v3506, %v3504
        %v3583 = vpack.c.b16 %v3509, %v3507
        %v3584 = vpack.c.b16 %v3510, %v3508
        %v3585 = vpack.c.b16 %v3513, %v3511
        %v3586 = vpack.c.b16 %v3514, %v3512
        %v3587 = vpack.c.b16 %v3517, %v3515
        %v3588 = vpack.c.b16 %v3518, %v3516
        %v3589 = vpack.c.b16 %v3521, %v3519
        %v3590 = vpack.c.b16 %v3522, %v3520
        %v3591 = vpack.c.b16 %v3525, %v3523
        %v3592 = vpack.c.b16 %v3526, %v3524
        %v3593 = vpack.c.b16 %v3529, %v3527
        %v3594 = vpack.c.b16 %v3530, %v3528
        %v3660 = vperm.slane %v3338, 0
        %v3661 = vperm.slane %v3338, 1
        %3664 = vmatpush.bf16.msra.mxu0 %v3545
        %3665 = vmatpush.bf16.msra.mxu0 %v3543
        %3666 = vmatpush.bf16.msra.mxu0 %v3541
        %3667 = vmatpush.bf16.msra.mxu0 %v3539
        %3668 = vmatpush.bf16.msra.mxu0 %v3537
        %3669 = vmatpush.bf16.msra.mxu0 %v3535
        %3670 = vmatpush.bf16.msra.mxu0 %v3533
        %3671 = vmatpush.bf16.msra.mxu0 %v3531
        %3672 = vmatmul.bf16.gmra.mxu0 %v3270
        %v3673 = vpop.f32.mrf.mxu0
        %v3674 = vadd.f32 %v3660, %v3673
        %v3675 = vpop.f32.mrf.mxu0
        %3676 = vdwg.mxu0
        %3677 = vmatpush.bf16.msra.mxu0 %v3561
        %3678 = vmatpush.bf16.msra.mxu0 %v3559
        %3679 = vmatpush.bf16.msra.mxu0 %v3557
        %3680 = vmatpush.bf16.msra.mxu0 %v3555
        %3681 = vmatpush.bf16.msra.mxu0 %v3553
        %3682 = vmatpush.bf16.msra.mxu0 %v3551
        %3683 = vmatpush.bf16.msra.mxu0 %v3549
        %3684 = vmatpush.bf16.msra.mxu0 %v3547
        %3685 = vmatmul.bf16.gmra.mxu0 %v3271
        %v3686 = vpop.f32.mrf.mxu0
        %v3687 = vadd.f32 %v3674, %v3686
        %v3688 = vpop.f32.mrf.mxu0
        %3689 = vdwg.mxu0
        %3690 = vmatpush.bf16.msra.mxu0 %v3577
        %3691 = vmatpush.bf16.msra.mxu0 %v3575
        %3692 = vmatpush.bf16.msra.mxu0 %v3573
        %3693 = vmatpush.bf16.msra.mxu0 %v3571
        %3694 = vmatpush.bf16.msra.mxu0 %v3569
        %3695 = vmatpush.bf16.msra.mxu0 %v3567
        %3696 = vmatpush.bf16.msra.mxu0 %v3565
        %3697 = vmatpush.bf16.msra.mxu0 %v3563
        %3698 = vmatmul.bf16.gmra.mxu0 %v3272
        %v3699 = vpop.f32.mrf.mxu0
        %v3700 = vadd.f32 %v3687, %v3699
        %v3701 = vpop.f32.mrf.mxu0
        %3702 = vdwg.mxu0
        %3703 = vmatpush.bf16.msra.mxu0 %v3593
        %3704 = vmatpush.bf16.msra.mxu0 %v3591
        %3705 = vmatpush.bf16.msra.mxu0 %v3589
        %3706 = vmatpush.bf16.msra.mxu0 %v3587
        %3707 = vmatpush.bf16.msra.mxu0 %v3585
        %3708 = vmatpush.bf16.msra.mxu0 %v3583
        %3709 = vmatpush.bf16.msra.mxu0 %v3581
        %3710 = vmatpush.bf16.msra.mxu0 %v3579
        %3711 = vmatmul.bf16.gmra.mxu0 %v3273
        %v3712 = vpop.f32.mrf.mxu0
        %v3713 = vadd.f32 %v3700, %v3712
        %v3714 = vpop.f32.mrf.mxu0
        %3715 = vdwg.mxu0
        %3716 = vmatpush.bf16.msra.mxu0 %v3546
        %3717 = vmatpush.bf16.msra.mxu0 %v3544
        %3718 = vmatpush.bf16.msra.mxu0 %v3542
        %3719 = vmatpush.bf16.msra.mxu0 %v3540
        %3720 = vmatpush.bf16.msra.mxu0 %v3538
        %3721 = vmatpush.bf16.msra.mxu0 %v3536
        %3722 = vmatpush.bf16.msra.mxu0 %v3534
        %3723 = vmatpush.bf16.msra.mxu0 %v3532
        %3724 = vmatmul.bf16.gmra.mxu0 %v3270
        %v3725 = vpop.f32.mrf.mxu0
        %v3726 = vadd.f32 %v3661, %v3725
        %v3727 = vpop.f32.mrf.mxu0
        %3728 = vdwg.mxu0
        %3729 = vmatpush.bf16.msra.mxu0 %v3562
        %3730 = vmatpush.bf16.msra.mxu0 %v3560
        %3731 = vmatpush.bf16.msra.mxu0 %v3558
        %3732 = vmatpush.bf16.msra.mxu0 %v3556
        %3733 = vmatpush.bf16.msra.mxu0 %v3554
        %3734 = vmatpush.bf16.msra.mxu0 %v3552
        %3735 = vmatpush.bf16.msra.mxu0 %v3550
        %3736 = vmatpush.bf16.msra.mxu0 %v3548
        %3737 = vmatmul.bf16.gmra.mxu0 %v3271
        %v3738 = vpop.f32.mrf.mxu0
        %v3739 = vadd.f32 %v3726, %v3738
        %v3740 = vpop.f32.mrf.mxu0
        %3741 = vdwg.mxu0
        %3742 = vmatpush.bf16.msra.mxu0 %v3578
        %3743 = vmatpush.bf16.msra.mxu0 %v3576
        %3744 = vmatpush.bf16.msra.mxu0 %v3574
        %3745 = vmatpush.bf16.msra.mxu0 %v3572
        %3746 = vmatpush.bf16.msra.mxu0 %v3570
        %3747 = vmatpush.bf16.msra.mxu0 %v3568
        %3748 = vmatpush.bf16.msra.mxu0 %v3566
        %3749 = vmatpush.bf16.msra.mxu0 %v3564
        %3750 = vmatmul.bf16.gmra.mxu0 %v3272
        %v3751 = vpop.f32.mrf.mxu0
        %v3752 = vadd.f32 %v3739, %v3751
        %v3753 = vpop.f32.mrf.mxu0
        %3754 = vdwg.mxu0
        %3755 = vmatpush.bf16.msra.mxu0 %v3594
        %3756 = vmatpush.bf16.msra.mxu0 %v3592
        %3757 = vmatpush.bf16.msra.mxu0 %v3590
        %3758 = vmatpush.bf16.msra.mxu0 %v3588
        %3759 = vmatpush.bf16.msra.mxu0 %v3586
        %3760 = vmatpush.bf16.msra.mxu0 %v3584
        %3761 = vmatpush.bf16.msra.mxu0 %v3582
        %3762 = vmatpush.bf16.msra.mxu0 %v3580
        %3763 = vmatmul.bf16.gmra.mxu0 %v3273
        %v3764 = vpop.f32.mrf.mxu0
        %v3765 = vadd.f32 %v3752, %v3764
        %v3766 = vpop.f32.mrf.mxu0
        %3767 = vdwg.mxu0
        %v3768 = vmax.f32 %v3713, 0.0
        %v3769 = vmax.f32 %v3765, 0.0
        %v3770 = vpack.c.bf16 %v3768, %v3768
        %v3771 = vpack.c.bf16 %v3769, %v3769
        %v3772 = vld [vmem:[%s11] sm:$0xf]
        %v3773 = vld [vmem:[%s11 + $0x4] sm:$0xf]
        %v3774 = vld [vmem:[%s11 + $0x8] sm:$0xf]
        %v3775 = vld [vmem:[%s11 + $0xc] sm:$0xf]
        %v3776 = vld [vmem:[%s11 + $0x10] sm:$0xf]
        %v3777 = vld [vmem:[%s11 + $0x14] sm:$0xf]
        %v3778 = vld [vmem:[%s11 + $0x18] sm:$0xf]
        %v3779 = vld [vmem:[%s11 + $0x1c] sm:$0xf]
        %v3780 = vld [vmem:[%s11 + $0x20] sm:$0xf]
        %v3781 = vld [vmem:[%s11 + $0x24] sm:$0xf]
        %v3782 = vld [vmem:[%s11 + $0x28] sm:$0xf]
        %v3783 = vld [vmem:[%s11 + $0x2c] sm:$0xf]
        %v3784 = vld [vmem:[%s11 + $0x30] sm:$0xf]
        %v3785 = vld [vmem:[%s11 + $0x34] sm:$0xf]
        %v3786 = vld [vmem:[%s11 + $0x38] sm:$0xf]
        %v3787 = vld [vmem:[%s11 + $0x3c] sm:$0xf]
        %v3788 = vld [vmem:[%s11 + $0x40] sm:$0xf]
        %v3789 = vld [vmem:[%s11 + $0x44] sm:$0xf]
        %v3790 = vld [vmem:[%s11 + $0x48] sm:$0xf]
        %v3791 = vld [vmem:[%s11 + $0x4c] sm:$0xf]
        %v3792 = vld [vmem:[%s11 + $0x50] sm:$0xf]
        %v3793 = vld [vmem:[%s11 + $0x54] sm:$0xf]
        %v3794 = vld [vmem:[%s11 + $0x58] sm:$0xf]
        %v3795 = vld [vmem:[%s11 + $0x5c] sm:$0xf]
        %v3796 = vld [vmem:[%s11 + $0x60] sm:$0xf]
        %v3797 = vld [vmem:[%s11 + $0x64] sm:$0xf]
        %v3798 = vld [vmem:[%s11 + $0x68] sm:$0xf]
        %v3799 = vld [vmem:[%s11 + $0x6c] sm:$0xf]
        %v3800 = vld [vmem:[%s11 + $0x70] sm:$0xf]
        %v3801 = vld [vmem:[%s11 + $0x74] sm:$0xf]
        %v3802 = vld [vmem:[%s11 + $0x78] sm:$0xf]
        %v3803 = vld [vmem:[%s11 + $0x7c] sm:$0xf]
        %v3804 = vld [vmem:[%s12] sm:$0x1]
        %v3837 = vunpack.c.l.b16 %v3772
        %v3838 = vunpack.c.l.b16 %v3773
        %v3839 = vunpack.c.l.b16 %v3774
        %v3840 = vunpack.c.l.b16 %v3775
        %v3841 = vunpack.c.l.b16 %v3776
        %v3842 = vunpack.c.l.b16 %v3777
        %v3843 = vunpack.c.l.b16 %v3778
        %v3844 = vunpack.c.l.b16 %v3779
        %v3845 = vunpack.c.l.b16 %v3780
        %v3846 = vunpack.c.l.b16 %v3781
        %v3847 = vunpack.c.l.b16 %v3782
        %v3848 = vunpack.c.l.b16 %v3783
        %v3849 = vunpack.c.l.b16 %v3784
        %v3850 = vunpack.c.l.b16 %v3785
        %v3851 = vunpack.c.l.b16 %v3786
        %v3852 = vunpack.c.l.b16 %v3787
        %v3853 = vunpack.c.l.b16 %v3788
        %v3854 = vunpack.c.l.b16 %v3789
        %v3855 = vunpack.c.l.b16 %v3790
        %v3856 = vunpack.c.l.b16 %v3791
        %v3857 = vunpack.c.l.b16 %v3792
        %v3858 = vunpack.c.l.b16 %v3793
        %v3859 = vunpack.c.l.b16 %v3794
        %v3860 = vunpack.c.l.b16 %v3795
        %v3861 = vunpack.c.l.b16 %v3796
        %v3862 = vunpack.c.l.b16 %v3797
        %v3863 = vunpack.c.l.b16 %v3798
        %v3864 = vunpack.c.l.b16 %v3799
        %v3865 = vunpack.c.l.b16 %v3800
        %v3866 = vunpack.c.l.b16 %v3801
        %v3867 = vunpack.c.l.b16 %v3802
        %v3868 = vunpack.c.l.b16 %v3803
        %v3869 = vpack.c.b16 %v3838, %v3837
        %v3870 = vpack.c.b16 %v3840, %v3839
        %v3871 = vpack.c.b16 %v3842, %v3841
        %v3872 = vpack.c.b16 %v3844, %v3843
        %v3873 = vpack.c.b16 %v3846, %v3845
        %v3874 = vpack.c.b16 %v3848, %v3847
        %v3875 = vpack.c.b16 %v3850, %v3849
        %v3876 = vpack.c.b16 %v3852, %v3851
        %v3877 = vpack.c.b16 %v3854, %v3853
        %v3878 = vpack.c.b16 %v3856, %v3855
        %v3879 = vpack.c.b16 %v3858, %v3857
        %v3880 = vpack.c.b16 %v3860, %v3859
        %v3881 = vpack.c.b16 %v3862, %v3861
        %v3882 = vpack.c.b16 %v3864, %v3863
        %v3883 = vpack.c.b16 %v3866, %v3865
        %v3884 = vpack.c.b16 %v3868, %v3867
        %3901 = vmatpush.bf16.msra.mxu0 %v3876
        %3902 = vmatpush.bf16.msra.mxu0 %v3875
        %3903 = vmatpush.bf16.msra.mxu0 %v3874
        %3904 = vmatpush.bf16.msra.mxu0 %v3873
        %3905 = vmatpush.bf16.msra.mxu0 %v3872
        %3906 = vmatpush.bf16.msra.mxu0 %v3871
        %3907 = vmatpush.bf16.msra.mxu0 %v3870
        %3908 = vmatpush.bf16.msra.mxu0 %v3869
        %3909 = vmatmul.bf16.gmra.mxu0 %v3770
        %v3910 = vpop.f32.mrf.mxu0
        %v3911 = vadd.f32 %v3804, %v3910
        %v3912 = vpop.f32.mrf.mxu0
        %3913 = vdwg.mxu0
        %3914 = vmatpush.bf16.msra.mxu0 %v3884
        %3915 = vmatpush.bf16.msra.mxu0 %v3883
        %3916 = vmatpush.bf16.msra.mxu0 %v3882
        %3917 = vmatpush.bf16.msra.mxu0 %v3881
        %3918 = vmatpush.bf16.msra.mxu0 %v3880
        %3919 = vmatpush.bf16.msra.mxu0 %v3879
        %3920 = vmatpush.bf16.msra.mxu0 %v3878
        %3921 = vmatpush.bf16.msra.mxu0 %v3877
        %3922 = vmatmul.bf16.gmra.mxu0 %v3771
        %v3923 = vpop.f32.mrf.mxu0
        %v3924 = vadd.f32 %v3911, %v3923
        %v3925 = vpop.f32.mrf.mxu0
        %3926 = vdwg.mxu0
        %v3927 = vld [vmem:[%s13] sm:$0x1]
        %v3928 = vadd.f32 %v3924, %v3927
        %3929 = vst [vmem:[%s491] sm:$0x1] %v3928
      $region84: #{transform_net_forward.1} parent=75 // pred_fallthru
        _
      %p3930 = scmp.lt.s32.totalorder %s29, 1
      %s3931 = scalar_select %p3930, %s29, 1
      %s3932 = scalar_lea.vmem %s14, %s3931
      // Predicated region
      $region85: #{transform_net_forward.1} parent=75 // pred_check
        %p3933 = pneg %p356
      $region86: #{transform_net_forward.1} parent=75 // pred_check_branch
        %3935 = sbr.rel (%p3933) target = $region88
      $region87: #{transform_net_forward.1} parent=75 // pred_region
        _
      $region88: #{transform_net_forward.1} parent=75 // pred_fallthru
        _
    $region76: #{transform_net_forward.1} parent=5 // pred_fallthru
      _
    %p3936 = scmp.le.s32.totalorder 2, %s20
    // Predicated region
    $region89: #{transform_net_forward.1} parent=5 // pred_check
      %p3937 = pneg %p3936
    $region90: #{transform_net_forward.1} parent=5 // pred_check_branch
      %3939 = sbr.rel (%p3937) target = $region92
    $region91: #{transform_net_forward.1} parent=5 // pred_region
      %s3940 = ssub.s32 %s20, 2
      // Predicated region
      $region93: #{transform_net_forward.1} parent=91 // pred_check
        %p3941 = pneg %p362
      $region94: #{transform_net_forward.1} parent=91 // pred_check_branch
        %3943 = sbr.rel (%p3941) target = $region96
      $region95: #{transform_net_forward.1} parent=91 // pred_region
        %p3944 = scmp.lt.s32.totalorder %s31, 1
        %s3945 = scalar_select %p3944, %s31, 1
        %s3946 = scalar_lea.vmem %s14, %s3945
      $region96: #{transform_net_forward.1} parent=91 // pred_fallthru
        _
    $region92: #{transform_net_forward.1} parent=5 // pred_fallthru
      _
  $region6: #{transform_net_forward.1} parent=0 // loop_footer
    %s24 = sadd.s32 1, %s20
  $region7: #{transform_net_forward.1} parent=0 // loop_footer_branch
    %19 = sbr.rel target = $region3
  $region8: #{transform_net_forward.1} parent=0 // loop_exit
    _

</llo_original>
